<compile_context>
chip_gen: v5e
topology: v5e:2x2
jax: 0.10.0
libtpu: 0.0.40
codegen_flags: <defaults>
</compile_context>

<pallas_src>
import jax
import jax.numpy as jnp
from jax.experimental import pallas as pl
from jax.experimental.pallas import tpu as pltpu

VMEM = pl.BlockSpec(memory_space=pltpu.MemorySpace.VMEM)
_EPS = 1e-5
_N = 2  # demo batch size (static; batch is folded into the matmul M dimension)


# ---------------------------------------------------------------------------
# In-kernel helpers (trace-time Python over 2-D jnp values)
# ---------------------------------------------------------------------------
def _sigmoid(z):
    # written with exp (EUP) to avoid depending on a logistic lowering
    return 1.0 / (1.0 + jnp.exp(-z))


def _bn_sigmoid_stacked(stack, rows_per_sample, gamma_row, beta_row):
    """Training-mode BN over the batch for an (N*rows, F) batch-stacked slab,
    fused with sigmoid.  Stats are element-wise across the N row blocks
    (== reference `X.mean(dim=0)` for 4-D inputs), biased var, eps=1e-5.
    rows_per_sample is a multiple of 8, so every slice is sublane-aligned."""
    r = rows_per_sample
    halves = [stack[n * r:(n + 1) * r, :] for n in range(_N)]
    inv_n = 1.0 / _N
    mean = halves[0]
    for h in halves[1:]:
        mean = mean + h
    mean = mean * inv_n
    var = (halves[0] - mean) ** 2
    for h in halves[1:]:
        var = var + (h - mean) ** 2
    var = var * inv_n
    rstd = jax.lax.rsqrt(var + _EPS)                      # EUP rsqrt
    outs = [_sigmoid(gamma_row * ((h - mean) * rstd) + beta_row) for h in halves]
    return jnp.concatenate(outs, axis=0)


def _bn_sigmoid_2d(x, gamma_row, beta_row):
    """Reference 2-D BN (stats over dim 0 = batch) + sigmoid on an (N, F) slab."""
    mean = jnp.mean(x, axis=0, keepdims=True)
    var = jnp.mean((x - mean) ** 2, axis=0, keepdims=True)
    rstd = jax.lax.rsqrt(var + _EPS)
    return _sigmoid(gamma_row * ((x - mean) * rstd) + beta_row)


def _conv_bn_pool(x_stack, r_ref, s_ref, rows_ref, qb_ref, p_ref, oh):
    """conv(5x5, valid) + bias + BN(train) + sigmoid + 2x2 avg-pool on a
    batch-stacked slab.

    x_stack : (N*Hin, Cin*Win)  activations, lanes = (ci, x), ci-major
    r_ref   : (k, Cin*Win, Cout*OW)   banded conv matrices (one per kernel row)
    s_ref   : (k, N*OH, N*Hin)        host-packed row select/shift matrices
    rows_ref: (3, Cout*OW)            [conv bias; gamma; beta], channel-major
    qb_ref  : (N*OH/2, N*OH)          batch-block-diag row-pool matrix
    p_ref   : (Cout*OW, Cout*OW/2)    channel-block-diag column-pool matrix
    returns : (N*OH/2, Cout*OW/2)
    """
    k = r_ref.shape[0]
    conv = None
    for i in range(k):
        # host-packed select matmul replaces the non-8-aligned x[i:i+oh] slice
        win = jnp.dot(s_ref[i], x_stack, preferred_element_type=jnp.float32)
        band = jnp.dot(win, r_ref[i], preferred_element_type=jnp.float32)
        conv = band if conv is None else conv + band
    conv = conv + rows_ref[0:1, :]                                   # conv bias
    act = _bn_sigmoid_stacked(conv, oh, rows_ref[1:2, :], rows_ref[2:3, :])
    # 2x2 average pool: 2 matmuls for the whole batch
    pooled = jnp.dot(jnp.dot(qb_ref[...], act, preferred_element_type=jnp.float32),
                     p_ref[...], preferred_element_type=jnp.float32)
    return pooled


# ---------------------------------------------------------------------------
# The single fused kernel
# ---------------------------------------------------------------------------
def _lenet_kernel(x_ref,
                  r1_ref, s1_ref, st1_ref, q1_ref, p1_ref,
                  r2_ref, s2_ref, st2_ref, q2_ref, p2_ref,
                  w1y_ref, gsel_ref, fc1_ref,
                  w2_ref, fc2_ref,
                  w3_ref, fc3b_ref,
                  o_ref):
    # fold the (N,1,28,28) squeeze + batch-stack into the kernel (no XLA glue)
    x_stack = jnp.concatenate([x_ref[n, 0] for n in range(_N)], axis=0)  # (56, 28)

    # stage 1: conv1 (1->6, 5x5) 28x28 -> 24x24, BN, sigmoid, pool -> 12x12
    h = _conv_bn_pool(x_stack, r1_ref, s1_ref, st1_ref, q1_ref, p1_ref, oh=24)
    # h: (24, 72), rows = n*12 + y, lanes = c*12 + x

    # stage 2: conv2 (6->16, 5x5) 12x12 -> 8x8, BN, sigmoid, pool -> 4x4
    h = _conv_bn_pool(h, r2_ref, s2_ref, st2_ref, q2_ref, p2_ref, oh=8)
    # h: (8, 64), rows = n*4 + y, lanes = c*4 + x

    # fc1: 4 stacked matmuls (M=8) + host-packed per-sample row-gather matmuls
    # replace the flatten; batch stays merged in M everywhere.
    h1 = None
    for y in range(4):
        part = jnp.dot(h, w1y_ref[y], preferred_element_type=jnp.float32)   # (8,120)
        sel = jnp.dot(gsel_ref[y], part, preferred_element_type=jnp.float32)  # (N,120)
        h1 = sel if h1 is None else h1 + sel
    h1 = h1 + fc1_ref[0:1, :]
    h1 = _bn_sigmoid_2d(h1, fc1_ref[1:2, :], fc1_ref[2:3, :])

    h2 = jnp.dot(h1, w2_ref[...], preferred_element_type=jnp.float32) + fc2_ref[0:1, :]
    h2 = _bn_sigmoid_2d(h2, fc2_ref[1:2, :], fc2_ref[2:3, :])

    o_ref[...] = jnp.dot(h2, w3_ref[...],
                         preferred_element_type=jnp.float32) + fc3b_ref[...]


# ---------------------------------------------------------------------------
# One-time host-side parameter packing
# ---------------------------------------------------------------------------
def _conv_band_matrices(w, width):
    """w: (Cout, Cin, k, k) -> (k, Cin*width, Cout*(width-k+1)) banded matrices.

    R[i][ci*width + x_in, co*ow + x_out] = w[co, ci, i, x_in - x_out] (if valid),
    so conv row y = sum_i (input row y+i) @ R[i].
    """
    cout, cin, k, _ = w.shape
    ow = width - k + 1
    x_in = jnp.arange(width)
    x_out = jnp.arange(ow)
    j = x_in[:, None] - x_out[None, :]                       # (width, ow)
    valid = ((j >= 0) & (j < k)).astype(w.dtype)
    g = w[:, :, :, jnp.clip(j, 0, k - 1)] * valid            # (Cout, Cin, k, width, ow)
    r = jnp.transpose(g, (2, 1, 3, 0, 4)).reshape(k, cin * width, cout * ow)
    return r.astype(jnp.float32)


def _select_matrices(k, hin, oh, n_batch):
    """(k, N*oh, N*hin) one-hot row select/shift matrices:
       s[i][n*oh + y, n*hin + y + i] = 1.  Applied as a left matmul they pick
       the i-th conv row-window for every sample of the stacked slab."""
    rows = jnp.arange(n_batch * oh)
    base = (rows % oh) + (rows // oh) * hin
    return jnp.stack([jax.nn.one_hot(base + i, n_batch * hin, dtype=jnp.float32)
                      for i in range(k)])


def _pool_matrices(oh, ow, c, n_batch):
    """Batch-block-diag row-pool Q (N*oh/2, N*oh) and channel-block-diag
    column-pool P (c*ow, c*(ow//2)); entries are 0.5 (2x2 average pool)."""
    q = jnp.kron(jnp.eye(oh // 2, dtype=jnp.float32),
                 jnp.full((1, 2), 0.5, jnp.float32))
    q_big = jnp.kron(jnp.eye(n_batch, dtype=jnp.float32), q)
    p = jnp.kron(jnp.eye(c, dtype=jnp.float32),
                 jnp.kron(jnp.eye(ow // 2, dtype=jnp.float32),
                          jnp.full((2, 1), 0.5, jnp.float32)))
    return q_big, p


def _rows3(bias, gamma, beta, reps):
    """Stack [bias; gamma; beta] as (3, F) rows, per-channel values repeated
    `reps` times (channel-major lane order co*reps + x)."""
    rows = [jnp.repeat(v.astype(jnp.float32), reps).reshape(1, -1)
            for v in (bias, gamma, beta)]
    return jnp.concatenate(rows, axis=0)


def pack_params(p):
    """Re-pack PyTorch-layout params into the layouts the fused kernel wants."""
    f32 = jnp.float32
    packed = {}

    # stage 1: conv1 (1 -> 6, 5x5) on 28x28 -> 24x24, pool -> 12x12
    ow1 = 28 - 5 + 1
    packed["r1"] = _conv_band_matrices(p["conv1_w"], 28)              # (5, 28, 144)
    packed["s1"] = _select_matrices(5, 28, ow1, _N)                    # (5, 48, 56)
    packed["st1"] = _rows3(p["conv1_b"], p["bn1_gamma"], p["bn1_beta"], ow1)  # (3,144)
    packed["q1"], packed["p1"] = _pool_matrices(ow1, ow1, 6, _N)       # (24,48),(144,72)

    # stage 2: conv2 (6 -> 16, 5x5) on 12x12 -> 8x8, pool -> 4x4
    ow2 = 12 - 5 + 1
    packed["r2"] = _conv_band_matrices(p["conv2_w"], 12)               # (5, 72, 128)
    packed["s2"] = _select_matrices(5, 12, ow2, _N)                     # (5, 16, 24)
    packed["st2"] = _rows3(p["conv2_b"], p["bn2_gamma"], p["bn2_beta"], ow2)  # (3,128)
    packed["q2"], packed["p2"] = _pool_matrices(ow2, ow2, 16, _N)       # (8,16),(128,64)

    # fc head.  Stage-2 output rows are (n*4 + y), lanes are (c*4 + x); split
    # fc1's weight per y (torch flatten order is c*16 + y*4 + x) so the flatten
    # never materializes, and gsel gathers the per-sample rows back together.
    w1 = p["fc1_w"].reshape(120, 16, 4, 4)                             # (out, c, y, x)
    packed["w1y"] = jnp.transpose(w1, (2, 1, 3, 0)).reshape(4, 64, 120).astype(f32)
    packed["gsel"] = jnp.stack(
        [jax.nn.one_hot(jnp.arange(_N) * 4 + y, _N * 4, dtype=f32) for y in range(4)])
    packed["fc1"] = _rows3(p["fc1_b"], p["bn3_gamma"], p["bn3_beta"], 1)   # (3, 120)
    packed["fc2_w"] = p["fc2_w"].T.astype(f32)                          # (120, 84)
    packed["fc2"] = _rows3(p["fc2_b"], p["bn4_gamma"], p["bn4_beta"], 1)   # (3, 84)
    packed["fc3_w"] = p["fc3_w"].T.astype(f32)                          # (84, 10)
    packed["fc3_b"] = p["fc3_b"].reshape(1, -1).astype(f32)             # (1, 10)
    return packed


# ---------------------------------------------------------------------------
# LeNet forward: exactly ONE pallas_call
# ---------------------------------------------------------------------------
def lenet_forward(packed, x):
    assert x.shape == (_N, 1, 28, 28)
    return pl.pallas_call(
        _lenet_kernel,
        out_shape=jax.ShapeDtypeStruct((_N, 10), jnp.float32),
        in_specs=[VMEM] * 18,
        out_specs=VMEM,
    )(x,
      packed["r1"], packed["s1"], packed["st1"], packed["q1"], packed["p1"],
      packed["r2"], packed["s2"], packed["st2"], packed["q2"], packed["p2"],
      packed["w1y"], packed["gsel"], packed["fc1"],
      packed["fc2_w"], packed["fc2"],
      packed["fc3_w"], packed["fc3_b"])


def init_params(key):
    ks = jax.random.split(key, 10)
    f32 = jnp.float32
    return {
        "conv1_w": 0.1 * jax.random.normal(ks[0], (6, 1, 5, 5), f32),
        "conv1_b": jnp.zeros((6,), f32),
        "conv2_w": 0.1 * jax.random.normal(ks[1], (16, 6, 5, 5), f32),
        "conv2_b": jnp.zeros((16,), f32),
        "fc1_w": 0.1 * jax.random.normal(ks[2], (120, 16 * 4 * 4), f32),
        "fc1_b": jnp.zeros((120,), f32),
        "fc2_w": 0.1 * jax.random.normal(ks[3], (84, 120), f32),
        "fc2_b": jnp.zeros((84,), f32),
        "fc3_w": 0.1 * jax.random.normal(ks[4], (10, 84), f32),
        "fc3_b": jnp.zeros((10,), f32),
        "bn1_gamma": jnp.ones((6,), f32), "bn1_beta": jnp.zeros((6,), f32),
        "bn2_gamma": jnp.ones((16,), f32), "bn2_beta": jnp.zeros((16,), f32),
        "bn3_gamma": jnp.ones((120,), f32), "bn3_beta": jnp.zeros((120,), f32),
        "bn4_gamma": jnp.ones((84,), f32), "bn4_beta": jnp.zeros((84,), f32),
    }


if __name__ == "__main__":
    # Input spatial size 28x28 (Cin=1) is implied by Flatten -> Linear(16*4*4, 120).
    x = jax.random.normal(jax.random.PRNGKey(0), (_N, 1, 28, 28), jnp.float32)
    params = init_params(jax.random.PRNGKey(42))
    packed = pack_params(params)              # one-time host-side packing

    out = jax.jit(lenet_forward)(packed, x)
    out = jax.block_until_ready(out)

    assert out.shape == (_N, 10), out.shape
    assert out.dtype == jnp.float32
    assert bool(jnp.all(jnp.isfinite(out)))
    print("KERNEL_OK")
</pallas_src>

<mosaic_0001>
module attributes {stable_mosaic.version = 11 : i64} {
  func.func @_lenet_kernel(%arg0: memref<2x1x28x28xf32, #tpu.memory_space<vmem>>, %arg1: memref<5x28x144xf32, #tpu.memory_space<vmem>>, %arg2: memref<5x48x56xf32, #tpu.memory_space<vmem>>, %arg3: memref<3x144xf32, #tpu.memory_space<vmem>>, %arg4: memref<24x48xf32, #tpu.memory_space<vmem>>, %arg5: memref<144x72xf32, #tpu.memory_space<vmem>>, %arg6: memref<5x72x128xf32, #tpu.memory_space<vmem>>, %arg7: memref<5x16x24xf32, #tpu.memory_space<vmem>>, %arg8: memref<3x128xf32, #tpu.memory_space<vmem>>, %arg9: memref<8x16xf32, #tpu.memory_space<vmem>>, %arg10: memref<128x64xf32, #tpu.memory_space<vmem>>, %arg11: memref<4x64x120xf32, #tpu.memory_space<vmem>>, %arg12: memref<4x2x8xf32, #tpu.memory_space<vmem>>, %arg13: memref<3x120xf32, #tpu.memory_space<vmem>>, %arg14: memref<120x84xf32, #tpu.memory_space<vmem>>, %arg15: memref<3x84xf32, #tpu.memory_space<vmem>>, %arg16: memref<84x10xf32, #tpu.memory_space<vmem>>, %arg17: memref<1x10xf32, #tpu.memory_space<vmem>>, %arg18: memref<2x10xf32, #tpu.memory_space<vmem>>) attributes {dimension_semantics = [], scalar_prefetch = 0 : i64, scratch_operands = 0 : i64, tpu.core_type = #tpu.core_type<tc>} {
    %c0 = arith.constant 0 : index
    %c0_0 = arith.constant 0 : index
    %c0_1 = arith.constant 0 : index
    %c0_2 = arith.constant 0 : index
    %0 = vector.load %arg0[%c0, %c0_0, %c0_1, %c0_2] : memref<2x1x28x28xf32, #tpu.memory_space<vmem>>, vector<1x1x28x28xf32>
    %1 = vector.shape_cast %0 : vector<1x1x28x28xf32> to vector<28x28xf32>
    %c1 = arith.constant 1 : index
    %c0_3 = arith.constant 0 : index
    %c0_4 = arith.constant 0 : index
    %c0_5 = arith.constant 0 : index
    %2 = vector.load %arg0[%c1, %c0_3, %c0_4, %c0_5] : memref<2x1x28x28xf32, #tpu.memory_space<vmem>>, vector<1x1x28x28xf32>
    %3 = vector.shape_cast %2 : vector<1x1x28x28xf32> to vector<28x28xf32>
    %4 = tpu.concatenate %1, %3 in 0 : vector<28x28xf32>, vector<28x28xf32> -> vector<56x28xf32>
    %c0_6 = arith.constant 0 : index
    %c0_7 = arith.constant 0 : index
    %c0_8 = arith.constant 0 : index
    %5 = vector.load %arg2[%c0_6, %c0_7, %c0_8] : memref<5x48x56xf32, #tpu.memory_space<vmem>>, vector<1x48x56xf32>
    %6 = vector.shape_cast %5 : vector<1x48x56xf32> to vector<48x56xf32>
    %cst = arith.constant dense<0.000000e+00> : vector<48x28xf32>
    %7 = tpu.matmul %6, %4, %cst {dimension_numbers = #tpu.dot_dimension_numbers<[1], [0], [0], [1], [0, 0, 1, 1], [], []>} : vector<48x56xf32>, vector<56x28xf32>, vector<48x28xf32> -> vector<48x28xf32>
    %c0_9 = arith.constant 0 : index
    %c0_10 = arith.constant 0 : index
    %c0_11 = arith.constant 0 : index
    %8 = vector.load %arg1[%c0_9, %c0_10, %c0_11] : memref<5x28x144xf32, #tpu.memory_space<vmem>>, vector<1x28x144xf32>
    %9 = vector.shape_cast %8 : vector<1x28x144xf32> to vector<28x144xf32>
    %cst_12 = arith.constant dense<0.000000e+00> : vector<48x144xf32>
    %10 = tpu.matmul %7, %9, %cst_12 {dimension_numbers = #tpu.dot_dimension_numbers<[1], [0], [0], [1], [0, 0, 1, 1], [], []>} : vector<48x28xf32>, vector<28x144xf32>, vector<48x144xf32> -> vector<48x144xf32>
    %c1_13 = arith.constant 1 : index
    %c0_14 = arith.constant 0 : index
    %c0_15 = arith.constant 0 : index
    %11 = vector.load %arg2[%c1_13, %c0_14, %c0_15] : memref<5x48x56xf32, #tpu.memory_space<vmem>>, vector<1x48x56xf32>
    %12 = vector.shape_cast %11 : vector<1x48x56xf32> to vector<48x56xf32>
    %cst_16 = arith.constant dense<0.000000e+00> : vector<48x28xf32>
    %13 = tpu.matmul %12, %4, %cst_16 {dimension_numbers = #tpu.dot_dimension_numbers<[1], [0], [0], [1], [0, 0, 1, 1], [], []>} : vector<48x56xf32>, vector<56x28xf32>, vector<48x28xf32> -> vector<48x28xf32>
    %c1_17 = arith.constant 1 : index
    %c0_18 = arith.constant 0 : index
    %c0_19 = arith.constant 0 : index
    %14 = vector.load %arg1[%c1_17, %c0_18, %c0_19] : memref<5x28x144xf32, #tpu.memory_space<vmem>>, vector<1x28x144xf32>
    %15 = vector.shape_cast %14 : vector<1x28x144xf32> to vector<28x144xf32>
    %cst_20 = arith.constant dense<0.000000e+00> : vector<48x144xf32>
    %16 = tpu.matmul %13, %15, %cst_20 {dimension_numbers = #tpu.dot_dimension_numbers<[1], [0], [0], [1], [0, 0, 1, 1], [], []>} : vector<48x28xf32>, vector<28x144xf32>, vector<48x144xf32> -> vector<48x144xf32>
    %17 = arith.addf %10, %16 : vector<48x144xf32>
    %c2 = arith.constant 2 : index
    %c0_21 = arith.constant 0 : index
    %c0_22 = arith.constant 0 : index
    %18 = vector.load %arg2[%c2, %c0_21, %c0_22] : memref<5x48x56xf32, #tpu.memory_space<vmem>>, vector<1x48x56xf32>
    %19 = vector.shape_cast %18 : vector<1x48x56xf32> to vector<48x56xf32>
    %cst_23 = arith.constant dense<0.000000e+00> : vector<48x28xf32>
    %20 = tpu.matmul %19, %4, %cst_23 {dimension_numbers = #tpu.dot_dimension_numbers<[1], [0], [0], [1], [0, 0, 1, 1], [], []>} : vector<48x56xf32>, vector<56x28xf32>, vector<48x28xf32> -> vector<48x28xf32>
    %c2_24 = arith.constant 2 : index
    %c0_25 = arith.constant 0 : index
    %c0_26 = arith.constant 0 : index
    %21 = vector.load %arg1[%c2_24, %c0_25, %c0_26] : memref<5x28x144xf32, #tpu.memory_space<vmem>>, vector<1x28x144xf32>
    %22 = vector.shape_cast %21 : vector<1x28x144xf32> to vector<28x144xf32>
    %cst_27 = arith.constant dense<0.000000e+00> : vector<48x144xf32>
    %23 = tpu.matmul %20, %22, %cst_27 {dimension_numbers = #tpu.dot_dimension_numbers<[1], [0], [0], [1], [0, 0, 1, 1], [], []>} : vector<48x28xf32>, vector<28x144xf32>, vector<48x144xf32> -> vector<48x144xf32>
    %24 = arith.addf %17, %23 : vector<48x144xf32>
    %c3 = arith.constant 3 : index
    %c0_28 = arith.constant 0 : index
    %c0_29 = arith.constant 0 : index
    %25 = vector.load %arg2[%c3, %c0_28, %c0_29] : memref<5x48x56xf32, #tpu.memory_space<vmem>>, vector<1x48x56xf32>
    %26 = vector.shape_cast %25 : vector<1x48x56xf32> to vector<48x56xf32>
    %cst_30 = arith.constant dense<0.000000e+00> : vector<48x28xf32>
    %27 = tpu.matmul %26, %4, %cst_30 {dimension_numbers = #tpu.dot_dimension_numbers<[1], [0], [0], [1], [0, 0, 1, 1], [], []>} : vector<48x56xf32>, vector<56x28xf32>, vector<48x28xf32> -> vector<48x28xf32>
    %c3_31 = arith.constant 3 : index
    %c0_32 = arith.constant 0 : index
    %c0_33 = arith.constant 0 : index
    %28 = vector.load %arg1[%c3_31, %c0_32, %c0_33] : memref<5x28x144xf32, #tpu.memory_space<vmem>>, vector<1x28x144xf32>
    %29 = vector.shape_cast %28 : vector<1x28x144xf32> to vector<28x144xf32>
    %cst_34 = arith.constant dense<0.000000e+00> : vector<48x144xf32>
    %30 = tpu.matmul %27, %29, %cst_34 {dimension_numbers = #tpu.dot_dimension_numbers<[1], [0], [0], [1], [0, 0, 1, 1], [], []>} : vector<48x28xf32>, vector<28x144xf32>, vector<48x144xf32> -> vector<48x144xf32>
    %31 = arith.addf %24, %30 : vector<48x144xf32>
    %c4 = arith.constant 4 : index
    %c0_35 = arith.constant 0 : index
    %c0_36 = arith.constant 0 : index
    %32 = vector.load %arg2[%c4, %c0_35, %c0_36] : memref<5x48x56xf32, #tpu.memory_space<vmem>>, vector<1x48x56xf32>
    %33 = vector.shape_cast %32 : vector<1x48x56xf32> to vector<48x56xf32>
    %cst_37 = arith.constant dense<0.000000e+00> : vector<48x28xf32>
    %34 = tpu.matmul %33, %4, %cst_37 {dimension_numbers = #tpu.dot_dimension_numbers<[1], [0], [0], [1], [0, 0, 1, 1], [], []>} : vector<48x56xf32>, vector<56x28xf32>, vector<48x28xf32> -> vector<48x28xf32>
    %c4_38 = arith.constant 4 : index
    %c0_39 = arith.constant 0 : index
    %c0_40 = arith.constant 0 : index
    %35 = vector.load %arg1[%c4_38, %c0_39, %c0_40] : memref<5x28x144xf32, #tpu.memory_space<vmem>>, vector<1x28x144xf32>
    %36 = vector.shape_cast %35 : vector<1x28x144xf32> to vector<28x144xf32>
    %cst_41 = arith.constant dense<0.000000e+00> : vector<48x144xf32>
    %37 = tpu.matmul %34, %36, %cst_41 {dimension_numbers = #tpu.dot_dimension_numbers<[1], [0], [0], [1], [0, 0, 1, 1], [], []>} : vector<48x28xf32>, vector<28x144xf32>, vector<48x144xf32> -> vector<48x144xf32>
    %38 = arith.addf %31, %37 : vector<48x144xf32>
    %c0_42 = arith.constant 0 : index
    %c0_43 = arith.constant 0 : index
    %39 = vector.load %arg3[%c0_42, %c0_43] : memref<3x144xf32, #tpu.memory_space<vmem>>, vector<1x144xf32>
    %40 = vector.broadcast %39 : vector<1x144xf32> to vector<48x144xf32>
    %41 = arith.addf %38, %40 : vector<48x144xf32>
    %c1_44 = arith.constant 1 : index
    %c0_45 = arith.constant 0 : index
    %42 = vector.load %arg3[%c1_44, %c0_45] : memref<3x144xf32, #tpu.memory_space<vmem>>, vector<1x144xf32>
    %c2_46 = arith.constant 2 : index
    %c0_47 = arith.constant 0 : index
    %43 = vector.load %arg3[%c2_46, %c0_47] : memref<3x144xf32, #tpu.memory_space<vmem>>, vector<1x144xf32>
    %44 = vector.extract_strided_slice %41 {offsets = [0, 0], sizes = [24, 144], strides = [1, 1]} : vector<48x144xf32> to vector<24x144xf32>
    %45 = vector.extract_strided_slice %41 {offsets = [24, 0], sizes = [24, 144], strides = [1, 1]} : vector<48x144xf32> to vector<24x144xf32>
    %46 = arith.addf %44, %45 : vector<24x144xf32>
    %cst_48 = arith.constant 5.000000e-01 : f32
    %47 = vector.broadcast %cst_48 : f32 to vector<24x144xf32>
    %48 = arith.mulf %46, %47 : vector<24x144xf32>
    %49 = arith.subf %44, %48 : vector<24x144xf32>
    %50 = arith.mulf %49, %49 : vector<24x144xf32>
    %51 = arith.subf %45, %48 : vector<24x144xf32>
    %52 = arith.mulf %51, %51 : vector<24x144xf32>
    %53 = arith.addf %50, %52 : vector<24x144xf32>
    %cst_49 = arith.constant 5.000000e-01 : f32
    %54 = vector.broadcast %cst_49 : f32 to vector<24x144xf32>
    %55 = arith.mulf %53, %54 : vector<24x144xf32>
    %cst_50 = arith.constant 9.99999974E-6 : f32
    %56 = vector.broadcast %cst_50 : f32 to vector<24x144xf32>
    %57 = arith.addf %55, %56 : vector<24x144xf32>
    %58 = math.rsqrt %57 : vector<24x144xf32>
    %59 = arith.subf %44, %48 : vector<24x144xf32>
    %60 = arith.mulf %59, %58 : vector<24x144xf32>
    %61 = vector.broadcast %42 : vector<1x144xf32> to vector<24x144xf32>
    %62 = arith.mulf %61, %60 : vector<24x144xf32>
    %63 = vector.broadcast %43 : vector<1x144xf32> to vector<24x144xf32>
    %64 = arith.addf %62, %63 : vector<24x144xf32>
    %cst_51 = arith.constant 0.000000e+00 : f32
    %65 = vector.broadcast %cst_51 : f32 to vector<24x144xf32>
    %66 = arith.subf %65, %64 : vector<24x144xf32>
    %67 = math.exp %66 : vector<24x144xf32>
    %cst_52 = arith.constant 1.000000e+00 : f32
    %68 = vector.broadcast %cst_52 : f32 to vector<24x144xf32>
    %69 = arith.addf %68, %67 : vector<24x144xf32>
    %cst_53 = arith.constant 1.000000e+00 : f32
    %70 = vector.broadcast %cst_53 : f32 to vector<24x144xf32>
    %71 = arith.divf %70, %69 : vector<24x144xf32>
    %72 = arith.subf %45, %48 : vector<24x144xf32>
    %73 = arith.mulf %72, %58 : vector<24x144xf32>
    %74 = vector.broadcast %42 : vector<1x144xf32> to vector<24x144xf32>
    %75 = arith.mulf %74, %73 : vector<24x144xf32>
    %76 = vector.broadcast %43 : vector<1x144xf32> to vector<24x144xf32>
    %77 = arith.addf %75, %76 : vector<24x144xf32>
    %cst_54 = arith.constant 0.000000e+00 : f32
    %78 = vector.broadcast %cst_54 : f32 to vector<24x144xf32>
    %79 = arith.subf %78, %77 : vector<24x144xf32>
    %80 = math.exp %79 : vector<24x144xf32>
    %cst_55 = arith.constant 1.000000e+00 : f32
    %81 = vector.broadcast %cst_55 : f32 to vector<24x144xf32>
    %82 = arith.addf %81, %80 : vector<24x144xf32>
    %cst_56 = arith.constant 1.000000e+00 : f32
    %83 = vector.broadcast %cst_56 : f32 to vector<24x144xf32>
    %84 = arith.divf %83, %82 : vector<24x144xf32>
    %85 = tpu.concatenate %71, %84 in 0 : vector<24x144xf32>, vector<24x144xf32> -> vector<48x144xf32>
    %c0_57 = arith.constant 0 : index
    %c0_58 = arith.constant 0 : index
    %86 = vector.load %arg4[%c0_57, %c0_58] : memref<24x48xf32, #tpu.memory_space<vmem>>, vector<24x48xf32>
    %cst_59 = arith.constant dense<0.000000e+00> : vector<24x144xf32>
    %87 = tpu.matmul %86, %85, %cst_59 {dimension_numbers = #tpu.dot_dimension_numbers<[1], [0], [0], [1], [0, 0, 1, 1], [], []>} : vector<24x48xf32>, vector<48x144xf32>, vector<24x144xf32> -> vector<24x144xf32>
    %c0_60 = arith.constant 0 : index
    %c0_61 = arith.constant 0 : index
    %88 = vector.load %arg5[%c0_60, %c0_61] : memref<144x72xf32, #tpu.memory_space<vmem>>, vector<144x72xf32>
    %cst_62 = arith.constant dense<0.000000e+00> : vector<24x72xf32>
    %89 = tpu.matmul %87, %88, %cst_62 {dimension_numbers = #tpu.dot_dimension_numbers<[1], [0], [0], [1], [0, 0, 1, 1], [], []>} : vector<24x144xf32>, vector<144x72xf32>, vector<24x72xf32> -> vector<24x72xf32>
    %c0_63 = arith.constant 0 : index
    %c0_64 = arith.constant 0 : index
    %c0_65 = arith.constant 0 : index
    %90 = vector.load %arg7[%c0_63, %c0_64, %c0_65] : memref<5x16x24xf32, #tpu.memory_space<vmem>>, vector<1x16x24xf32>
    %91 = vector.shape_cast %90 : vector<1x16x24xf32> to vector<16x24xf32>
    %cst_66 = arith.constant dense<0.000000e+00> : vector<16x72xf32>
    %92 = tpu.matmul %91, %89, %cst_66 {dimension_numbers = #tpu.dot_dimension_numbers<[1], [0], [0], [1], [0, 0, 1, 1], [], []>} : vector<16x24xf32>, vector<24x72xf32>, vector<16x72xf32> -> vector<16x72xf32>
    %c0_67 = arith.constant 0 : index
    %c0_68 = arith.constant 0 : index
    %c0_69 = arith.constant 0 : index
    %93 = vector.load %arg6[%c0_67, %c0_68, %c0_69] : memref<5x72x128xf32, #tpu.memory_space<vmem>>, vector<1x72x128xf32>
    %94 = vector.shape_cast %93 : vector<1x72x128xf32> to vector<72x128xf32>
    %cst_70 = arith.constant dense<0.000000e+00> : vector<16x128xf32>
    %95 = tpu.matmul %92, %94, %cst_70 {dimension_numbers = #tpu.dot_dimension_numbers<[1], [0], [0], [1], [0, 0, 1, 1], [], []>} : vector<16x72xf32>, vector<72x128xf32>, vector<16x128xf32> -> vector<16x128xf32>
    %c1_71 = arith.constant 1 : index
    %c0_72 = arith.constant 0 : index
    %c0_73 = arith.constant 0 : index
    %96 = vector.load %arg7[%c1_71, %c0_72, %c0_73] : memref<5x16x24xf32, #tpu.memory_space<vmem>>, vector<1x16x24xf32>
    %97 = vector.shape_cast %96 : vector<1x16x24xf32> to vector<16x24xf32>
    %cst_74 = arith.constant dense<0.000000e+00> : vector<16x72xf32>
    %98 = tpu.matmul %97, %89, %cst_74 {dimension_numbers = #tpu.dot_dimension_numbers<[1], [0], [0], [1], [0, 0, 1, 1], [], []>} : vector<16x24xf32>, vector<24x72xf32>, vector<16x72xf32> -> vector<16x72xf32>
    %c1_75 = arith.constant 1 : index
    %c0_76 = arith.constant 0 : index
    %c0_77 = arith.constant 0 : index
    %99 = vector.load %arg6[%c1_75, %c0_76, %c0_77] : memref<5x72x128xf32, #tpu.memory_space<vmem>>, vector<1x72x128xf32>
    %100 = vector.shape_cast %99 : vector<1x72x128xf32> to vector<72x128xf32>
    %cst_78 = arith.constant dense<0.000000e+00> : vector<16x128xf32>
    %101 = tpu.matmul %98, %100, %cst_78 {dimension_numbers = #tpu.dot_dimension_numbers<[1], [0], [0], [1], [0, 0, 1, 1], [], []>} : vector<16x72xf32>, vector<72x128xf32>, vector<16x128xf32> -> vector<16x128xf32>
    %102 = arith.addf %95, %101 : vector<16x128xf32>
    %c2_79 = arith.constant 2 : index
    %c0_80 = arith.constant 0 : index
    %c0_81 = arith.constant 0 : index
    %103 = vector.load %arg7[%c2_79, %c0_80, %c0_81] : memref<5x16x24xf32, #tpu.memory_space<vmem>>, vector<1x16x24xf32>
    %104 = vector.shape_cast %103 : vector<1x16x24xf32> to vector<16x24xf32>
    %cst_82 = arith.constant dense<0.000000e+00> : vector<16x72xf32>
    %105 = tpu.matmul %104, %89, %cst_82 {dimension_numbers = #tpu.dot_dimension_numbers<[1], [0], [0], [1], [0, 0, 1, 1], [], []>} : vector<16x24xf32>, vector<24x72xf32>, vector<16x72xf32> -> vector<16x72xf32>
    %c2_83 = arith.constant 2 : index
    %c0_84 = arith.constant 0 : index
    %c0_85 = arith.constant 0 : index
    %106 = vector.load %arg6[%c2_83, %c0_84, %c0_85] : memref<5x72x128xf32, #tpu.memory_space<vmem>>, vector<1x72x128xf32>
    %107 = vector.shape_cast %106 : vector<1x72x128xf32> to vector<72x128xf32>
    %cst_86 = arith.constant dense<0.000000e+00> : vector<16x128xf32>
    %108 = tpu.matmul %105, %107, %cst_86 {dimension_numbers = #tpu.dot_dimension_numbers<[1], [0], [0], [1], [0, 0, 1, 1], [], []>} : vector<16x72xf32>, vector<72x128xf32>, vector<16x128xf32> -> vector<16x128xf32>
    %109 = arith.addf %102, %108 : vector<16x128xf32>
    %c3_87 = arith.constant 3 : index
    %c0_88 = arith.constant 0 : index
    %c0_89 = arith.constant 0 : index
    %110 = vector.load %arg7[%c3_87, %c0_88, %c0_89] : memref<5x16x24xf32, #tpu.memory_space<vmem>>, vector<1x16x24xf32>
    %111 = vector.shape_cast %110 : vector<1x16x24xf32> to vector<16x24xf32>
    %cst_90 = arith.constant dense<0.000000e+00> : vector<16x72xf32>
    %112 = tpu.matmul %111, %89, %cst_90 {dimension_numbers = #tpu.dot_dimension_numbers<[1], [0], [0], [1], [0, 0, 1, 1], [], []>} : vector<16x24xf32>, vector<24x72xf32>, vector<16x72xf32> -> vector<16x72xf32>
    %c3_91 = arith.constant 3 : index
    %c0_92 = arith.constant 0 : index
    %c0_93 = arith.constant 0 : index
    %113 = vector.load %arg6[%c3_91, %c0_92, %c0_93] : memref<5x72x128xf32, #tpu.memory_space<vmem>>, vector<1x72x128xf32>
    %114 = vector.shape_cast %113 : vector<1x72x128xf32> to vector<72x128xf32>
    %cst_94 = arith.constant dense<0.000000e+00> : vector<16x128xf32>
    %115 = tpu.matmul %112, %114, %cst_94 {dimension_numbers = #tpu.dot_dimension_numbers<[1], [0], [0], [1], [0, 0, 1, 1], [], []>} : vector<16x72xf32>, vector<72x128xf32>, vector<16x128xf32> -> vector<16x128xf32>
    %116 = arith.addf %109, %115 : vector<16x128xf32>
    %c4_95 = arith.constant 4 : index
    %c0_96 = arith.constant 0 : index
    %c0_97 = arith.constant 0 : index
    %117 = vector.load %arg7[%c4_95, %c0_96, %c0_97] : memref<5x16x24xf32, #tpu.memory_space<vmem>>, vector<1x16x24xf32>
    %118 = vector.shape_cast %117 : vector<1x16x24xf32> to vector<16x24xf32>
    %cst_98 = arith.constant dense<0.000000e+00> : vector<16x72xf32>
    %119 = tpu.matmul %118, %89, %cst_98 {dimension_numbers = #tpu.dot_dimension_numbers<[1], [0], [0], [1], [0, 0, 1, 1], [], []>} : vector<16x24xf32>, vector<24x72xf32>, vector<16x72xf32> -> vector<16x72xf32>
    %c4_99 = arith.constant 4 : index
    %c0_100 = arith.constant 0 : index
    %c0_101 = arith.constant 0 : index
    %120 = vector.load %arg6[%c4_99, %c0_100, %c0_101] : memref<5x72x128xf32, #tpu.memory_space<vmem>>, vector<1x72x128xf32>
    %121 = vector.shape_cast %120 : vector<1x72x128xf32> to vector<72x128xf32>
    %cst_102 = arith.constant dense<0.000000e+00> : vector<16x128xf32>
    %122 = tpu.matmul %119, %121, %cst_102 {dimension_numbers = #tpu.dot_dimension_numbers<[1], [0], [0], [1], [0, 0, 1, 1], [], []>} : vector<16x72xf32>, vector<72x128xf32>, vector<16x128xf32> -> vector<16x128xf32>
    %123 = arith.addf %116, %122 : vector<16x128xf32>
    %c0_103 = arith.constant 0 : index
    %c0_104 = arith.constant 0 : index
    %124 = vector.load %arg8[%c0_103, %c0_104] : memref<3x128xf32, #tpu.memory_space<vmem>>, vector<1x128xf32>
    %125 = vector.broadcast %124 : vector<1x128xf32> to vector<16x128xf32>
    %126 = arith.addf %123, %125 : vector<16x128xf32>
    %c1_105 = arith.constant 1 : index
    %c0_106 = arith.constant 0 : index
    %127 = vector.load %arg8[%c1_105, %c0_106] : memref<3x128xf32, #tpu.memory_space<vmem>>, vector<1x128xf32>
    %c2_107 = arith.constant 2 : index
    %c0_108 = arith.constant 0 : index
    %128 = vector.load %arg8[%c2_107, %c0_108] : memref<3x128xf32, #tpu.memory_space<vmem>>, vector<1x128xf32>
    %129 = vector.extract_strided_slice %126 {offsets = [0, 0], sizes = [8, 128], strides = [1, 1]} : vector<16x128xf32> to vector<8x128xf32>
    %130 = vector.extract_strided_slice %126 {offsets = [8, 0], sizes = [8, 128], strides = [1, 1]} : vector<16x128xf32> to vector<8x128xf32>
    %131 = arith.addf %129, %130 : vector<8x128xf32>
    %cst_109 = arith.constant 5.000000e-01 : f32
    %132 = vector.broadcast %cst_109 : f32 to vector<8x128xf32>
    %133 = arith.mulf %131, %132 : vector<8x128xf32>
    %134 = arith.subf %129, %133 : vector<8x128xf32>
    %135 = arith.mulf %134, %134 : vector<8x128xf32>
    %136 = arith.subf %130, %133 : vector<8x128xf32>
    %137 = arith.mulf %136, %136 : vector<8x128xf32>
    %138 = arith.addf %135, %137 : vector<8x128xf32>
    %cst_110 = arith.constant 5.000000e-01 : f32
    %139 = vector.broadcast %cst_110 : f32 to vector<8x128xf32>
    %140 = arith.mulf %138, %139 : vector<8x128xf32>
    %cst_111 = arith.constant 9.99999974E-6 : f32
    %141 = vector.broadcast %cst_111 : f32 to vector<8x128xf32>
    %142 = arith.addf %140, %141 : vector<8x128xf32>
    %143 = math.rsqrt %142 : vector<8x128xf32>
    %144 = arith.subf %129, %133 : vector<8x128xf32>
    %145 = arith.mulf %144, %143 : vector<8x128xf32>
    %146 = vector.broadcast %127 : vector<1x128xf32> to vector<8x128xf32>
    %147 = arith.mulf %146, %145 : vector<8x128xf32>
    %148 = vector.broadcast %128 : vector<1x128xf32> to vector<8x128xf32>
    %149 = arith.addf %147, %148 : vector<8x128xf32>
    %cst_112 = arith.constant 0.000000e+00 : f32
    %150 = vector.broadcast %cst_112 : f32 to vector<8x128xf32>
    %151 = arith.subf %150, %149 : vector<8x128xf32>
    %152 = math.exp %151 : vector<8x128xf32>
    %cst_113 = arith.constant 1.000000e+00 : f32
    %153 = vector.broadcast %cst_113 : f32 to vector<8x128xf32>
    %154 = arith.addf %153, %152 : vector<8x128xf32>
    %cst_114 = arith.constant 1.000000e+00 : f32
    %155 = vector.broadcast %cst_114 : f32 to vector<8x128xf32>
    %156 = arith.divf %155, %154 : vector<8x128xf32>
    %157 = arith.subf %130, %133 : vector<8x128xf32>
    %158 = arith.mulf %157, %143 : vector<8x128xf32>
    %159 = vector.broadcast %127 : vector<1x128xf32> to vector<8x128xf32>
    %160 = arith.mulf %159, %158 : vector<8x128xf32>
    %161 = vector.broadcast %128 : vector<1x128xf32> to vector<8x128xf32>
    %162 = arith.addf %160, %161 : vector<8x128xf32>
    %cst_115 = arith.constant 0.000000e+00 : f32
    %163 = vector.broadcast %cst_115 : f32 to vector<8x128xf32>
    %164 = arith.subf %163, %162 : vector<8x128xf32>
    %165 = math.exp %164 : vector<8x128xf32>
    %cst_116 = arith.constant 1.000000e+00 : f32
    %166 = vector.broadcast %cst_116 : f32 to vector<8x128xf32>
    %167 = arith.addf %166, %165 : vector<8x128xf32>
    %cst_117 = arith.constant 1.000000e+00 : f32
    %168 = vector.broadcast %cst_117 : f32 to vector<8x128xf32>
    %169 = arith.divf %168, %167 : vector<8x128xf32>
    %170 = tpu.concatenate %156, %169 in 0 : vector<8x128xf32>, vector<8x128xf32> -> vector<16x128xf32>
    %c0_118 = arith.constant 0 : index
    %c0_119 = arith.constant 0 : index
    %171 = vector.load %arg9[%c0_118, %c0_119] : memref<8x16xf32, #tpu.memory_space<vmem>>, vector<8x16xf32>
    %cst_120 = arith.constant dense<0.000000e+00> : vector<8x128xf32>
    %172 = tpu.matmul %171, %170, %cst_120 {dimension_numbers = #tpu.dot_dimension_numbers<[1], [0], [0], [1], [0, 0, 1, 1], [], []>} : vector<8x16xf32>, vector<16x128xf32>, vector<8x128xf32> -> vector<8x128xf32>
    %c0_121 = arith.constant 0 : index
    %c0_122 = arith.constant 0 : index
    %173 = vector.load %arg10[%c0_121, %c0_122] : memref<128x64xf32, #tpu.memory_space<vmem>>, vector<128x64xf32>
    %cst_123 = arith.constant dense<0.000000e+00> : vector<8x64xf32>
    %174 = tpu.matmul %172, %173, %cst_123 {dimension_numbers = #tpu.dot_dimension_numbers<[1], [0], [0], [1], [0, 0, 1, 1], [], []>} : vector<8x128xf32>, vector<128x64xf32>, vector<8x64xf32> -> vector<8x64xf32>
    %c0_124 = arith.constant 0 : index
    %c0_125 = arith.constant 0 : index
    %c0_126 = arith.constant 0 : index
    %175 = vector.load %arg11[%c0_124, %c0_125, %c0_126] : memref<4x64x120xf32, #tpu.memory_space<vmem>>, vector<1x64x120xf32>
    %176 = vector.shape_cast %175 : vector<1x64x120xf32> to vector<64x120xf32>
    %cst_127 = arith.constant dense<0.000000e+00> : vector<8x120xf32>
    %177 = tpu.matmul %174, %176, %cst_127 {dimension_numbers = #tpu.dot_dimension_numbers<[1], [0], [0], [1], [0, 0, 1, 1], [], []>} : vector<8x64xf32>, vector<64x120xf32>, vector<8x120xf32> -> vector<8x120xf32>
    %c0_128 = arith.constant 0 : index
    %c0_129 = arith.constant 0 : index
    %c0_130 = arith.constant 0 : index
    %178 = vector.load %arg12[%c0_128, %c0_129, %c0_130] : memref<4x2x8xf32, #tpu.memory_space<vmem>>, vector<1x2x8xf32>
    %179 = vector.shape_cast %178 : vector<1x2x8xf32> to vector<2x8xf32>
    %cst_131 = arith.constant dense<0.000000e+00> : vector<2x120xf32>
    %180 = tpu.matmul %179, %177, %cst_131 {dimension_numbers = #tpu.dot_dimension_numbers<[1], [0], [0], [1], [0, 0, 1, 1], [], []>} : vector<2x8xf32>, vector<8x120xf32>, vector<2x120xf32> -> vector<2x120xf32>
    %c1_132 = arith.constant 1 : index
    %c0_133 = arith.constant 0 : index
    %c0_134 = arith.constant 0 : index
    %181 = vector.load %arg11[%c1_132, %c0_133, %c0_134] : memref<4x64x120xf32, #tpu.memory_space<vmem>>, vector<1x64x120xf32>
    %182 = vector.shape_cast %181 : vector<1x64x120xf32> to vector<64x120xf32>
    %cst_135 = arith.constant dense<0.000000e+00> : vector<8x120xf32>
    %183 = tpu.matmul %174, %182, %cst_135 {dimension_numbers = #tpu.dot_dimension_numbers<[1], [0], [0], [1], [0, 0, 1, 1], [], []>} : vector<8x64xf32>, vector<64x120xf32>, vector<8x120xf32> -> vector<8x120xf32>
    %c1_136 = arith.constant 1 : index
    %c0_137 = arith.constant 0 : index
    %c0_138 = arith.constant 0 : index
    %184 = vector.load %arg12[%c1_136, %c0_137, %c0_138] : memref<4x2x8xf32, #tpu.memory_space<vmem>>, vector<1x2x8xf32>
    %185 = vector.shape_cast %184 : vector<1x2x8xf32> to vector<2x8xf32>
    %cst_139 = arith.constant dense<0.000000e+00> : vector<2x120xf32>
    %186 = tpu.matmul %185, %183, %cst_139 {dimension_numbers = #tpu.dot_dimension_numbers<[1], [0], [0], [1], [0, 0, 1, 1], [], []>} : vector<2x8xf32>, vector<8x120xf32>, vector<2x120xf32> -> vector<2x120xf32>
    %187 = arith.addf %180, %186 : vector<2x120xf32>
    %c2_140 = arith.constant 2 : index
    %c0_141 = arith.constant 0 : index
    %c0_142 = arith.constant 0 : index
    %188 = vector.load %arg11[%c2_140, %c0_141, %c0_142] : memref<4x64x120xf32, #tpu.memory_space<vmem>>, vector<1x64x120xf32>
    %189 = vector.shape_cast %188 : vector<1x64x120xf32> to vector<64x120xf32>
    %cst_143 = arith.constant dense<0.000000e+00> : vector<8x120xf32>
    %190 = tpu.matmul %174, %189, %cst_143 {dimension_numbers = #tpu.dot_dimension_numbers<[1], [0], [0], [1], [0, 0, 1, 1], [], []>} : vector<8x64xf32>, vector<64x120xf32>, vector<8x120xf32> -> vector<8x120xf32>
    %c2_144 = arith.constant 2 : index
    %c0_145 = arith.constant 0 : index
    %c0_146 = arith.constant 0 : index
    %191 = vector.load %arg12[%c2_144, %c0_145, %c0_146] : memref<4x2x8xf32, #tpu.memory_space<vmem>>, vector<1x2x8xf32>
    %192 = vector.shape_cast %191 : vector<1x2x8xf32> to vector<2x8xf32>
    %cst_147 = arith.constant dense<0.000000e+00> : vector<2x120xf32>
    %193 = tpu.matmul %192, %190, %cst_147 {dimension_numbers = #tpu.dot_dimension_numbers<[1], [0], [0], [1], [0, 0, 1, 1], [], []>} : vector<2x8xf32>, vector<8x120xf32>, vector<2x120xf32> -> vector<2x120xf32>
    %194 = arith.addf %187, %193 : vector<2x120xf32>
    %c3_148 = arith.constant 3 : index
    %c0_149 = arith.constant 0 : index
    %c0_150 = arith.constant 0 : index
    %195 = vector.load %arg11[%c3_148, %c0_149, %c0_150] : memref<4x64x120xf32, #tpu.memory_space<vmem>>, vector<1x64x120xf32>
    %196 = vector.shape_cast %195 : vector<1x64x120xf32> to vector<64x120xf32>
    %cst_151 = arith.constant dense<0.000000e+00> : vector<8x120xf32>
    %197 = tpu.matmul %174, %196, %cst_151 {dimension_numbers = #tpu.dot_dimension_numbers<[1], [0], [0], [1], [0, 0, 1, 1], [], []>} : vector<8x64xf32>, vector<64x120xf32>, vector<8x120xf32> -> vector<8x120xf32>
    %c3_152 = arith.constant 3 : index
    %c0_153 = arith.constant 0 : index
    %c0_154 = arith.constant 0 : index
    %198 = vector.load %arg12[%c3_152, %c0_153, %c0_154] : memref<4x2x8xf32, #tpu.memory_space<vmem>>, vector<1x2x8xf32>
    %199 = vector.shape_cast %198 : vector<1x2x8xf32> to vector<2x8xf32>
    %cst_155 = arith.constant dense<0.000000e+00> : vector<2x120xf32>
    %200 = tpu.matmul %199, %197, %cst_155 {dimension_numbers = #tpu.dot_dimension_numbers<[1], [0], [0], [1], [0, 0, 1, 1], [], []>} : vector<2x8xf32>, vector<8x120xf32>, vector<2x120xf32> -> vector<2x120xf32>
    %201 = arith.addf %194, %200 : vector<2x120xf32>
    %c0_156 = arith.constant 0 : index
    %c0_157 = arith.constant 0 : index
    %202 = vector.load %arg13[%c0_156, %c0_157] : memref<3x120xf32, #tpu.memory_space<vmem>>, vector<1x120xf32>
    %203 = vector.broadcast %202 : vector<1x120xf32> to vector<2x120xf32>
    %204 = arith.addf %201, %203 : vector<2x120xf32>
    %c1_158 = arith.constant 1 : index
    %c0_159 = arith.constant 0 : index
    %205 = vector.load %arg13[%c1_158, %c0_159] : memref<3x120xf32, #tpu.memory_space<vmem>>, vector<1x120xf32>
    %c2_160 = arith.constant 2 : index
    %c0_161 = arith.constant 0 : index
    %206 = vector.load %arg13[%c2_160, %c0_161] : memref<3x120xf32, #tpu.memory_space<vmem>>, vector<1x120xf32>
    %cst_162 = arith.constant dense<0.000000e+00> : vector<120xf32>
    %207 = vector.multi_reduction <add>, %204, %cst_162 [0] : vector<2x120xf32> to vector<120xf32>
    %208 = vector.shape_cast %207 : vector<120xf32> to vector<1x120xf32>
    %cst_163 = arith.constant 2.000000e+00 : f32
    %209 = vector.broadcast %cst_163 : f32 to vector<1x120xf32>
    %210 = arith.divf %208, %209 : vector<1x120xf32>
    %211 = vector.broadcast %210 : vector<1x120xf32> to vector<2x120xf32>
    %212 = arith.subf %204, %211 : vector<2x120xf32>
    %213 = arith.mulf %212, %212 : vector<2x120xf32>
    %cst_164 = arith.constant dense<0.000000e+00> : vector<120xf32>
    %214 = vector.multi_reduction <add>, %213, %cst_164 [0] : vector<2x120xf32> to vector<120xf32>
    %215 = vector.shape_cast %214 : vector<120xf32> to vector<1x120xf32>
    %cst_165 = arith.constant 2.000000e+00 : f32
    %216 = vector.broadcast %cst_165 : f32 to vector<1x120xf32>
    %217 = arith.divf %215, %216 : vector<1x120xf32>
    %cst_166 = arith.constant 9.99999974E-6 : f32
    %218 = vector.broadcast %cst_166 : f32 to vector<1x120xf32>
    %219 = arith.addf %217, %218 : vector<1x120xf32>
    %220 = math.rsqrt %219 : vector<1x120xf32>
    %221 = vector.broadcast %210 : vector<1x120xf32> to vector<2x120xf32>
    %222 = arith.subf %204, %221 : vector<2x120xf32>
    %223 = vector.broadcast %220 : vector<1x120xf32> to vector<2x120xf32>
    %224 = arith.mulf %222, %223 : vector<2x120xf32>
    %225 = vector.broadcast %205 : vector<1x120xf32> to vector<2x120xf32>
    %226 = arith.mulf %225, %224 : vector<2x120xf32>
    %227 = vector.broadcast %206 : vector<1x120xf32> to vector<2x120xf32>
    %228 = arith.addf %226, %227 : vector<2x120xf32>
    %cst_167 = arith.constant 0.000000e+00 : f32
    %229 = vector.broadcast %cst_167 : f32 to vector<2x120xf32>
    %230 = arith.subf %229, %228 : vector<2x120xf32>
    %231 = math.exp %230 : vector<2x120xf32>
    %cst_168 = arith.constant 1.000000e+00 : f32
    %232 = vector.broadcast %cst_168 : f32 to vector<2x120xf32>
    %233 = arith.addf %232, %231 : vector<2x120xf32>
    %cst_169 = arith.constant 1.000000e+00 : f32
    %234 = vector.broadcast %cst_169 : f32 to vector<2x120xf32>
    %235 = arith.divf %234, %233 : vector<2x120xf32>
    %c0_170 = arith.constant 0 : index
    %c0_171 = arith.constant 0 : index
    %236 = vector.load %arg14[%c0_170, %c0_171] : memref<120x84xf32, #tpu.memory_space<vmem>>, vector<120x84xf32>
    %cst_172 = arith.constant dense<0.000000e+00> : vector<2x84xf32>
    %237 = tpu.matmul %235, %236, %cst_172 {dimension_numbers = #tpu.dot_dimension_numbers<[1], [0], [0], [1], [0, 0, 1, 1], [], []>} : vector<2x120xf32>, vector<120x84xf32>, vector<2x84xf32> -> vector<2x84xf32>
    %c0_173 = arith.constant 0 : index
    %c0_174 = arith.constant 0 : index
    %238 = vector.load %arg15[%c0_173, %c0_174] : memref<3x84xf32, #tpu.memory_space<vmem>>, vector<1x84xf32>
    %239 = vector.broadcast %238 : vector<1x84xf32> to vector<2x84xf32>
    %240 = arith.addf %237, %239 : vector<2x84xf32>
    %c1_175 = arith.constant 1 : index
    %c0_176 = arith.constant 0 : index
    %241 = vector.load %arg15[%c1_175, %c0_176] : memref<3x84xf32, #tpu.memory_space<vmem>>, vector<1x84xf32>
    %c2_177 = arith.constant 2 : index
    %c0_178 = arith.constant 0 : index
    %242 = vector.load %arg15[%c2_177, %c0_178] : memref<3x84xf32, #tpu.memory_space<vmem>>, vector<1x84xf32>
    %cst_179 = arith.constant dense<0.000000e+00> : vector<84xf32>
    %243 = vector.multi_reduction <add>, %240, %cst_179 [0] : vector<2x84xf32> to vector<84xf32>
    %244 = vector.shape_cast %243 : vector<84xf32> to vector<1x84xf32>
    %cst_180 = arith.constant 2.000000e+00 : f32
    %245 = vector.broadcast %cst_180 : f32 to vector<1x84xf32>
    %246 = arith.divf %244, %245 : vector<1x84xf32>
    %247 = vector.broadcast %246 : vector<1x84xf32> to vector<2x84xf32>
    %248 = arith.subf %240, %247 : vector<2x84xf32>
    %249 = arith.mulf %248, %248 : vector<2x84xf32>
    %cst_181 = arith.constant dense<0.000000e+00> : vector<84xf32>
    %250 = vector.multi_reduction <add>, %249, %cst_181 [0] : vector<2x84xf32> to vector<84xf32>
    %251 = vector.shape_cast %250 : vector<84xf32> to vector<1x84xf32>
    %cst_182 = arith.constant 2.000000e+00 : f32
    %252 = vector.broadcast %cst_182 : f32 to vector<1x84xf32>
    %253 = arith.divf %251, %252 : vector<1x84xf32>
    %cst_183 = arith.constant 9.99999974E-6 : f32
    %254 = vector.broadcast %cst_183 : f32 to vector<1x84xf32>
    %255 = arith.addf %253, %254 : vector<1x84xf32>
    %256 = math.rsqrt %255 : vector<1x84xf32>
    %257 = vector.broadcast %246 : vector<1x84xf32> to vector<2x84xf32>
    %258 = arith.subf %240, %257 : vector<2x84xf32>
    %259 = vector.broadcast %256 : vector<1x84xf32> to vector<2x84xf32>
    %260 = arith.mulf %258, %259 : vector<2x84xf32>
    %261 = vector.broadcast %241 : vector<1x84xf32> to vector<2x84xf32>
    %262 = arith.mulf %261, %260 : vector<2x84xf32>
    %263 = vector.broadcast %242 : vector<1x84xf32> to vector<2x84xf32>
    %264 = arith.addf %262, %263 : vector<2x84xf32>
    %cst_184 = arith.constant 0.000000e+00 : f32
    %265 = vector.broadcast %cst_184 : f32 to vector<2x84xf32>
    %266 = arith.subf %265, %264 : vector<2x84xf32>
    %267 = math.exp %266 : vector<2x84xf32>
    %cst_185 = arith.constant 1.000000e+00 : f32
    %268 = vector.broadcast %cst_185 : f32 to vector<2x84xf32>
    %269 = arith.addf %268, %267 : vector<2x84xf32>
    %cst_186 = arith.constant 1.000000e+00 : f32
    %270 = vector.broadcast %cst_186 : f32 to vector<2x84xf32>
    %271 = arith.divf %270, %269 : vector<2x84xf32>
    %c0_187 = arith.constant 0 : index
    %c0_188 = arith.constant 0 : index
    %272 = vector.load %arg16[%c0_187, %c0_188] : memref<84x10xf32, #tpu.memory_space<vmem>>, vector<84x10xf32>
    %cst_189 = arith.constant dense<0.000000e+00> : vector<2x10xf32>
    %273 = tpu.matmul %271, %272, %cst_189 {dimension_numbers = #tpu.dot_dimension_numbers<[1], [0], [0], [1], [0, 0, 1, 1], [], []>} : vector<2x84xf32>, vector<84x10xf32>, vector<2x10xf32> -> vector<2x10xf32>
    %c0_190 = arith.constant 0 : index
    %c0_191 = arith.constant 0 : index
    %274 = vector.load %arg17[%c0_190, %c0_191] : memref<1x10xf32, #tpu.memory_space<vmem>>, vector<1x10xf32>
    %275 = vector.broadcast %274 : vector<1x10xf32> to vector<2x10xf32>
    %276 = arith.addf %273, %275 : vector<2x10xf32>
    %c0_192 = arith.constant 0 : index
    %c0_193 = arith.constant 0 : index
    %277 = vector.load %arg18[%c0_192, %c0_193] : memref<2x10xf32, #tpu.memory_space<vmem>>, vector<2x10xf32>
    tpu.vector_store %arg18[%c0_192, %c0_193], %276 {strides = array<i32>} : memref<2x10xf32, #tpu.memory_space<vmem>>, vector<2x10xf32>,
    return
  }
}

</mosaic_0001>

<llo_original>
// kernel: lenet_forward.1
$region0: #{lenet_forward.1}
  #allocation0 [shape = 'u32[]', space=smem, size = 0x4, offset = 0x4, fixed_abs, tag = 'smem constant byte address 0x4 - core index']
  #allocation1 [shape = 'u32[72,128]{1,0:T(1,128)}', space=vmem, size = 0x9000, scoped, tag = 'internal scratch']
  %s0 = inlined_call_operand.vmem [shape: f32[2,1,28,28], index: 0, kind: input, shape index: {}]
  %s1 = inlined_call_operand.vmem [shape: f32[5,28,144], index: 1, kind: input, shape index: {}]
  %s2 = inlined_call_operand.hbm [shape: f32[5,48,56], index: 2, kind: input, shape index: {}]
  %s3 = inlined_call_operand.vmem [shape: f32[3,144], index: 3, kind: input, shape index: {}]
  %s4 = inlined_call_operand.vmem [shape: f32[24,48], index: 4, kind: input, shape index: {}]
  %s5 = inlined_call_operand.hbm [shape: f32[144,72], index: 5, kind: input, shape index: {}]
  %s6 = inlined_call_operand.hbm [shape: f32[5,72,128], index: 6, kind: input, shape index: {}]
  %s7 = inlined_call_operand.vmem [shape: f32[5,16,24], index: 7, kind: input, shape index: {}]
  %s8 = inlined_call_operand.vmem [shape: f32[3,128], index: 8, kind: input, shape index: {}]
  %s9 = inlined_call_operand.vmem [shape: f32[8,16], index: 9, kind: input, shape index: {}]
  %s10 = inlined_call_operand.vmem [shape: f32[128,64], index: 10, kind: input, shape index: {}]
  %s11 = inlined_call_operand.hbm [shape: f32[4,64,120], index: 11, kind: input, shape index: {}]
  %s12 = inlined_call_operand.vmem [shape: f32[4,2,8], index: 12, kind: input, shape index: {}]
  %s13 = inlined_call_operand.vmem [shape: f32[3,120], index: 13, kind: input, shape index: {}]
  %s14 = inlined_call_operand.vmem [shape: f32[120,84], index: 14, kind: input, shape index: {}]
  %s15 = inlined_call_operand.hbm [shape: f32[3,84], index: 15, kind: input, shape index: {}]
  %s16 = inlined_call_operand.vmem [shape: f32[84,10], index: 16, kind: input, shape index: {}]
  %s17 = inlined_call_operand.hbm [shape: f32[1,10], index: 17, kind: input, shape index: {}]
  %s18 = inlined_call_operand.hbm [shape: f32[2,10], index: 18, kind: output, shape index: {}]
  %s19 = sld [smem:[#allocation0]]
  $region106: #{lenet_forward.1} parent=0
    _
  %s21 = ssub.s32 1, %s19
  %s22 = scalar_select 0, %s21, %s19
  $region1: #{lenet_forward.1} parent=0
    #allocation2 [shape = 'u8[122880]{0}', space=vmem, size = 0x1e000, scoped, tag = 'input window, operand 2, single buffered']
    #allocation3 [shape = 's32[1]{0}', space=sflag, size = 0x4, scoped, tag = 'scoped memory for lenet_forward.1']
    #allocation4 [shape = 's32[1]{0}', space=sflag, size = 0x4, scoped, tag = 'scoped memory for lenet_forward.1']
    #allocation5 [shape = 'u8[73728]{0}', space=vmem, size = 0x12000, scoped, tag = 'input window, operand 5, single buffered']
    #allocation6 [shape = 's32[1]{0}', space=sflag, size = 0x4, scoped, tag = 'scoped memory for lenet_forward.1']
    #allocation7 [shape = 'u8[184320]{0}', space=vmem, size = 0x2d000, scoped, tag = 'input window, operand 6, single buffered']
    #allocation8 [shape = 'u8[131072]{0}', space=vmem, size = 0x20000, scoped, tag = 'input window, operand 11, single buffered']
    #allocation9 [shape = 's32[1]{0}', space=sflag, size = 0x4, scoped, tag = 'scoped memory for lenet_forward.1']
    #allocation10 [shape = 'u8[2048]{0}', space=vmem, size = 0x800, scoped, tag = 'input window, operand 15, single buffered']
    #allocation11 [shape = 'u8[512]{0}', space=vmem, size = 0x400, scoped, tag = 'input window, operand 17, single buffered']
    #allocation12 [shape = 's32[1]{0}', space=sflag, size = 0x4, scoped, tag = 'scoped memory for lenet_forward.1']
    #allocation13 [shape = 'u8[1024]{0}', space=vmem, size = 0x400, scoped, tag = 'output window, operand 0, single buffered']
    %23 = vsyncpa [#allocation3], 0
    %24 = vsyncpa [#allocation6], 0
    %25 = vsyncpa [#allocation9], 0
    %26 = vsyncpa [#allocation12], 0
    %27 = vsyncpa [#allocation4], 0
    // Predicated region
    $region2: #{lenet_forward.1} parent=1 // pred_check
      _
    $region3: #{lenet_forward.1} parent=1 // pred_check_branch
      %29 = sbr.rel (0) target = $region5
    $region4: #{lenet_forward.1} parent=1 // pred_region
      _
    $region5: #{lenet_forward.1} parent=1 // pred_fallthru
      _
    // Predicated region
    $region6: #{lenet_forward.1} parent=1 // pred_check
      _
    $region7: #{lenet_forward.1} parent=1 // pred_check_branch
      %31 = sbr.rel (0) target = $region9
    $region8: #{lenet_forward.1} parent=1 // pred_region
      _
    $region9: #{lenet_forward.1} parent=1 // pred_fallthru
      _
    // Predicated region
    $region10: #{lenet_forward.1} parent=1 // pred_check
      _
    $region11: #{lenet_forward.1} parent=1 // pred_check_branch
      %33 = sbr.rel (0) target = $region13
    $region12: #{lenet_forward.1} parent=1 // pred_region
      %35 = vsyncadd [#allocation3], 0
      %s36 = sshll.u32 %s2, 4
      %s37 = int_to_ptr.hbm [resolvable:$true] %s36
      %s38 = sshll.u32 [#allocation2], 4
      %s39 = int_to_ptr.vmem [resolvable:$true] %s38
      %44 = dma.hbm_to_vmem [thread:$0]  %s37, 3840, %s39, [#allocation3], 128, 128, 8
    $region13: #{lenet_forward.1} parent=1 // pred_fallthru
      _
    // Predicated region
    $region14: #{lenet_forward.1} parent=1 // pred_check
      _
    $region15: #{lenet_forward.1} parent=1 // pred_check_branch
      %46 = sbr.rel (0) target = $region17
    $region16: #{lenet_forward.1} parent=1 // pred_region
      _
    $region17: #{lenet_forward.1} parent=1 // pred_fallthru
      _
    // Predicated region
    $region18: #{lenet_forward.1} parent=1 // pred_check
      _
    $region19: #{lenet_forward.1} parent=1 // pred_check_branch
      %48 = sbr.rel (0) target = $region21
    $region20: #{lenet_forward.1} parent=1 // pred_region
      _
    $region21: #{lenet_forward.1} parent=1 // pred_fallthru
      _
    // Predicated region
    $region22: #{lenet_forward.1} parent=1 // pred_check
      _
    $region23: #{lenet_forward.1} parent=1 // pred_check_branch
      %50 = sbr.rel (0) target = $region25
    $region24: #{lenet_forward.1} parent=1 // pred_region
      %52 = vsyncadd [#allocation6], 0
      %s53 = sshll.u32 %s5, 4
      %s54 = int_to_ptr.hbm [resolvable:$true] %s53
      %s55 = sshll.u32 [#allocation5], 4
      %s56 = int_to_ptr.vmem [resolvable:$true] %s55
      %61 = dma.hbm_to_vmem [thread:$0]  %s54, 2304, %s56, [#allocation6], 128, 128, 8
    $region25: #{lenet_forward.1} parent=1 // pred_fallthru
      _
    // Predicated region
    $region26: #{lenet_forward.1} parent=1 // pred_check
      _
    $region27: #{lenet_forward.1} parent=1 // pred_check_branch
      %63 = sbr.rel (0) target = $region29
    $region28: #{lenet_forward.1} parent=1 // pred_region
      %65 = vsyncadd [#allocation6], 0
      %s66 = sshll.u32 %s6, 4
      %s67 = int_to_ptr.hbm [resolvable:$true] %s66
      %s68 = sshll.u32 [#allocation7], 4
      %s69 = int_to_ptr.vmem [resolvable:$true] %s68
      %74 = dma.hbm_to_vmem [thread:$0]  %s67, 5760, %s69, [#allocation6], 128, 128, 8
    $region29: #{lenet_forward.1} parent=1 // pred_fallthru
      _
    // Predicated region
    $region30: #{lenet_forward.1} parent=1 // pred_check
      _
    $region31: #{lenet_forward.1} parent=1 // pred_check_branch
      %76 = sbr.rel (0) target = $region33
    $region32: #{lenet_forward.1} parent=1 // pred_region
      _
    $region33: #{lenet_forward.1} parent=1 // pred_fallthru
      _
    // Predicated region
    $region34: #{lenet_forward.1} parent=1 // pred_check
      _
    $region35: #{lenet_forward.1} parent=1 // pred_check_branch
      %78 = sbr.rel (0) target = $region37
    $region36: #{lenet_forward.1} parent=1 // pred_region
      _
    $region37: #{lenet_forward.1} parent=1 // pred_fallthru
      _
    // Predicated region
    $region38: #{lenet_forward.1} parent=1 // pred_check
      _
    $region39: #{lenet_forward.1} parent=1 // pred_check_branch
      %80 = sbr.rel (0) target = $region41
    $region40: #{lenet_forward.1} parent=1 // pred_region
      _
    $region41: #{lenet_forward.1} parent=1 // pred_fallthru
      _
    // Predicated region
    $region42: #{lenet_forward.1} parent=1 // pred_check
      _
    $region43: #{lenet_forward.1} parent=1 // pred_check_branch
      %82 = sbr.rel (0) target = $region45
    $region44: #{lenet_forward.1} parent=1 // pred_region
      _
    $region45: #{lenet_forward.1} parent=1 // pred_fallthru
      _
    // Predicated region
    $region46: #{lenet_forward.1} parent=1 // pred_check
      _
    $region47: #{lenet_forward.1} parent=1 // pred_check_branch
      %84 = sbr.rel (0) target = $region49
    $region48: #{lenet_forward.1} parent=1 // pred_region
      %86 = vsyncadd [#allocation9], 0
      %s87 = sshll.u32 %s11, 4
      %s88 = int_to_ptr.hbm [resolvable:$true] %s87
      %s89 = sshll.u32 [#allocation8], 4
      %s90 = int_to_ptr.vmem [resolvable:$true] %s89
      %95 = dma.hbm_to_vmem [thread:$0]  %s88, 4096, %s90, [#allocation9], 128, 128, 8
    $region49: #{lenet_forward.1} parent=1 // pred_fallthru
      _
    // Predicated region
    $region50: #{lenet_forward.1} parent=1 // pred_check
      _
    $region51: #{lenet_forward.1} parent=1 // pred_check_branch
      %97 = sbr.rel (0) target = $region53
    $region52: #{lenet_forward.1} parent=1 // pred_region
      _
    $region53: #{lenet_forward.1} parent=1 // pred_fallthru
      _
    // Predicated region
    $region54: #{lenet_forward.1} parent=1 // pred_check
      _
    $region55: #{lenet_forward.1} parent=1 // pred_check_branch
      %99 = sbr.rel (0) target = $region57
    $region56: #{lenet_forward.1} parent=1 // pred_region
      _
    $region57: #{lenet_forward.1} parent=1 // pred_fallthru
      _
    // Predicated region
    $region58: #{lenet_forward.1} parent=1 // pred_check
      _
    $region59: #{lenet_forward.1} parent=1 // pred_check_branch
      %101 = sbr.rel (0) target = $region61
    $region60: #{lenet_forward.1} parent=1 // pred_region
      _
    $region61: #{lenet_forward.1} parent=1 // pred_fallthru
      _
    // Predicated region
    $region62: #{lenet_forward.1} parent=1 // pred_check
      _
    $region63: #{lenet_forward.1} parent=1 // pred_check_branch
      %103 = sbr.rel (0) target = $region65
    $region64: #{lenet_forward.1} parent=1 // pred_region
      %105 = vsyncadd [#allocation9], 0
      %s107 = sshll.u32 %s15, 4
      %s108 = int_to_ptr.hbm [resolvable:$true] %s107
      %s109 = sshll.u32 [#allocation10], 4
      %s110 = int_to_ptr.vmem [resolvable:$true] %s109
      %112 = dma.hbm_to_vmem [thread:$0]  %s108, 64, %s110, [#allocation9]
    $region65: #{lenet_forward.1} parent=1 // pred_fallthru
      _
    // Predicated region
    $region66: #{lenet_forward.1} parent=1 // pred_check
      _
    $region67: #{lenet_forward.1} parent=1 // pred_check_branch
      %114 = sbr.rel (0) target = $region69
    $region68: #{lenet_forward.1} parent=1 // pred_region
      _
    $region69: #{lenet_forward.1} parent=1 // pred_fallthru
      _
    // Predicated region
    $region70: #{lenet_forward.1} parent=1 // pred_check
      _
    $region71: #{lenet_forward.1} parent=1 // pred_check_branch
      %116 = sbr.rel (0) target = $region73
    $region72: #{lenet_forward.1} parent=1 // pred_region
      %118 = vsyncadd [#allocation12], 0
      %s120 = sshll.u32 %s17, 4
      %s121 = int_to_ptr.hbm [resolvable:$true] %s120
      %s122 = sshll.u32 [#allocation11], 4
      %s123 = int_to_ptr.vmem [resolvable:$true] %s122
      %125 = dma.hbm_to_vmem [thread:$0]  %s121, 16, %s123, [#allocation12]
    $region73: #{lenet_forward.1} parent=1 // pred_fallthru
      _
    // Predicated region
    $region74: #{lenet_forward.1} parent=1 // pred_check
      _
    $region75: #{lenet_forward.1} parent=1 // pred_check_branch
      %127 = sbr.rel (0) target = $region77
    $region76: #{lenet_forward.1} parent=1 // pred_region
      %129 = dma.done [#allocation3], 3840
    $region77: #{lenet_forward.1} parent=1 // pred_fallthru
      _
    // Predicated region
    $region78: #{lenet_forward.1} parent=1 // pred_check
      _
    $region79: #{lenet_forward.1} parent=1 // pred_check_branch
      %131 = sbr.rel (0) target = $region81
    $region80: #{lenet_forward.1} parent=1 // pred_region
      %133 = dma.done [#allocation6], 2304
    $region81: #{lenet_forward.1} parent=1 // pred_fallthru
      _
    // Predicated region
    $region82: #{lenet_forward.1} parent=1 // pred_check
      _
    $region83: #{lenet_forward.1} parent=1 // pred_check_branch
      %135 = sbr.rel (0) target = $region85
    $region84: #{lenet_forward.1} parent=1 // pred_region
      %137 = dma.done [#allocation6], 5760
    $region85: #{lenet_forward.1} parent=1 // pred_fallthru
      _
    // Predicated region
    $region86: #{lenet_forward.1} parent=1 // pred_check
      _
    $region87: #{lenet_forward.1} parent=1 // pred_check_branch
      %139 = sbr.rel (0) target = $region89
    $region88: #{lenet_forward.1} parent=1 // pred_region
      %141 = dma.done [#allocation9], 4096
    $region89: #{lenet_forward.1} parent=1 // pred_fallthru
      _
    // Predicated region
    $region90: #{lenet_forward.1} parent=1 // pred_check
      _
    $region91: #{lenet_forward.1} parent=1 // pred_check_branch
      %143 = sbr.rel (0) target = $region93
    $region92: #{lenet_forward.1} parent=1 // pred_region
      %145 = dma.done [#allocation9], 64
    $region93: #{lenet_forward.1} parent=1 // pred_fallthru
      _
    // Predicated region
    $region94: #{lenet_forward.1} parent=1 // pred_check
      _
    $region95: #{lenet_forward.1} parent=1 // pred_check_branch
      %147 = sbr.rel (0) target = $region97
    $region96: #{lenet_forward.1} parent=1 // pred_region
      %149 = dma.done [#allocation12], 16
    $region97: #{lenet_forward.1} parent=1 // pred_fallthru
      _
    %v150 = vld [vmem:[%s0] sm:$0xff]
    %v151 = vld [vmem:[%s0 + $0x8] sm:$0xff]
    %v152 = vld [vmem:[%s0 + $0x10] sm:$0xff]
    %v153 = vld [vmem:[%s0 + $0x18] sm:$0xf]
    %s154 = scalar_lea.vmem %s0, 32
    %v155 = vld [vmem:[%s154] sm:$0xff]
    %v156 = vld [vmem:[%s154 + $0x8] sm:$0xff]
    %v157 = vld [vmem:[%s154 + $0x10] sm:$0xff]
    %v158 = vld [vmem:[%s154 + $0x18] sm:$0xf]
    %vm163 = vcmask 1043456
    %v164 = vrot.slane %v155, 4
    %v165 = vrot.slane %v156, 4
    %v166 = vsel %vm163, %v164, %v165
    %v167 = vrot.slane %v157, 4
    %v168 = vsel %vm163, %v165, %v167
    %v169 = vrot.slane %v158, 4
    %v170 = vsel %vm163, %v167, %v169
    %v175 = vsel %vm163, %v153, %v164
    %v176 = vld [vmem:[#allocation2] sm:$0xff]
    %v177 = vld [vmem:[#allocation2 + $0x8] sm:$0xff]
    %v178 = vld [vmem:[#allocation2 + $0x10] sm:$0xff]
    %v179 = vld [vmem:[#allocation2 + $0x18] sm:$0xff]
    %v180 = vld [vmem:[#allocation2 + $0x20] sm:$0xff]
    %v181 = vld [vmem:[#allocation2 + $0x28] sm:$0xff]
    %vm182 = vcmask 457728
    %v184 = vsel %vm182, %v176, 0
    %v187 = vsel %vm182, %v177, 0
    %v190 = vsel %vm182, %v178, 0
    %v193 = vsel %vm182, %v179, 0
    %v196 = vsel %vm182, %v180, 0
    %v199 = vsel %vm182, %v181, 0
    %201 = vmatpush.msra.mxu0 0.0
    %202 = vmatpush.msra.mxu0 0.0
    %203 = vmatpush.msra.mxu0 0.0
    %204 = vmatpush.msra.mxu0 0.0
    %205 = vmatpush.msra.mxu0 0.0
    %206 = vmatpush.msra.mxu0 0.0
    %207 = vmatpush.msra.mxu0 0.0
    %208 = vmatpush.msra.mxu0 0.0
    %209 = vmatpush.msra.mxu0 0.0
    %210 = vmatpush.msra.mxu0 %v170
    %211 = vmatpush.msra.mxu0 %v168
    %212 = vmatpush.msra.mxu0 %v166
    %213 = vmatpush.msra.mxu0 %v175
    %214 = vmatpush.msra.mxu0 %v152
    %215 = vmatpush.msra.mxu0 %v151
    %216 = vmatpush.msra.mxu0 %v150
    %217 = vmatmul.f32.gmra.mxu0 %v184
    %v218 = vpop.f32.mrf.mxu0
    %v219 = vadd.f32 0.0, %v218
    %220 = vmatmul.f32.gmra.mxu0 %v187
    %v221 = vpop.f32.mrf.mxu0
    %v222 = vadd.f32 0.0, %v221
    %223 = vmatmul.f32.gmra.mxu0 %v190
    %v224 = vpop.f32.mrf.mxu0
    %v225 = vadd.f32 0.0, %v224
    %226 = vmatmul.f32.gmra.mxu0 %v193
    %v227 = vpop.f32.mrf.mxu0
    %v228 = vadd.f32 0.0, %v227
    %229 = vmatmul.f32.gmra.mxu0 %v196
    %v230 = vpop.f32.mrf.mxu0
    %v231 = vadd.f32 0.0, %v230
    %232 = vmatmul.f32.gmra.mxu0 %v199
    %v233 = vpop.f32.mrf.mxu0
    %v234 = vadd.f32 0.0, %v233
    %235 = vdwg.mxu0
    %v236 = vld [vmem:[%s1] sm:$0xff]
    %v237 = vld [vmem:[%s1 + $0x8] sm:$0xff]
    %v238 = vld [vmem:[%s1 + $0x10] sm:$0xff]
    %v239 = vld [vmem:[%s1 + $0x18] sm:$0xff]
    %v240 = vld [vmem:[%s1 + $0x20] sm:$0xff]
    %v241 = vld [vmem:[%s1 + $0x28] sm:$0xff]
    %v242 = vld [vmem:[%s1 + $0x30] sm:$0xf]
    %v243 = vld [vmem:[%s1 + $0x38] sm:$0xf]
    %s244 = scalar_lea.vmem [#allocation2], 48
    %v245 = vld [vmem:[%s244] sm:$0xff]
    %v246 = vld [vmem:[%s244 + $0x8] sm:$0xff]
    %v247 = vld [vmem:[%s244 + $0x10] sm:$0xff]
    %v248 = vld [vmem:[%s244 + $0x18] sm:$0xff]
    %v249 = vld [vmem:[%s244 + $0x20] sm:$0xff]
    %v250 = vld [vmem:[%s244 + $0x28] sm:$0xff]
    %v252 = vsel %vm182, %v245, 0
    %v255 = vsel %vm182, %v246, 0
    %v258 = vsel %vm182, %v247, 0
    %v261 = vsel %vm182, %v248, 0
    %v264 = vsel %vm182, %v249, 0
    %v267 = vsel %vm182, %v250, 0
    %269 = vmatpush.msra.mxu0 0.0
    %270 = vmatpush.msra.mxu0 0.0
    %271 = vmatpush.msra.mxu0 0.0
    %272 = vmatpush.msra.mxu0 0.0
    %273 = vmatpush.msra.mxu0 0.0
    %274 = vmatpush.msra.mxu0 0.0
    %275 = vmatpush.msra.mxu0 0.0
    %276 = vmatpush.msra.mxu0 0.0
    %277 = vmatpush.msra.mxu0 0.0
    %278 = vmatpush.msra.mxu0 %v170
    %279 = vmatpush.msra.mxu0 %v168
    %280 = vmatpush.msra.mxu0 %v166
    %281 = vmatpush.msra.mxu0 %v175
    %282 = vmatpush.msra.mxu0 %v152
    %283 = vmatpush.msra.mxu0 %v151
    %284 = vmatpush.msra.mxu0 %v150
    %285 = vmatmul.f32.gmra.mxu0 %v252
    %v286 = vpop.f32.mrf.mxu0
    %v287 = vadd.f32 0.0, %v286
    %288 = vmatmul.f32.gmra.mxu0 %v255
    %v289 = vpop.f32.mrf.mxu0
    %v290 = vadd.f32 0.0, %v289
    %291 = vmatmul.f32.gmra.mxu0 %v258
    %v292 = vpop.f32.mrf.mxu0
    %v293 = vadd.f32 0.0, %v292
    %294 = vmatmul.f32.gmra.mxu0 %v261
    %v295 = vpop.f32.mrf.mxu0
    %v296 = vadd.f32 0.0, %v295
    %297 = vmatmul.f32.gmra.mxu0 %v264
    %v298 = vpop.f32.mrf.mxu0
    %v299 = vadd.f32 0.0, %v298
    %300 = vmatmul.f32.gmra.mxu0 %v267
    %v301 = vpop.f32.mrf.mxu0
    %v302 = vadd.f32 0.0, %v301
    %303 = vdwg.mxu0
    %s304 = scalar_lea.vmem %s1, 64
    %v305 = vld [vmem:[%s304] sm:$0xff]
    %v306 = vld [vmem:[%s304 + $0x8] sm:$0xff]
    %v307 = vld [vmem:[%s304 + $0x10] sm:$0xff]
    %v308 = vld [vmem:[%s304 + $0x18] sm:$0xff]
    %v309 = vld [vmem:[%s304 + $0x20] sm:$0xff]
    %v310 = vld [vmem:[%s304 + $0x28] sm:$0xff]
    %v311 = vld [vmem:[%s304 + $0x30] sm:$0xf]
    %v312 = vld [vmem:[%s304 + $0x38] sm:$0xf]
    %vm313 = vcmask 228352
    %v315 = vsel %vm313, %v287, 0
    %v318 = vsel %vm313, %v290, 0
    %v321 = vsel %vm313, %v293, 0
    %v324 = vsel %vm313, %v296, 0
    %v327 = vsel %vm313, %v299, 0
    %v330 = vsel %vm313, %v302, 0
    %v333 = vsel %vm163, %v311, 0
    %v336 = vsel %vm163, %v312, 0
    %338 = vmatpush.msra.mxu0 0.0
    %339 = vmatpush.msra.mxu0 0.0
    %340 = vmatpush.msra.mxu0 0.0
    %341 = vmatpush.msra.mxu0 0.0
    %342 = vmatpush.msra.mxu0 0.0
    %343 = vmatpush.msra.mxu0 0.0
    %344 = vmatpush.msra.mxu0 0.0
    %345 = vmatpush.msra.mxu0 0.0
    %346 = vmatpush.msra.mxu0 0.0
    %347 = vmatpush.msra.mxu0 0.0
    %348 = vmatpush.msra.mxu0 0.0
    %349 = vmatpush.msra.mxu0 0.0
    %350 = vmatpush.msra.mxu0 %v333
    %351 = vmatpush.msra.mxu0 %v309
    %352 = vmatpush.msra.mxu0 %v307
    %353 = vmatpush.msra.mxu0 %v305
    %354 = vmatmul.f32.gmra.mxu0 %v315
    %v355 = vpop.f32.mrf.mxu0
    %v356 = vadd.f32 0.0, %v355
    %357 = vmatmul.f32.gmra.mxu0 %v318
    %v358 = vpop.f32.mrf.mxu0
    %v359 = vadd.f32 0.0, %v358
    %360 = vmatmul.f32.gmra.mxu0 %v321
    %v361 = vpop.f32.mrf.mxu0
    %v362 = vadd.f32 0.0, %v361
    %363 = vmatmul.f32.gmra.mxu0 %v324
    %v364 = vpop.f32.mrf.mxu0
    %v365 = vadd.f32 0.0, %v364
    %366 = vmatmul.f32.gmra.mxu0 %v327
    %v367 = vpop.f32.mrf.mxu0
    %v368 = vadd.f32 0.0, %v367
    %369 = vmatmul.f32.gmra.mxu0 %v330
    %v370 = vpop.f32.mrf.mxu0
    %v371 = vadd.f32 0.0, %v370
    %372 = vdwg.mxu0
    %373 = vmatpush.msra.mxu0 0.0
    %374 = vmatpush.msra.mxu0 0.0
    %375 = vmatpush.msra.mxu0 0.0
    %376 = vmatpush.msra.mxu0 0.0
    %377 = vmatpush.msra.mxu0 0.0
    %378 = vmatpush.msra.mxu0 0.0
    %379 = vmatpush.msra.mxu0 0.0
    %380 = vmatpush.msra.mxu0 0.0
    %381 = vmatpush.msra.mxu0 0.0
    %382 = vmatpush.msra.mxu0 0.0
    %383 = vmatpush.msra.mxu0 0.0
    %384 = vmatpush.msra.mxu0 0.0
    %385 = vmatpush.msra.mxu0 %v336
    %386 = vmatpush.msra.mxu0 %v310
    %387 = vmatpush.msra.mxu0 %v308
    %388 = vmatpush.msra.mxu0 %v306
    %389 = vmatmul.f32.gmra.mxu0 %v315
    %v390 = vpop.f32.mrf.mxu0
    %v391 = vadd.f32 0.0, %v390
    %392 = vmatmul.f32.gmra.mxu0 %v318
    %v393 = vpop.f32.mrf.mxu0
    %v394 = vadd.f32 0.0, %v393
    %395 = vmatmul.f32.gmra.mxu0 %v321
    %v396 = vpop.f32.mrf.mxu0
    %v397 = vadd.f32 0.0, %v396
    %398 = vmatmul.f32.gmra.mxu0 %v324
    %v399 = vpop.f32.mrf.mxu0
    %v400 = vadd.f32 0.0, %v399
    %401 = vmatmul.f32.gmra.mxu0 %v327
    %v402 = vpop.f32.mrf.mxu0
    %v403 = vadd.f32 0.0, %v402
    %404 = vmatmul.f32.gmra.mxu0 %v330
    %v405 = vpop.f32.mrf.mxu0
    %v406 = vadd.f32 0.0, %v405
    %407 = vdwg.mxu0
    %v409 = vsel %vm313, %v219, 0
    %v412 = vsel %vm313, %v222, 0
    %v415 = vsel %vm313, %v225, 0
    %v418 = vsel %vm313, %v228, 0
    %v421 = vsel %vm313, %v231, 0
    %v424 = vsel %vm313, %v234, 0
    %v427 = vsel %vm163, %v242, 0
    %v430 = vsel %vm163, %v243, 0
    %432 = vmatpush.msra.mxu0 0.0
    %433 = vmatpush.msra.mxu0 0.0
    %434 = vmatpush.msra.mxu0 0.0
    %435 = vmatpush.msra.mxu0 0.0
    %436 = vmatpush.msra.mxu0 0.0
    %437 = vmatpush.msra.mxu0 0.0
    %438 = vmatpush.msra.mxu0 0.0
    %439 = vmatpush.msra.mxu0 0.0
    %440 = vmatpush.msra.mxu0 0.0
    %441 = vmatpush.msra.mxu0 0.0
    %442 = vmatpush.msra.mxu0 0.0
    %443 = vmatpush.msra.mxu0 0.0
    %444 = vmatpush.msra.mxu0 %v427
    %445 = vmatpush.msra.mxu0 %v240
    %446 = vmatpush.msra.mxu0 %v238
    %447 = vmatpush.msra.mxu0 %v236
    %448 = vmatmul.f32.gmra.mxu0 %v409
    %v449 = vpop.f32.mrf.mxu0
    %v450 = vadd.f32 %v356, %v449
    %451 = vmatmul.f32.gmra.mxu0 %v412
    %v452 = vpop.f32.mrf.mxu0
    %v453 = vadd.f32 %v359, %v452
    %454 = vmatmul.f32.gmra.mxu0 %v415
    %v455 = vpop.f32.mrf.mxu0
    %v456 = vadd.f32 %v362, %v455
    %457 = vmatmul.f32.gmra.mxu0 %v418
    %v458 = vpop.f32.mrf.mxu0
    %v459 = vadd.f32 %v365, %v458
    %460 = vmatmul.f32.gmra.mxu0 %v421
    %v461 = vpop.f32.mrf.mxu0
    %v462 = vadd.f32 %v368, %v461
    %463 = vmatmul.f32.gmra.mxu0 %v424
    %v464 = vpop.f32.mrf.mxu0
    %v465 = vadd.f32 %v371, %v464
    %466 = vdwg.mxu0
    %467 = vmatpush.msra.mxu0 0.0
    %468 = vmatpush.msra.mxu0 0.0
    %469 = vmatpush.msra.mxu0 0.0
    %470 = vmatpush.msra.mxu0 0.0
    %471 = vmatpush.msra.mxu0 0.0
    %472 = vmatpush.msra.mxu0 0.0
    %473 = vmatpush.msra.mxu0 0.0
    %474 = vmatpush.msra.mxu0 0.0
    %475 = vmatpush.msra.mxu0 0.0
    %476 = vmatpush.msra.mxu0 0.0
    %477 = vmatpush.msra.mxu0 0.0
    %478 = vmatpush.msra.mxu0 0.0
    %479 = vmatpush.msra.mxu0 %v430
    %480 = vmatpush.msra.mxu0 %v241
    %481 = vmatpush.msra.mxu0 %v239
    %482 = vmatpush.msra.mxu0 %v237
    %483 = vmatmul.f32.gmra.mxu0 %v409
    %v484 = vpop.f32.mrf.mxu0
    %v485 = vadd.f32 %v391, %v484
    %486 = vmatmul.f32.gmra.mxu0 %v412
    %v487 = vpop.f32.mrf.mxu0
    %v488 = vadd.f32 %v394, %v487
    %489 = vmatmul.f32.gmra.mxu0 %v415
    %v490 = vpop.f32.mrf.mxu0
    %v491 = vadd.f32 %v397, %v490
    %492 = vmatmul.f32.gmra.mxu0 %v418
    %v493 = vpop.f32.mrf.mxu0
    %v494 = vadd.f32 %v400, %v493
    %495 = vmatmul.f32.gmra.mxu0 %v421
    %v496 = vpop.f32.mrf.mxu0
    %v497 = vadd.f32 %v403, %v496
    %498 = vmatmul.f32.gmra.mxu0 %v424
    %v499 = vpop.f32.mrf.mxu0
    %v500 = vadd.f32 %v406, %v499
    %501 = vdwg.mxu0
    %s502 = scalar_lea.vmem [#allocation2], 96
    %v503 = vld [vmem:[%s502] sm:$0xff]
    %v504 = vld [vmem:[%s502 + $0x8] sm:$0xff]
    %v505 = vld [vmem:[%s502 + $0x10] sm:$0xff]
    %v506 = vld [vmem:[%s502 + $0x18] sm:$0xff]
    %v507 = vld [vmem:[%s502 + $0x20] sm:$0xff]
    %v508 = vld [vmem:[%s502 + $0x28] sm:$0xff]
    %v510 = vsel %vm182, %v503, 0
    %v513 = vsel %vm182, %v504, 0
    %v516 = vsel %vm182, %v505, 0
    %v519 = vsel %vm182, %v506, 0
    %v522 = vsel %vm182, %v507, 0
    %v525 = vsel %vm182, %v508, 0
    %527 = vmatpush.msra.mxu0 0.0
    %528 = vmatpush.msra.mxu0 0.0
    %529 = vmatpush.msra.mxu0 0.0
    %530 = vmatpush.msra.mxu0 0.0
    %531 = vmatpush.msra.mxu0 0.0
    %532 = vmatpush.msra.mxu0 0.0
    %533 = vmatpush.msra.mxu0 0.0
    %534 = vmatpush.msra.mxu0 0.0
    %535 = vmatpush.msra.mxu0 0.0
    %536 = vmatpush.msra.mxu0 %v170
    %537 = vmatpush.msra.mxu0 %v168
    %538 = vmatpush.msra.mxu0 %v166
    %539 = vmatpush.msra.mxu0 %v175
    %540 = vmatpush.msra.mxu0 %v152
    %541 = vmatpush.msra.mxu0 %v151
    %542 = vmatpush.msra.mxu0 %v150
    %543 = vmatmul.f32.gmra.mxu0 %v510
    %v544 = vpop.f32.mrf.mxu0
    %v545 = vadd.f32 0.0, %v544
    %546 = vmatmul.f32.gmra.mxu0 %v513
    %v547 = vpop.f32.mrf.mxu0
    %v548 = vadd.f32 0.0, %v547
    %549 = vmatmul.f32.gmra.mxu0 %v516
    %v550 = vpop.f32.mrf.mxu0
    %v551 = vadd.f32 0.0, %v550
    %552 = vmatmul.f32.gmra.mxu0 %v519
    %v553 = vpop.f32.mrf.mxu0
    %v554 = vadd.f32 0.0, %v553
    %555 = vmatmul.f32.gmra.mxu0 %v522
    %v556 = vpop.f32.mrf.mxu0
    %v557 = vadd.f32 0.0, %v556
    %558 = vmatmul.f32.gmra.mxu0 %v525
    %v559 = vpop.f32.mrf.mxu0
    %v560 = vadd.f32 0.0, %v559
    %561 = vdwg.mxu0
    %s562 = scalar_lea.vmem %s1, 128
    %v563 = vld [vmem:[%s562] sm:$0xff]
    %v564 = vld [vmem:[%s562 + $0x8] sm:$0xff]
    %v565 = vld [vmem:[%s562 + $0x10] sm:$0xff]
    %v566 = vld [vmem:[%s562 + $0x18] sm:$0xff]
    %v567 = vld [vmem:[%s562 + $0x20] sm:$0xff]
    %v568 = vld [vmem:[%s562 + $0x28] sm:$0xff]
    %v569 = vld [vmem:[%s562 + $0x30] sm:$0xf]
    %v570 = vld [vmem:[%s562 + $0x38] sm:$0xf]
    %v572 = vsel %vm313, %v545, 0
    %v575 = vsel %vm313, %v548, 0
    %v578 = vsel %vm313, %v551, 0
    %v581 = vsel %vm313, %v554, 0
    %v584 = vsel %vm313, %v557, 0
    %v587 = vsel %vm313, %v560, 0
    %v590 = vsel %vm163, %v569, 0
    %v593 = vsel %vm163, %v570, 0
    %595 = vmatpush.msra.mxu0 0.0
    %596 = vmatpush.msra.mxu0 0.0
    %597 = vmatpush.msra.mxu0 0.0
    %598 = vmatpush.msra.mxu0 0.0
    %599 = vmatpush.msra.mxu0 0.0
    %600 = vmatpush.msra.mxu0 0.0
    %601 = vmatpush.msra.mxu0 0.0
    %602 = vmatpush.msra.mxu0 0.0
    %603 = vmatpush.msra.mxu0 0.0
    %604 = vmatpush.msra.mxu0 0.0
    %605 = vmatpush.msra.mxu0 0.0
    %606 = vmatpush.msra.mxu0 0.0
    %607 = vmatpush.msra.mxu0 %v590
    %608 = vmatpush.msra.mxu0 %v567
    %609 = vmatpush.msra.mxu0 %v565
    %610 = vmatpush.msra.mxu0 %v563
    %611 = vmatmul.f32.gmra.mxu0 %v572
    %v612 = vpop.f32.mrf.mxu0
    %v613 = vadd.f32 0.0, %v612
    %614 = vmatmul.f32.gmra.mxu0 %v575
    %v615 = vpop.f32.mrf.mxu0
    %v616 = vadd.f32 0.0, %v615
    %617 = vmatmul.f32.gmra.mxu0 %v578
    %v618 = vpop.f32.mrf.mxu0
    %v619 = vadd.f32 0.0, %v618
    %620 = vmatmul.f32.gmra.mxu0 %v581
    %v621 = vpop.f32.mrf.mxu0
    %v622 = vadd.f32 0.0, %v621
    %623 = vmatmul.f32.gmra.mxu0 %v584
    %v624 = vpop.f32.mrf.mxu0
    %v625 = vadd.f32 0.0, %v624
    %626 = vmatmul.f32.gmra.mxu0 %v587
    %v627 = vpop.f32.mrf.mxu0
    %v628 = vadd.f32 0.0, %v627
    %629 = vdwg.mxu0
    %630 = vmatpush.msra.mxu0 0.0
    %631 = vmatpush.msra.mxu0 0.0
    %632 = vmatpush.msra.mxu0 0.0
    %633 = vmatpush.msra.mxu0 0.0
    %634 = vmatpush.msra.mxu0 0.0
    %635 = vmatpush.msra.mxu0 0.0
    %636 = vmatpush.msra.mxu0 0.0
    %637 = vmatpush.msra.mxu0 0.0
    %638 = vmatpush.msra.mxu0 0.0
    %639 = vmatpush.msra.mxu0 0.0
    %640 = vmatpush.msra.mxu0 0.0
    %641 = vmatpush.msra.mxu0 0.0
    %642 = vmatpush.msra.mxu0 %v593
    %643 = vmatpush.msra.mxu0 %v568
    %644 = vmatpush.msra.mxu0 %v566
    %645 = vmatpush.msra.mxu0 %v564
    %646 = vmatmul.f32.gmra.mxu0 %v572
    %v647 = vpop.f32.mrf.mxu0
    %v648 = vadd.f32 0.0, %v647
    %649 = vmatmul.f32.gmra.mxu0 %v575
    %v650 = vpop.f32.mrf.mxu0
    %v651 = vadd.f32 0.0, %v650
    %652 = vmatmul.f32.gmra.mxu0 %v578
    %v653 = vpop.f32.mrf.mxu0
    %v654 = vadd.f32 0.0, %v653
    %655 = vmatmul.f32.gmra.mxu0 %v581
    %v656 = vpop.f32.mrf.mxu0
    %v657 = vadd.f32 0.0, %v656
    %658 = vmatmul.f32.gmra.mxu0 %v584
    %v659 = vpop.f32.mrf.mxu0
    %v660 = vadd.f32 0.0, %v659
    %661 = vmatmul.f32.gmra.mxu0 %v587
    %v662 = vpop.f32.mrf.mxu0
    %v663 = vadd.f32 0.0, %v662
    %664 = vdwg.mxu0
    %v665 = vadd.f32 %v450, %v613
    %v666 = vadd.f32 %v485, %v648
    %v667 = vadd.f32 %v453, %v616
    %v668 = vadd.f32 %v488, %v651
    %v669 = vadd.f32 %v456, %v619
    %v670 = vadd.f32 %v491, %v654
    %v671 = vadd.f32 %v459, %v622
    %v672 = vadd.f32 %v494, %v657
    %v673 = vadd.f32 %v462, %v625
    %v674 = vadd.f32 %v497, %v660
    %v675 = vadd.f32 %v465, %v628
    %v676 = vadd.f32 %v500, %v663
    %s677 = scalar_lea.vmem [#allocation2], 144
    %v678 = vld [vmem:[%s677] sm:$0xff]
    %v679 = vld [vmem:[%s677 + $0x8] sm:$0xff]
    %v680 = vld [vmem:[%s677 + $0x10] sm:$0xff]
    %v681 = vld [vmem:[%s677 + $0x18] sm:$0xff]
    %v682 = vld [vmem:[%s677 + $0x20] sm:$0xff]
    %v683 = vld [vmem:[%s677 + $0x28] sm:$0xff]
    %v685 = vsel %vm182, %v678, 0
    %v688 = vsel %vm182, %v679, 0
    %v691 = vsel %vm182, %v680, 0
    %v694 = vsel %vm182, %v681, 0
    %v697 = vsel %vm182, %v682, 0
    %v700 = vsel %vm182, %v683, 0
    %702 = vmatpush.msra.mxu0 0.0
    %703 = vmatpush.msra.mxu0 0.0
    %704 = vmatpush.msra.mxu0 0.0
    %705 = vmatpush.msra.mxu0 0.0
    %706 = vmatpush.msra.mxu0 0.0
    %707 = vmatpush.msra.mxu0 0.0
    %708 = vmatpush.msra.mxu0 0.0
    %709 = vmatpush.msra.mxu0 0.0
    %710 = vmatpush.msra.mxu0 0.0
    %711 = vmatpush.msra.mxu0 %v170
    %712 = vmatpush.msra.mxu0 %v168
    %713 = vmatpush.msra.mxu0 %v166
    %714 = vmatpush.msra.mxu0 %v175
    %715 = vmatpush.msra.mxu0 %v152
    %716 = vmatpush.msra.mxu0 %v151
    %717 = vmatpush.msra.mxu0 %v150
    %718 = vmatmul.f32.gmra.mxu0 %v685
    %v719 = vpop.f32.mrf.mxu0
    %v720 = vadd.f32 0.0, %v719
    %721 = vmatmul.f32.gmra.mxu0 %v688
    %v722 = vpop.f32.mrf.mxu0
    %v723 = vadd.f32 0.0, %v722
    %724 = vmatmul.f32.gmra.mxu0 %v691
    %v725 = vpop.f32.mrf.mxu0
    %v726 = vadd.f32 0.0, %v725
    %727 = vmatmul.f32.gmra.mxu0 %v694
    %v728 = vpop.f32.mrf.mxu0
    %v729 = vadd.f32 0.0, %v728
    %730 = vmatmul.f32.gmra.mxu0 %v697
    %v731 = vpop.f32.mrf.mxu0
    %v732 = vadd.f32 0.0, %v731
    %733 = vmatmul.f32.gmra.mxu0 %v700
    %v734 = vpop.f32.mrf.mxu0
    %v735 = vadd.f32 0.0, %v734
    %736 = vdwg.mxu0
    %s737 = scalar_lea.vmem %s1, 192
    %v738 = vld [vmem:[%s737] sm:$0xff]
    %v739 = vld [vmem:[%s737 + $0x8] sm:$0xff]
    %v740 = vld [vmem:[%s737 + $0x10] sm:$0xff]
    %v741 = vld [vmem:[%s737 + $0x18] sm:$0xff]
    %v742 = vld [vmem:[%s737 + $0x20] sm:$0xff]
    %v743 = vld [vmem:[%s737 + $0x28] sm:$0xff]
    %v744 = vld [vmem:[%s737 + $0x30] sm:$0xf]
    %v745 = vld [vmem:[%s737 + $0x38] sm:$0xf]
    %v747 = vsel %vm313, %v720, 0
    %v750 = vsel %vm313, %v723, 0
    %v753 = vsel %vm313, %v726, 0
    %v756 = vsel %vm313, %v729, 0
    %v759 = vsel %vm313, %v732, 0
    %v762 = vsel %vm313, %v735, 0
    %v765 = vsel %vm163, %v744, 0
    %v768 = vsel %vm163, %v745, 0
    %770 = vmatpush.msra.mxu0 0.0
    %771 = vmatpush.msra.mxu0 0.0
    %772 = vmatpush.msra.mxu0 0.0
    %773 = vmatpush.msra.mxu0 0.0
    %774 = vmatpush.msra.mxu0 0.0
    %775 = vmatpush.msra.mxu0 0.0
    %776 = vmatpush.msra.mxu0 0.0
    %777 = vmatpush.msra.mxu0 0.0
    %778 = vmatpush.msra.mxu0 0.0
    %779 = vmatpush.msra.mxu0 0.0
    %780 = vmatpush.msra.mxu0 0.0
    %781 = vmatpush.msra.mxu0 0.0
    %782 = vmatpush.msra.mxu0 %v765
    %783 = vmatpush.msra.mxu0 %v742
    %784 = vmatpush.msra.mxu0 %v740
    %785 = vmatpush.msra.mxu0 %v738
    %786 = vmatmul.f32.gmra.mxu0 %v747
    %v787 = vpop.f32.mrf.mxu0
    %v788 = vadd.f32 0.0, %v787
    %789 = vmatmul.f32.gmra.mxu0 %v750
    %v790 = vpop.f32.mrf.mxu0
    %v791 = vadd.f32 0.0, %v790
    %792 = vmatmul.f32.gmra.mxu0 %v753
    %v793 = vpop.f32.mrf.mxu0
    %v794 = vadd.f32 0.0, %v793
    %795 = vmatmul.f32.gmra.mxu0 %v756
    %v796 = vpop.f32.mrf.mxu0
    %v797 = vadd.f32 0.0, %v796
    %798 = vmatmul.f32.gmra.mxu0 %v759
    %v799 = vpop.f32.mrf.mxu0
    %v800 = vadd.f32 0.0, %v799
    %801 = vmatmul.f32.gmra.mxu0 %v762
    %v802 = vpop.f32.mrf.mxu0
    %v803 = vadd.f32 0.0, %v802
    %804 = vdwg.mxu0
    %805 = vmatpush.msra.mxu0 0.0
    %806 = vmatpush.msra.mxu0 0.0
    %807 = vmatpush.msra.mxu0 0.0
    %808 = vmatpush.msra.mxu0 0.0
    %809 = vmatpush.msra.mxu0 0.0
    %810 = vmatpush.msra.mxu0 0.0
    %811 = vmatpush.msra.mxu0 0.0
    %812 = vmatpush.msra.mxu0 0.0
    %813 = vmatpush.msra.mxu0 0.0
    %814 = vmatpush.msra.mxu0 0.0
    %815 = vmatpush.msra.mxu0 0.0
    %816 = vmatpush.msra.mxu0 0.0
    %817 = vmatpush.msra.mxu0 %v768
    %818 = vmatpush.msra.mxu0 %v743
    %819 = vmatpush.msra.mxu0 %v741
    %820 = vmatpush.msra.mxu0 %v739
    %821 = vmatmul.f32.gmra.mxu0 %v747
    %v822 = vpop.f32.mrf.mxu0
    %v823 = vadd.f32 0.0, %v822
    %824 = vmatmul.f32.gmra.mxu0 %v750
    %v825 = vpop.f32.mrf.mxu0
    %v826 = vadd.f32 0.0, %v825
    %827 = vmatmul.f32.gmra.mxu0 %v753
    %v828 = vpop.f32.mrf.mxu0
    %v829 = vadd.f32 0.0, %v828
    %830 = vmatmul.f32.gmra.mxu0 %v756
    %v831 = vpop.f32.mrf.mxu0
    %v832 = vadd.f32 0.0, %v831
    %833 = vmatmul.f32.gmra.mxu0 %v759
    %v834 = vpop.f32.mrf.mxu0
    %v835 = vadd.f32 0.0, %v834
    %836 = vmatmul.f32.gmra.mxu0 %v762
    %v837 = vpop.f32.mrf.mxu0
    %v838 = vadd.f32 0.0, %v837
    %839 = vdwg.mxu0
    %v840 = vadd.f32 %v665, %v788
    %v841 = vadd.f32 %v666, %v823
    %v842 = vadd.f32 %v667, %v791
    %v843 = vadd.f32 %v668, %v826
    %v844 = vadd.f32 %v669, %v794
    %v845 = vadd.f32 %v670, %v829
    %v846 = vadd.f32 %v671, %v797
    %v847 = vadd.f32 %v672, %v832
    %v848 = vadd.f32 %v673, %v800
    %v849 = vadd.f32 %v674, %v835
    %v850 = vadd.f32 %v675, %v803
    %v851 = vadd.f32 %v676, %v838
    %s852 = scalar_lea.vmem [#allocation2], 192
    %v853 = vld [vmem:[%s852] sm:$0xff]
    %v854 = vld [vmem:[%s852 + $0x8] sm:$0xff]
    %v855 = vld [vmem:[%s852 + $0x10] sm:$0xff]
    %v856 = vld [vmem:[%s852 + $0x18] sm:$0xff]
    %v857 = vld [vmem:[%s852 + $0x20] sm:$0xff]
    %v858 = vld [vmem:[%s852 + $0x28] sm:$0xff]
    %v860 = vsel %vm182, %v853, 0
    %v863 = vsel %vm182, %v854, 0
    %v866 = vsel %vm182, %v855, 0
    %v869 = vsel %vm182, %v856, 0
    %v872 = vsel %vm182, %v857, 0
    %v875 = vsel %vm182, %v858, 0
    %877 = vmatpush.msra.mxu0 0.0
    %878 = vmatpush.msra.mxu0 0.0
    %879 = vmatpush.msra.mxu0 0.0
    %880 = vmatpush.msra.mxu0 0.0
    %881 = vmatpush.msra.mxu0 0.0
    %882 = vmatpush.msra.mxu0 0.0
    %883 = vmatpush.msra.mxu0 0.0
    %884 = vmatpush.msra.mxu0 0.0
    %885 = vmatpush.msra.mxu0 0.0
    %886 = vmatpush.msra.mxu0 %v170
    %887 = vmatpush.msra.mxu0 %v168
    %888 = vmatpush.msra.mxu0 %v166
    %889 = vmatpush.msra.mxu0 %v175
    %890 = vmatpush.msra.mxu0 %v152
    %891 = vmatpush.msra.mxu0 %v151
    %892 = vmatpush.msra.mxu0 %v150
    %893 = vmatmul.f32.gmra.mxu0 %v860
    %v894 = vpop.f32.mrf.mxu0
    %v895 = vadd.f32 0.0, %v894
    %896 = vmatmul.f32.gmra.mxu0 %v863
    %v897 = vpop.f32.mrf.mxu0
    %v898 = vadd.f32 0.0, %v897
    %899 = vmatmul.f32.gmra.mxu0 %v866
    %v900 = vpop.f32.mrf.mxu0
    %v901 = vadd.f32 0.0, %v900
    %902 = vmatmul.f32.gmra.mxu0 %v869
    %v903 = vpop.f32.mrf.mxu0
    %v904 = vadd.f32 0.0, %v903
    %905 = vmatmul.f32.gmra.mxu0 %v872
    %v906 = vpop.f32.mrf.mxu0
    %v907 = vadd.f32 0.0, %v906
    %908 = vmatmul.f32.gmra.mxu0 %v875
    %v909 = vpop.f32.mrf.mxu0
    %v910 = vadd.f32 0.0, %v909
    %911 = vdwg.mxu0
    %s912 = scalar_lea.vmem %s1, 256
    %v913 = vld [vmem:[%s912] sm:$0xff]
    %v914 = vld [vmem:[%s912 + $0x8] sm:$0xff]
    %v915 = vld [vmem:[%s912 + $0x10] sm:$0xff]
    %v916 = vld [vmem:[%s912 + $0x18] sm:$0xff]
    %v917 = vld [vmem:[%s912 + $0x20] sm:$0xff]
    %v918 = vld [vmem:[%s912 + $0x28] sm:$0xff]
    %v919 = vld [vmem:[%s912 + $0x30] sm:$0xf]
    %v920 = vld [vmem:[%s912 + $0x38] sm:$0xf]
    %v922 = vsel %vm313, %v895, 0
    %v925 = vsel %vm313, %v898, 0
    %v928 = vsel %vm313, %v901, 0
    %v931 = vsel %vm313, %v904, 0
    %v934 = vsel %vm313, %v907, 0
    %v937 = vsel %vm313, %v910, 0
    %v940 = vsel %vm163, %v919, 0
    %v943 = vsel %vm163, %v920, 0
    %945 = vmatpush.msra.mxu0 0.0
    %946 = vmatpush.msra.mxu0 0.0
    %947 = vmatpush.msra.mxu0 0.0
    %948 = vmatpush.msra.mxu0 0.0
    %949 = vmatpush.msra.mxu0 0.0
    %950 = vmatpush.msra.mxu0 0.0
    %951 = vmatpush.msra.mxu0 0.0
    %952 = vmatpush.msra.mxu0 0.0
    %953 = vmatpush.msra.mxu0 0.0
    %954 = vmatpush.msra.mxu0 0.0
    %955 = vmatpush.msra.mxu0 0.0
    %956 = vmatpush.msra.mxu0 0.0
    %957 = vmatpush.msra.mxu0 %v940
    %958 = vmatpush.msra.mxu0 %v917
    %959 = vmatpush.msra.mxu0 %v915
    %960 = vmatpush.msra.mxu0 %v913
    %961 = vmatmul.f32.gmra.mxu0 %v922
    %v962 = vpop.f32.mrf.mxu0
    %v963 = vadd.f32 0.0, %v962
    %964 = vmatmul.f32.gmra.mxu0 %v925
    %v965 = vpop.f32.mrf.mxu0
    %v966 = vadd.f32 0.0, %v965
    %967 = vmatmul.f32.gmra.mxu0 %v928
    %v968 = vpop.f32.mrf.mxu0
    %v969 = vadd.f32 0.0, %v968
    %970 = vmatmul.f32.gmra.mxu0 %v931
    %v971 = vpop.f32.mrf.mxu0
    %v972 = vadd.f32 0.0, %v971
    %973 = vmatmul.f32.gmra.mxu0 %v934
    %v974 = vpop.f32.mrf.mxu0
    %v975 = vadd.f32 0.0, %v974
    %976 = vmatmul.f32.gmra.mxu0 %v937
    %v977 = vpop.f32.mrf.mxu0
    %v978 = vadd.f32 0.0, %v977
    %979 = vdwg.mxu0
    %980 = vmatpush.msra.mxu0 0.0
    %981 = vmatpush.msra.mxu0 0.0
    %982 = vmatpush.msra.mxu0 0.0
    %983 = vmatpush.msra.mxu0 0.0
    %984 = vmatpush.msra.mxu0 0.0
    %985 = vmatpush.msra.mxu0 0.0
    %986 = vmatpush.msra.mxu0 0.0
    %987 = vmatpush.msra.mxu0 0.0
    %988 = vmatpush.msra.mxu0 0.0
    %989 = vmatpush.msra.mxu0 0.0
    %990 = vmatpush.msra.mxu0 0.0
    %991 = vmatpush.msra.mxu0 0.0
    %992 = vmatpush.msra.mxu0 %v943
    %993 = vmatpush.msra.mxu0 %v918
    %994 = vmatpush.msra.mxu0 %v916
    %995 = vmatpush.msra.mxu0 %v914
    %996 = vmatmul.f32.gmra.mxu0 %v922
    %v997 = vpop.f32.mrf.mxu0
    %v998 = vadd.f32 0.0, %v997
    %999 = vmatmul.f32.gmra.mxu0 %v925
    %v1000 = vpop.f32.mrf.mxu0
    %v1001 = vadd.f32 0.0, %v1000
    %1002 = vmatmul.f32.gmra.mxu0 %v928
    %v1003 = vpop.f32.mrf.mxu0
    %v1004 = vadd.f32 0.0, %v1003
    %1005 = vmatmul.f32.gmra.mxu0 %v931
    %v1006 = vpop.f32.mrf.mxu0
    %v1007 = vadd.f32 0.0, %v1006
    %1008 = vmatmul.f32.gmra.mxu0 %v934
    %v1009 = vpop.f32.mrf.mxu0
    %v1010 = vadd.f32 0.0, %v1009
    %1011 = vmatmul.f32.gmra.mxu0 %v937
    %v1012 = vpop.f32.mrf.mxu0
    %v1013 = vadd.f32 0.0, %v1012
    %1014 = vdwg.mxu0
    %v1015 = vadd.f32 %v840, %v963
    %v1016 = vadd.f32 %v841, %v998
    %v1017 = vadd.f32 %v842, %v966
    %v1018 = vadd.f32 %v843, %v1001
    %v1019 = vadd.f32 %v844, %v969
    %v1020 = vadd.f32 %v845, %v1004
    %v1021 = vadd.f32 %v846, %v972
    %v1022 = vadd.f32 %v847, %v1007
    %v1023 = vadd.f32 %v848, %v975
    %v1024 = vadd.f32 %v849, %v1010
    %v1025 = vadd.f32 %v850, %v978
    %v1026 = vadd.f32 %v851, %v1013
    %v1027 = vld [vmem:[%s3] ss:$4 sm:$0x3]
    %v1029 = vperm.slane %v1027, 0
    %v1030 = vperm.slane %v1027, 1
    %v1033 = vadd.f32 %v1015, %v1029
    %v1034 = vadd.f32 %v1016, %v1030
    %v1035 = vadd.f32 %v1017, %v1029
    %v1036 = vadd.f32 %v1018, %v1030
    %v1037 = vadd.f32 %v1019, %v1029
    %v1038 = vadd.f32 %v1020, %v1030
    %v1039 = vadd.f32 %v1021, %v1029
    %v1040 = vadd.f32 %v1022, %v1030
    %v1041 = vadd.f32 %v1023, %v1029
    %v1042 = vadd.f32 %v1024, %v1030
    %v1043 = vadd.f32 %v1025, %v1029
    %v1044 = vadd.f32 %v1026, %v1030
    %s1045 = scalar_lea.vmem %s3, 1
    %v1046 = vld [vmem:[%s1045] ss:$4 sm:$0x3]
    %s1047 = scalar_lea.vmem %s3, 2
    %v1048 = vld [vmem:[%s1047] ss:$4 sm:$0x3]
    %v1049 = vadd.f32 %v1033, %v1039
    %v1050 = vadd.f32 %v1034, %v1040
    %v1051 = vadd.f32 %v1035, %v1041
    %v1052 = vadd.f32 %v1036, %v1042
    %v1053 = vadd.f32 %v1037, %v1043
    %v1054 = vadd.f32 %v1038, %v1044
    %v1055 = vmul.f32 %v1049, 0.5
    %v1056 = vmul.f32 %v1050, 0.5
    %v1057 = vmul.f32 %v1051, 0.5
    %v1058 = vmul.f32 %v1052, 0.5
    %v1059 = vmul.f32 %v1053, 0.5
    %v1060 = vmul.f32 %v1054, 0.5
    %v1061 = vsub.f32 %v1033, %v1055
    %v1062 = vsub.f32 %v1034, %v1056
    %v1063 = vsub.f32 %v1035, %v1057
    %v1064 = vsub.f32 %v1036, %v1058
    %v1065 = vsub.f32 %v1037, %v1059
    %v1066 = vsub.f32 %v1038, %v1060
    %v1067 = vmul.f32 %v1061, %v1061
    %v1068 = vmul.f32 %v1062, %v1062
    %v1069 = vmul.f32 %v1063, %v1063
    %v1070 = vmul.f32 %v1064, %v1064
    %v1071 = vmul.f32 %v1065, %v1065
    %v1072 = vmul.f32 %v1066, %v1066
    %v1073 = vsub.f32 %v1039, %v1055
    %v1074 = vsub.f32 %v1040, %v1056
    %v1075 = vsub.f32 %v1041, %v1057
    %v1076 = vsub.f32 %v1042, %v1058
    %v1077 = vsub.f32 %v1043, %v1059
    %v1078 = vsub.f32 %v1044, %v1060
    %v1079 = vmul.f32 %v1073, %v1073
    %v1080 = vmul.f32 %v1074, %v1074
    %v1081 = vmul.f32 %v1075, %v1075
    %v1082 = vmul.f32 %v1076, %v1076
    %v1083 = vmul.f32 %v1077, %v1077
    %v1084 = vmul.f32 %v1078, %v1078
    %v1085 = vadd.f32 %v1067, %v1079
    %v1086 = vadd.f32 %v1068, %v1080
    %v1087 = vadd.f32 %v1069, %v1081
    %v1088 = vadd.f32 %v1070, %v1082
    %v1089 = vadd.f32 %v1071, %v1083
    %v1090 = vadd.f32 %v1072, %v1084
    %v1091 = vmul.f32 %v1085, 0.5
    %v1092 = vmul.f32 %v1086, 0.5
    %v1093 = vmul.f32 %v1087, 0.5
    %v1094 = vmul.f32 %v1088, 0.5
    %v1095 = vmul.f32 %v1089, 0.5
    %v1096 = vmul.f32 %v1090, 0.5
    %v1097 = vadd.f32 %v1091, 1e-05
    %v1098 = vadd.f32 %v1092, 1e-05
    %v1099 = vadd.f32 %v1093, 1e-05
    %v1100 = vadd.f32 %v1094, 1e-05
    %v1101 = vadd.f32 %v1095, 1e-05
    %v1102 = vadd.f32 %v1096, 1e-05
    %v1103 = vrsqrt.pop %v1097
    %v1104 = vmul.f32 %v1103, %v1097
    %v1105 = vmul.f32 %v1104, %v1103
    %v1106 = vmul.f32 0.5, %v1105
    %v1107 = vsub.f32 1.5, %v1106
    %v1108 = vmul.f32 %v1103, %v1107
    %vm1109 = vweird.f32 %v1097
    %vm1110 = vweird.f32 %v1103
    %vm1111 = vmor %vm1109, %vm1110
    %v1112 = vsel %vm1111, %v1103, %v1108
    %v1113 = vrsqrt.pop %v1098
    %v1114 = vmul.f32 %v1113, %v1098
    %v1115 = vmul.f32 %v1114, %v1113
    %v1116 = vmul.f32 0.5, %v1115
    %v1117 = vsub.f32 1.5, %v1116
    %v1118 = vmul.f32 %v1113, %v1117
    %vm1119 = vweird.f32 %v1098
    %vm1120 = vweird.f32 %v1113
    %vm1121 = vmor %vm1119, %vm1120
    %v1122 = vsel %vm1121, %v1113, %v1118
    %v1123 = vrsqrt.pop %v1099
    %v1124 = vmul.f32 %v1123, %v1099
    %v1125 = vmul.f32 %v1124, %v1123
    %v1126 = vmul.f32 0.5, %v1125
    %v1127 = vsub.f32 1.5, %v1126
    %v1128 = vmul.f32 %v1123, %v1127
    %vm1129 = vweird.f32 %v1099
    %vm1130 = vweird.f32 %v1123
    %vm1131 = vmor %vm1129, %vm1130
    %v1132 = vsel %vm1131, %v1123, %v1128
    %v1133 = vrsqrt.pop %v1100
    %v1134 = vmul.f32 %v1133, %v1100
    %v1135 = vmul.f32 %v1134, %v1133
    %v1136 = vmul.f32 0.5, %v1135
    %v1137 = vsub.f32 1.5, %v1136
    %v1138 = vmul.f32 %v1133, %v1137
    %vm1139 = vweird.f32 %v1100
    %vm1140 = vweird.f32 %v1133
    %vm1141 = vmor %vm1139, %vm1140
    %v1142 = vsel %vm1141, %v1133, %v1138
    %v1143 = vrsqrt.pop %v1101
    %v1144 = vmul.f32 %v1143, %v1101
    %v1145 = vmul.f32 %v1144, %v1143
    %v1146 = vmul.f32 0.5, %v1145
    %v1147 = vsub.f32 1.5, %v1146
    %v1148 = vmul.f32 %v1143, %v1147
    %vm1149 = vweird.f32 %v1101
    %vm1150 = vweird.f32 %v1143
    %vm1151 = vmor %vm1149, %vm1150
    %v1152 = vsel %vm1151, %v1143, %v1148
    %v1153 = vrsqrt.pop %v1102
    %v1154 = vmul.f32 %v1153, %v1102
    %v1155 = vmul.f32 %v1154, %v1153
    %v1156 = vmul.f32 0.5, %v1155
    %v1157 = vsub.f32 1.5, %v1156
    %v1158 = vmul.f32 %v1153, %v1157
    %vm1159 = vweird.f32 %v1102
    %vm1160 = vweird.f32 %v1153
    %vm1161 = vmor %vm1159, %vm1160
    %v1162 = vsel %vm1161, %v1153, %v1158
    %v1163 = vmul.f32 %v1061, %v1112
    %v1164 = vmul.f32 %v1062, %v1122
    %v1165 = vmul.f32 %v1063, %v1132
    %v1166 = vmul.f32 %v1064, %v1142
    %v1167 = vmul.f32 %v1065, %v1152
    %v1168 = vmul.f32 %v1066, %v1162
    %v1170 = vperm.slane %v1046, 0
    %v1171 = vperm.slane %v1046, 1
    %v1174 = vmul.f32 %v1170, %v1163
    %v1175 = vmul.f32 %v1171, %v1164
    %v1176 = vmul.f32 %v1170, %v1165
    %v1177 = vmul.f32 %v1171, %v1166
    %v1178 = vmul.f32 %v1170, %v1167
    %v1179 = vmul.f32 %v1171, %v1168
    %v1181 = vperm.slane %v1048, 0
    %v1182 = vperm.slane %v1048, 1
    %v1185 = vadd.f32 %v1174, %v1181
    %v1186 = vadd.f32 %v1175, %v1182
    %v1187 = vadd.f32 %v1176, %v1181
    %v1188 = vadd.f32 %v1177, %v1182
    %v1189 = vadd.f32 %v1178, %v1181
    %v1190 = vadd.f32 %v1179, %v1182
    %v1191 = vsub.f32 0.0, %v1185
    %v1192 = vsub.f32 0.0, %v1186
    %v1193 = vsub.f32 0.0, %v1187
    %v1194 = vsub.f32 0.0, %v1188
    %v1195 = vsub.f32 0.0, %v1189
    %v1196 = vsub.f32 0.0, %v1190
    %v1197 = vmul.f32 %v1191, 1.442695
    %v1198 = vpow.pop %v1197
    %v1199 = vmul.f32 %v1192, 1.442695
    %v1200 = vpow.pop %v1199
    %v1201 = vmul.f32 %v1193, 1.442695
    %v1202 = vpow.pop %v1201
    %v1203 = vmul.f32 %v1194, 1.442695
    %v1204 = vpow.pop %v1203
    %v1205 = vmul.f32 %v1195, 1.442695
    %v1206 = vpow.pop %v1205
    %v1207 = vmul.f32 %v1196, 1.442695
    %v1208 = vpow.pop %v1207
    %v1209 = vadd.f32 %v1198, 1.0
    %v1210 = vadd.f32 %v1200, 1.0
    %v1211 = vadd.f32 %v1202, 1.0
    %v1212 = vadd.f32 %v1204, 1.0
    %v1213 = vadd.f32 %v1206, 1.0
    %v1214 = vadd.f32 %v1208, 1.0
    %v1215 = vrcp.pop %v1209
    %v1216 = vmul.f32 %v1209, %v1215
    %v1217 = vsub.f32 1.0, %v1216
    %v1218 = vmul.f32 %v1215, %v1217
    %v1219 = vadd.f32 %v1215, %v1218
    %vm1220 = vweird.f32 %v1209
    %vm1221 = vweird.f32 %v1215
    %vm1222 = vmor %vm1220, %vm1221
    %v1223 = vsel %vm1222, %v1215, %v1219
    %v1224 = vand.u32 2147483647, %v1209
    %vm1225 = vcmp.eq.f32.partialorder %v1224, 8.507059e+37
    %v1226 = vand.u32 %v1209, 2147483648
    %v1227 = vor.u32 1.1754944e-38, %v1226
    %v1228 = vsel %vm1225, %v1227, %v1223
    %v1229 = vmul.f32 1.0, %v1228
    %v1230 = vrcp.pop %v1210
    %v1231 = vmul.f32 %v1210, %v1230
    %v1232 = vsub.f32 1.0, %v1231
    %v1233 = vmul.f32 %v1230, %v1232
    %v1234 = vadd.f32 %v1230, %v1233
    %vm1235 = vweird.f32 %v1210
    %vm1236 = vweird.f32 %v1230
    %vm1237 = vmor %vm1235, %vm1236
    %v1238 = vsel %vm1237, %v1230, %v1234
    %v1239 = vand.u32 2147483647, %v1210
    %vm1240 = vcmp.eq.f32.partialorder %v1239, 8.507059e+37
    %v1241 = vand.u32 %v1210, 2147483648
    %v1242 = vor.u32 1.1754944e-38, %v1241
    %v1243 = vsel %vm1240, %v1242, %v1238
    %v1244 = vmul.f32 1.0, %v1243
    %v1245 = vrcp.pop %v1211
    %v1246 = vmul.f32 %v1211, %v1245
    %v1247 = vsub.f32 1.0, %v1246
    %v1248 = vmul.f32 %v1245, %v1247
    %v1249 = vadd.f32 %v1245, %v1248
    %vm1250 = vweird.f32 %v1211
    %vm1251 = vweird.f32 %v1245
    %vm1252 = vmor %vm1250, %vm1251
    %v1253 = vsel %vm1252, %v1245, %v1249
    %v1254 = vand.u32 2147483647, %v1211
    %vm1255 = vcmp.eq.f32.partialorder %v1254, 8.507059e+37
    %v1256 = vand.u32 %v1211, 2147483648
    %v1257 = vor.u32 1.1754944e-38, %v1256
    %v1258 = vsel %vm1255, %v1257, %v1253
    %v1259 = vmul.f32 1.0, %v1258
    %v1260 = vrcp.pop %v1212
    %v1261 = vmul.f32 %v1212, %v1260
    %v1262 = vsub.f32 1.0, %v1261
    %v1263 = vmul.f32 %v1260, %v1262
    %v1264 = vadd.f32 %v1260, %v1263
    %vm1265 = vweird.f32 %v1212
    %vm1266 = vweird.f32 %v1260
    %vm1267 = vmor %vm1265, %vm1266
    %v1268 = vsel %vm1267, %v1260, %v1264
    %v1269 = vand.u32 2147483647, %v1212
    %vm1270 = vcmp.eq.f32.partialorder %v1269, 8.507059e+37
    %v1271 = vand.u32 %v1212, 2147483648
    %v1272 = vor.u32 1.1754944e-38, %v1271
    %v1273 = vsel %vm1270, %v1272, %v1268
    %v1274 = vmul.f32 1.0, %v1273
    %v1275 = vrcp.pop %v1213
    %v1276 = vmul.f32 %v1213, %v1275
    %v1277 = vsub.f32 1.0, %v1276
    %v1278 = vmul.f32 %v1275, %v1277
    %v1279 = vadd.f32 %v1275, %v1278
    %vm1280 = vweird.f32 %v1213
    %vm1281 = vweird.f32 %v1275
    %vm1282 = vmor %vm1280, %vm1281
    %v1283 = vsel %vm1282, %v1275, %v1279
    %v1284 = vand.u32 2147483647, %v1213
    %vm1285 = vcmp.eq.f32.partialorder %v1284, 8.507059e+37
    %v1286 = vand.u32 %v1213, 2147483648
    %v1287 = vor.u32 1.1754944e-38, %v1286
    %v1288 = vsel %vm1285, %v1287, %v1283
    %v1289 = vmul.f32 1.0, %v1288
    %v1290 = vrcp.pop %v1214
    %v1291 = vmul.f32 %v1214, %v1290
    %v1292 = vsub.f32 1.0, %v1291
    %v1293 = vmul.f32 %v1290, %v1292
    %v1294 = vadd.f32 %v1290, %v1293
    %vm1295 = vweird.f32 %v1214
    %vm1296 = vweird.f32 %v1290
    %vm1297 = vmor %vm1295, %vm1296
    %v1298 = vsel %vm1297, %v1290, %v1294
    %v1299 = vand.u32 2147483647, %v1214
    %vm1300 = vcmp.eq.f32.partialorder %v1299, 8.507059e+37
    %v1301 = vand.u32 %v1214, 2147483648
    %v1302 = vor.u32 1.1754944e-38, %v1301
    %v1303 = vsel %vm1300, %v1302, %v1298
    %v1304 = vmul.f32 1.0, %v1303
    %v1305 = vmul.f32 %v1073, %v1112
    %v1306 = vmul.f32 %v1074, %v1122
    %v1307 = vmul.f32 %v1075, %v1132
    %v1308 = vmul.f32 %v1076, %v1142
    %v1309 = vmul.f32 %v1077, %v1152
    %v1310 = vmul.f32 %v1078, %v1162
    %v1311 = vmul.f32 %v1170, %v1305
    %v1312 = vmul.f32 %v1171, %v1306
    %v1313 = vmul.f32 %v1170, %v1307
    %v1314 = vmul.f32 %v1171, %v1308
    %v1315 = vmul.f32 %v1170, %v1309
    %v1316 = vmul.f32 %v1171, %v1310
    %v1317 = vadd.f32 %v1311, %v1181
    %v1318 = vadd.f32 %v1312, %v1182
    %v1319 = vadd.f32 %v1313, %v1181
    %v1320 = vadd.f32 %v1314, %v1182
    %v1321 = vadd.f32 %v1315, %v1181
    %v1322 = vadd.f32 %v1316, %v1182
    %v1323 = vsub.f32 0.0, %v1317
    %v1324 = vsub.f32 0.0, %v1318
    %v1325 = vsub.f32 0.0, %v1319
    %v1326 = vsub.f32 0.0, %v1320
    %v1327 = vsub.f32 0.0, %v1321
    %v1328 = vsub.f32 0.0, %v1322
    %v1329 = vmul.f32 %v1323, 1.442695
    %v1330 = vpow.pop %v1329
    %v1331 = vmul.f32 %v1324, 1.442695
    %v1332 = vpow.pop %v1331
    %v1333 = vmul.f32 %v1325, 1.442695
    %v1334 = vpow.pop %v1333
    %v1335 = vmul.f32 %v1326, 1.442695
    %v1336 = vpow.pop %v1335
    %v1337 = vmul.f32 %v1327, 1.442695
    %v1338 = vpow.pop %v1337
    %v1339 = vmul.f32 %v1328, 1.442695
    %v1340 = vpow.pop %v1339
    %v1341 = vadd.f32 %v1330, 1.0
    %v1342 = vadd.f32 %v1332, 1.0
    %v1343 = vadd.f32 %v1334, 1.0
    %v1344 = vadd.f32 %v1336, 1.0
    %v1345 = vadd.f32 %v1338, 1.0
    %v1346 = vadd.f32 %v1340, 1.0
    %v1347 = vrcp.pop %v1341
    %v1348 = vmul.f32 %v1341, %v1347
    %v1349 = vsub.f32 1.0, %v1348
    %v1350 = vmul.f32 %v1347, %v1349
    %v1351 = vadd.f32 %v1347, %v1350
    %vm1352 = vweird.f32 %v1341
    %vm1353 = vweird.f32 %v1347
    %vm1354 = vmor %vm1352, %vm1353
    %v1355 = vsel %vm1354, %v1347, %v1351
    %v1356 = vand.u32 2147483647, %v1341
    %vm1357 = vcmp.eq.f32.partialorder %v1356, 8.507059e+37
    %v1358 = vand.u32 %v1341, 2147483648
    %v1359 = vor.u32 1.1754944e-38, %v1358
    %v1360 = vsel %vm1357, %v1359, %v1355
    %v1361 = vmul.f32 1.0, %v1360
    %v1362 = vrcp.pop %v1342
    %v1363 = vmul.f32 %v1342, %v1362
    %v1364 = vsub.f32 1.0, %v1363
    %v1365 = vmul.f32 %v1362, %v1364
    %v1366 = vadd.f32 %v1362, %v1365
    %vm1367 = vweird.f32 %v1342
    %vm1368 = vweird.f32 %v1362
    %vm1369 = vmor %vm1367, %vm1368
    %v1370 = vsel %vm1369, %v1362, %v1366
    %v1371 = vand.u32 2147483647, %v1342
    %vm1372 = vcmp.eq.f32.partialorder %v1371, 8.507059e+37
    %v1373 = vand.u32 %v1342, 2147483648
    %v1374 = vor.u32 1.1754944e-38, %v1373
    %v1375 = vsel %vm1372, %v1374, %v1370
    %v1376 = vmul.f32 1.0, %v1375
    %v1377 = vrcp.pop %v1343
    %v1378 = vmul.f32 %v1343, %v1377
    %v1379 = vsub.f32 1.0, %v1378
    %v1380 = vmul.f32 %v1377, %v1379
    %v1381 = vadd.f32 %v1377, %v1380
    %vm1382 = vweird.f32 %v1343
    %vm1383 = vweird.f32 %v1377
    %vm1384 = vmor %vm1382, %vm1383
    %v1385 = vsel %vm1384, %v1377, %v1381
    %v1386 = vand.u32 2147483647, %v1343
    %vm1387 = vcmp.eq.f32.partialorder %v1386, 8.507059e+37
    %v1388 = vand.u32 %v1343, 2147483648
    %v1389 = vor.u32 1.1754944e-38, %v1388
    %v1390 = vsel %vm1387, %v1389, %v1385
    %v1391 = vmul.f32 1.0, %v1390
    %v1392 = vrcp.pop %v1344
    %v1393 = vmul.f32 %v1344, %v1392
    %v1394 = vsub.f32 1.0, %v1393
    %v1395 = vmul.f32 %v1392, %v1394
    %v1396 = vadd.f32 %v1392, %v1395
    %vm1397 = vweird.f32 %v1344
    %vm1398 = vweird.f32 %v1392
    %vm1399 = vmor %vm1397, %vm1398
    %v1400 = vsel %vm1399, %v1392, %v1396
    %v1401 = vand.u32 2147483647, %v1344
    %vm1402 = vcmp.eq.f32.partialorder %v1401, 8.507059e+37
    %v1403 = vand.u32 %v1344, 2147483648
    %v1404 = vor.u32 1.1754944e-38, %v1403
    %v1405 = vsel %vm1402, %v1404, %v1400
    %v1406 = vmul.f32 1.0, %v1405
    %v1407 = vrcp.pop %v1345
    %v1408 = vmul.f32 %v1345, %v1407
    %v1409 = vsub.f32 1.0, %v1408
    %v1410 = vmul.f32 %v1407, %v1409
    %v1411 = vadd.f32 %v1407, %v1410
    %vm1412 = vweird.f32 %v1345
    %vm1413 = vweird.f32 %v1407
    %vm1414 = vmor %vm1412, %vm1413
    %v1415 = vsel %vm1414, %v1407, %v1411
    %v1416 = vand.u32 2147483647, %v1345
    %vm1417 = vcmp.eq.f32.partialorder %v1416, 8.507059e+37
    %v1418 = vand.u32 %v1345, 2147483648
    %v1419 = vor.u32 1.1754944e-38, %v1418
    %v1420 = vsel %vm1417, %v1419, %v1415
    %v1421 = vmul.f32 1.0, %v1420
    %v1422 = vrcp.pop %v1346
    %v1423 = vmul.f32 %v1346, %v1422
    %v1424 = vsub.f32 1.0, %v1423
    %v1425 = vmul.f32 %v1422, %v1424
    %v1426 = vadd.f32 %v1422, %v1425
    %vm1427 = vweird.f32 %v1346
    %vm1428 = vweird.f32 %v1422
    %vm1429 = vmor %vm1427, %vm1428
    %v1430 = vsel %vm1429, %v1422, %v1426
    %v1431 = vand.u32 2147483647, %v1346
    %vm1432 = vcmp.eq.f32.partialorder %v1431, 8.507059e+37
    %v1433 = vand.u32 %v1346, 2147483648
    %v1434 = vor.u32 1.1754944e-38, %v1433
    %v1435 = vsel %vm1432, %v1434, %v1430
    %v1436 = vmul.f32 1.0, %v1435
    %v1437 = vld [vmem:[%s4] sm:$0xff]
    %v1438 = vld [vmem:[%s4 + $0x8] sm:$0xff]
    %v1439 = vld [vmem:[%s4 + $0x10] sm:$0xff]
    %vm1440 = vcmask 392192
    %v1442 = vsel %vm1440, %v1437, 0
    %v1445 = vsel %vm1440, %v1438, 0
    %v1448 = vsel %vm1440, %v1439, 0
    %1450 = vmatpush.msra.mxu0 0.0
    %1451 = vmatpush.msra.mxu0 0.0
    %1452 = vmatpush.msra.mxu0 0.0
    %1453 = vmatpush.msra.mxu0 0.0
    %1454 = vmatpush.msra.mxu0 0.0
    %1455 = vmatpush.msra.mxu0 0.0
    %1456 = vmatpush.msra.mxu0 0.0
    %1457 = vmatpush.msra.mxu0 0.0
    %1458 = vmatpush.msra.mxu0 0.0
    %1459 = vmatpush.msra.mxu0 0.0
    %1460 = vmatpush.msra.mxu0 %v1421
    %1461 = vmatpush.msra.mxu0 %v1391
    %1462 = vmatpush.msra.mxu0 %v1361
    %1463 = vmatpush.msra.mxu0 %v1289
    %1464 = vmatpush.msra.mxu0 %v1259
    %1465 = vmatpush.msra.mxu0 %v1229
    %1466 = vmatmul.f32.gmra.mxu0 %v1442
    %v1467 = vpop.f32.mrf.mxu0
    %v1468 = vadd.f32 0.0, %v1467
    %1469 = vmatmul.f32.gmra.mxu0 %v1445
    %v1470 = vpop.f32.mrf.mxu0
    %v1471 = vadd.f32 0.0, %v1470
    %1472 = vmatmul.f32.gmra.mxu0 %v1448
    %v1473 = vpop.f32.mrf.mxu0
    %v1474 = vadd.f32 0.0, %v1473
    %1475 = vdwg.mxu0
    %1476 = vmatpush.msra.mxu0 0.0
    %1477 = vmatpush.msra.mxu0 0.0
    %1478 = vmatpush.msra.mxu0 0.0
    %1479 = vmatpush.msra.mxu0 0.0
    %1480 = vmatpush.msra.mxu0 0.0
    %1481 = vmatpush.msra.mxu0 0.0
    %1482 = vmatpush.msra.mxu0 0.0
    %1483 = vmatpush.msra.mxu0 0.0
    %1484 = vmatpush.msra.mxu0 0.0
    %1485 = vmatpush.msra.mxu0 0.0
    %1486 = vmatpush.msra.mxu0 %v1436
    %1487 = vmatpush.msra.mxu0 %v1406
    %1488 = vmatpush.msra.mxu0 %v1376
    %1489 = vmatpush.msra.mxu0 %v1304
    %1490 = vmatpush.msra.mxu0 %v1274
    %1491 = vmatpush.msra.mxu0 %v1244
    %1492 = vmatmul.f32.gmra.mxu0 %v1442
    %v1493 = vpop.f32.mrf.mxu0
    %v1494 = vadd.f32 0.0, %v1493
    %1495 = vmatmul.f32.gmra.mxu0 %v1445
    %v1496 = vpop.f32.mrf.mxu0
    %v1497 = vadd.f32 0.0, %v1496
    %1498 = vmatmul.f32.gmra.mxu0 %v1448
    %v1499 = vpop.f32.mrf.mxu0
    %v1500 = vadd.f32 0.0, %v1499
    %1501 = vdwg.mxu0
    %v1502 = vld [vmem:[#allocation5] sm:$0xff]
    %v1503 = vld [vmem:[#allocation5 + $0x8] sm:$0xff]
    %v1504 = vld [vmem:[#allocation5 + $0x10] sm:$0xff]
    %v1505 = vld [vmem:[#allocation5 + $0x18] sm:$0xff]
    %v1506 = vld [vmem:[#allocation5 + $0x20] sm:$0xff]
    %v1507 = vld [vmem:[#allocation5 + $0x28] sm:$0xff]
    %v1508 = vld [vmem:[#allocation5 + $0x30] sm:$0xff]
    %v1509 = vld [vmem:[#allocation5 + $0x38] sm:$0xff]
    %v1510 = vld [vmem:[#allocation5 + $0x40] sm:$0xff]
    %v1511 = vld [vmem:[#allocation5 + $0x48] sm:$0xff]
    %v1512 = vld [vmem:[#allocation5 + $0x50] sm:$0xff]
    %v1513 = vld [vmem:[#allocation5 + $0x58] sm:$0xff]
    %v1514 = vld [vmem:[#allocation5 + $0x60] sm:$0xff]
    %v1515 = vld [vmem:[#allocation5 + $0x68] sm:$0xff]
    %v1516 = vld [vmem:[#allocation5 + $0x70] sm:$0xff]
    %v1517 = vld [vmem:[#allocation5 + $0x78] sm:$0xff]
    %v1518 = vld [vmem:[#allocation5 + $0x80] sm:$0xff]
    %v1519 = vld [vmem:[#allocation5 + $0x88] sm:$0xff]
    %vm1520 = vcmask 130048
    %v1522 = vsel %vm1520, %v1494, 0
    %v1525 = vsel %vm1520, %v1497, 0
    %v1528 = vsel %vm1520, %v1500, 0
    %1530 = vmatpush.msra.mxu0 %v1517
    %1531 = vmatpush.msra.mxu0 %v1516
    %1532 = vmatpush.msra.mxu0 %v1515
    %1533 = vmatpush.msra.mxu0 %v1514
    %1534 = vmatpush.msra.mxu0 %v1513
    %1535 = vmatpush.msra.mxu0 %v1512
    %1536 = vmatpush.msra.mxu0 %v1511
    %1537 = vmatpush.msra.mxu0 %v1510
    %1538 = vmatpush.msra.mxu0 %v1509
    %1539 = vmatpush.msra.mxu0 %v1508
    %1540 = vmatpush.msra.mxu0 %v1507
    %1541 = vmatpush.msra.mxu0 %v1506
    %1542 = vmatpush.msra.mxu0 %v1505
    %1543 = vmatpush.msra.mxu0 %v1504
    %1544 = vmatpush.msra.mxu0 %v1503
    %1545 = vmatpush.msra.mxu0 %v1502
    %1546 = vmatmul.f32.gmra.mxu0 %v1468
    %v1547 = vpop.f32.mrf.mxu0
    %v1548 = vadd.f32 0.0, %v1547
    %1549 = vmatmul.f32.gmra.mxu0 %v1471
    %v1550 = vpop.f32.mrf.mxu0
    %v1551 = vadd.f32 0.0, %v1550
    %1552 = vmatmul.f32.gmra.mxu0 %v1474
    %v1553 = vpop.f32.mrf.mxu0
    %v1554 = vadd.f32 0.0, %v1553
    %1555 = vdwg.mxu0
    %1556 = vmatpush.msra.mxu0 0.0
    %1557 = vmatpush.msra.mxu0 0.0
    %1558 = vmatpush.msra.mxu0 0.0
    %1559 = vmatpush.msra.mxu0 0.0
    %1560 = vmatpush.msra.mxu0 0.0
    %1561 = vmatpush.msra.mxu0 0.0
    %1562 = vmatpush.msra.mxu0 0.0
    %1563 = vmatpush.msra.mxu0 0.0
    %1564 = vmatpush.msra.mxu0 0.0
    %1565 = vmatpush.msra.mxu0 0.0
    %1566 = vmatpush.msra.mxu0 0.0
    %1567 = vmatpush.msra.mxu0 0.0
    %1568 = vmatpush.msra.mxu0 0.0
    %1569 = vmatpush.msra.mxu0 0.0
    %1570 = vmatpush.msra.mxu0 %v1519
    %1571 = vmatpush.msra.mxu0 %v1518
    %1572 = vmatmul.f32.gmra.mxu0 %v1522
    %v1573 = vpop.f32.mrf.mxu0
    %v1574 = vadd.f32 %v1548, %v1573
    %1575 = vmatmul.f32.gmra.mxu0 %v1525
    %v1576 = vpop.f32.mrf.mxu0
    %v1577 = vadd.f32 %v1551, %v1576
    %1578 = vmatmul.f32.gmra.mxu0 %v1528
    %v1579 = vpop.f32.mrf.mxu0
    %v1580 = vadd.f32 %v1554, %v1579
    %1581 = vdwg.mxu0
    %v1582 = vld [vmem:[%s7] sm:$0xff]
    %v1583 = vld [vmem:[%s7 + $0x8] sm:$0xff]
    %vm1584 = vcmask 195584
    %v1586 = vsel %vm1584, %v1582, 0
    %v1589 = vsel %vm1584, %v1583, 0
    %1591 = vmatpush.msra.mxu0 0.0
    %1592 = vmatpush.msra.mxu0 0.0
    %1593 = vmatpush.msra.mxu0 0.0
    %1594 = vmatpush.msra.mxu0 0.0
    %1595 = vmatpush.msra.mxu0 0.0
    %1596 = vmatpush.msra.mxu0 0.0
    %1597 = vmatpush.msra.mxu0 0.0
    %1598 = vmatpush.msra.mxu0 0.0
    %1599 = vmatpush.msra.mxu0 0.0
    %1600 = vmatpush.msra.mxu0 0.0
    %1601 = vmatpush.msra.mxu0 0.0
    %1602 = vmatpush.msra.mxu0 0.0
    %1603 = vmatpush.msra.mxu0 0.0
    %1604 = vmatpush.msra.mxu0 %v1580
    %1605 = vmatpush.msra.mxu0 %v1577
    %1606 = vmatpush.msra.mxu0 %v1574
    %1607 = vmatmul.f32.gmra.mxu0 %v1586
    %v1608 = vpop.f32.mrf.mxu0
    %v1609 = vadd.f32 0.0, %v1608
    %1610 = vmatmul.f32.gmra.mxu0 %v1589
    %v1611 = vpop.f32.mrf.mxu0
    %v1612 = vadd.f32 0.0, %v1611
    %1613 = vdwg.mxu0
    %v1614 = vld [vmem:[#allocation7] sm:$0xff]
    %v1615 = vld [vmem:[#allocation7 + $0x8] sm:$0xff]
    %v1616 = vld [vmem:[#allocation7 + $0x10] sm:$0xff]
    %v1617 = vld [vmem:[#allocation7 + $0x18] sm:$0xff]
    %v1618 = vld [vmem:[#allocation7 + $0x20] sm:$0xff]
    %v1619 = vld [vmem:[#allocation7 + $0x28] sm:$0xff]
    %v1620 = vld [vmem:[#allocation7 + $0x30] sm:$0xff]
    %v1621 = vld [vmem:[#allocation7 + $0x38] sm:$0xff]
    %v1622 = vld [vmem:[#allocation7 + $0x40] sm:$0xff]
    %s1623 = scalar_lea.vmem %s7, 16
    %v1624 = vld [vmem:[%s1623] sm:$0xff]
    %v1625 = vld [vmem:[%s1623 + $0x8] sm:$0xff]
    %v1627 = vsel %vm1584, %v1624, 0
    %v1630 = vsel %vm1584, %v1625, 0
    %1632 = vmatpush.msra.mxu0 0.0
    %1633 = vmatpush.msra.mxu0 0.0
    %1634 = vmatpush.msra.mxu0 0.0
    %1635 = vmatpush.msra.mxu0 0.0
    %1636 = vmatpush.msra.mxu0 0.0
    %1637 = vmatpush.msra.mxu0 0.0
    %1638 = vmatpush.msra.mxu0 0.0
    %1639 = vmatpush.msra.mxu0 0.0
    %1640 = vmatpush.msra.mxu0 0.0
    %1641 = vmatpush.msra.mxu0 0.0
    %1642 = vmatpush.msra.mxu0 0.0
    %1643 = vmatpush.msra.mxu0 0.0
    %1644 = vmatpush.msra.mxu0 0.0
    %1645 = vmatpush.msra.mxu0 %v1580
    %1646 = vmatpush.msra.mxu0 %v1577
    %1647 = vmatpush.msra.mxu0 %v1574
    %1648 = vmatmul.f32.gmra.mxu0 %v1627
    %v1649 = vpop.f32.mrf.mxu0
    %v1650 = vadd.f32 0.0, %v1649
    %1651 = vmatmul.f32.gmra.mxu0 %v1630
    %v1652 = vpop.f32.mrf.mxu0
    %v1653 = vadd.f32 0.0, %v1652
    %1654 = vdwg.mxu0
    %s1655 = scalar_lea.vmem [#allocation7], 72
    %v1656 = vld [vmem:[%s1655] sm:$0xff]
    %v1657 = vld [vmem:[%s1655 + $0x8] sm:$0xff]
    %v1658 = vld [vmem:[%s1655 + $0x10] sm:$0xff]
    %v1659 = vld [vmem:[%s1655 + $0x18] sm:$0xff]
    %v1660 = vld [vmem:[%s1655 + $0x20] sm:$0xff]
    %v1661 = vld [vmem:[%s1655 + $0x28] sm:$0xff]
    %v1662 = vld [vmem:[%s1655 + $0x30] sm:$0xff]
    %v1663 = vld [vmem:[%s1655 + $0x38] sm:$0xff]
    %v1664 = vld [vmem:[%s1655 + $0x40] sm:$0xff]
    %vm1665 = vcmask 588800
    %v1667 = vsel %vm1665, %v1650, 0
    %v1670 = vsel %vm1665, %v1653, 0
    %1672 = vmatpush.msra.mxu0 0.0
    %1673 = vmatpush.msra.mxu0 0.0
    %1674 = vmatpush.msra.mxu0 0.0
    %1675 = vmatpush.msra.mxu0 0.0
    %1676 = vmatpush.msra.mxu0 0.0
    %1677 = vmatpush.msra.mxu0 0.0
    %1678 = vmatpush.msra.mxu0 0.0
    %1679 = vmatpush.msra.mxu0 %v1664
    %1680 = vmatpush.msra.mxu0 %v1663
    %1681 = vmatpush.msra.mxu0 %v1662
    %1682 = vmatpush.msra.mxu0 %v1661
    %1683 = vmatpush.msra.mxu0 %v1660
    %1684 = vmatpush.msra.mxu0 %v1659
    %1685 = vmatpush.msra.mxu0 %v1658
    %1686 = vmatpush.msra.mxu0 %v1657
    %1687 = vmatpush.msra.mxu0 %v1656
    %1688 = vmatmul.f32.gmra.mxu0 %v1667
    %v1689 = vpop.f32.mrf.mxu0
    %v1690 = vadd.f32 0.0, %v1689
    %1691 = vmatmul.f32.gmra.mxu0 %v1670
    %v1692 = vpop.f32.mrf.mxu0
    %v1693 = vadd.f32 0.0, %v1692
    %1694 = vdwg.mxu0
    %v1696 = vsel %vm1665, %v1609, 0
    %v1699 = vsel %vm1665, %v1612, 0
    %1701 = vmatpush.msra.mxu0 0.0
    %1702 = vmatpush.msra.mxu0 0.0
    %1703 = vmatpush.msra.mxu0 0.0
    %1704 = vmatpush.msra.mxu0 0.0
    %1705 = vmatpush.msra.mxu0 0.0
    %1706 = vmatpush.msra.mxu0 0.0
    %1707 = vmatpush.msra.mxu0 0.0
    %1708 = vmatpush.msra.mxu0 %v1622
    %1709 = vmatpush.msra.mxu0 %v1621
    %1710 = vmatpush.msra.mxu0 %v1620
    %1711 = vmatpush.msra.mxu0 %v1619
    %1712 = vmatpush.msra.mxu0 %v1618
    %1713 = vmatpush.msra.mxu0 %v1617
    %1714 = vmatpush.msra.mxu0 %v1616
    %1715 = vmatpush.msra.mxu0 %v1615
    %1716 = vmatpush.msra.mxu0 %v1614
    %1717 = vmatmul.f32.gmra.mxu0 %v1696
    %v1718 = vpop.f32.mrf.mxu0
    %v1719 = vadd.f32 %v1690, %v1718
    %1720 = vmatmul.f32.gmra.mxu0 %v1699
    %v1721 = vpop.f32.mrf.mxu0
    %v1722 = vadd.f32 %v1693, %v1721
    %1723 = vdwg.mxu0
    %s1724 = scalar_lea.vmem %s7, 32
    %v1725 = vld [vmem:[%s1724] sm:$0xff]
    %v1726 = vld [vmem:[%s1724 + $0x8] sm:$0xff]
    %v1728 = vsel %vm1584, %v1725, 0
    %v1731 = vsel %vm1584, %v1726, 0
    %1733 = vmatpush.msra.mxu0 0.0
    %1734 = vmatpush.msra.mxu0 0.0
    %1735 = vmatpush.msra.mxu0 0.0
    %1736 = vmatpush.msra.mxu0 0.0
    %1737 = vmatpush.msra.mxu0 0.0
    %1738 = vmatpush.msra.mxu0 0.0
    %1739 = vmatpush.msra.mxu0 0.0
    %1740 = vmatpush.msra.mxu0 0.0
    %1741 = vmatpush.msra.mxu0 0.0
    %1742 = vmatpush.msra.mxu0 0.0
    %1743 = vmatpush.msra.mxu0 0.0
    %1744 = vmatpush.msra.mxu0 0.0
    %1745 = vmatpush.msra.mxu0 0.0
    %1746 = vmatpush.msra.mxu0 %v1580
    %1747 = vmatpush.msra.mxu0 %v1577
    %1748 = vmatpush.msra.mxu0 %v1574
    %1749 = vmatmul.f32.gmra.mxu0 %v1728
    %v1750 = vpop.f32.mrf.mxu0
    %v1751 = vadd.f32 0.0, %v1750
    %1752 = vmatmul.f32.gmra.mxu0 %v1731
    %v1753 = vpop.f32.mrf.mxu0
    %v1754 = vadd.f32 0.0, %v1753
    %1755 = vdwg.mxu0
    %s1756 = scalar_lea.vmem [#allocation7], 144
    %v1757 = vld [vmem:[%s1756] sm:$0xff]
    %v1758 = vld [vmem:[%s1756 + $0x8] sm:$0xff]
    %v1759 = vld [vmem:[%s1756 + $0x10] sm:$0xff]
    %v1760 = vld [vmem:[%s1756 + $0x18] sm:$0xff]
    %v1761 = vld [vmem:[%s1756 + $0x20] sm:$0xff]
    %v1762 = vld [vmem:[%s1756 + $0x28] sm:$0xff]
    %v1763 = vld [vmem:[%s1756 + $0x30] sm:$0xff]
    %v1764 = vld [vmem:[%s1756 + $0x38] sm:$0xff]
    %v1765 = vld [vmem:[%s1756 + $0x40] sm:$0xff]
    %v1767 = vsel %vm1665, %v1751, 0
    %v1770 = vsel %vm1665, %v1754, 0
    %1772 = vmatpush.msra.mxu0 0.0
    %1773 = vmatpush.msra.mxu0 0.0
    %1774 = vmatpush.msra.mxu0 0.0
    %1775 = vmatpush.msra.mxu0 0.0
    %1776 = vmatpush.msra.mxu0 0.0
    %1777 = vmatpush.msra.mxu0 0.0
    %1778 = vmatpush.msra.mxu0 0.0
    %1779 = vmatpush.msra.mxu0 %v1765
    %1780 = vmatpush.msra.mxu0 %v1764
    %1781 = vmatpush.msra.mxu0 %v1763
    %1782 = vmatpush.msra.mxu0 %v1762
    %1783 = vmatpush.msra.mxu0 %v1761
    %1784 = vmatpush.msra.mxu0 %v1760
    %1785 = vmatpush.msra.mxu0 %v1759
    %1786 = vmatpush.msra.mxu0 %v1758
    %1787 = vmatpush.msra.mxu0 %v1757
    %1788 = vmatmul.f32.gmra.mxu0 %v1767
    %v1789 = vpop.f32.mrf.mxu0
    %v1790 = vadd.f32 0.0, %v1789
    %1791 = vmatmul.f32.gmra.mxu0 %v1770
    %v1792 = vpop.f32.mrf.mxu0
    %v1793 = vadd.f32 0.0, %v1792
    %1794 = vdwg.mxu0
    %v1795 = vadd.f32 %v1719, %v1790
    %v1796 = vadd.f32 %v1722, %v1793
    %s1797 = scalar_lea.vmem %s7, 48
    %v1798 = vld [vmem:[%s1797] sm:$0xff]
    %v1799 = vld [vmem:[%s1797 + $0x8] sm:$0xff]
    %v1801 = vsel %vm1584, %v1798, 0
    %v1804 = vsel %vm1584, %v1799, 0
    %1806 = vmatpush.msra.mxu0 0.0
    %1807 = vmatpush.msra.mxu0 0.0
    %1808 = vmatpush.msra.mxu0 0.0
    %1809 = vmatpush.msra.mxu0 0.0
    %1810 = vmatpush.msra.mxu0 0.0
    %1811 = vmatpush.msra.mxu0 0.0
    %1812 = vmatpush.msra.mxu0 0.0
    %1813 = vmatpush.msra.mxu0 0.0
    %1814 = vmatpush.msra.mxu0 0.0
    %1815 = vmatpush.msra.mxu0 0.0
    %1816 = vmatpush.msra.mxu0 0.0
    %1817 = vmatpush.msra.mxu0 0.0
    %1818 = vmatpush.msra.mxu0 0.0
    %1819 = vmatpush.msra.mxu0 %v1580
    %1820 = vmatpush.msra.mxu0 %v1577
    %1821 = vmatpush.msra.mxu0 %v1574
    %1822 = vmatmul.f32.gmra.mxu0 %v1801
    %v1823 = vpop.f32.mrf.mxu0
    %v1824 = vadd.f32 0.0, %v1823
    %1825 = vmatmul.f32.gmra.mxu0 %v1804
    %v1826 = vpop.f32.mrf.mxu0
    %v1827 = vadd.f32 0.0, %v1826
    %1828 = vdwg.mxu0
    %s1829 = scalar_lea.vmem [#allocation7], 216
    %v1830 = vld [vmem:[%s1829] sm:$0xff]
    %v1831 = vld [vmem:[%s1829 + $0x8] sm:$0xff]
    %v1832 = vld [vmem:[%s1829 + $0x10] sm:$0xff]
    %v1833 = vld [vmem:[%s1829 + $0x18] sm:$0xff]
    %v1834 = vld [vmem:[%s1829 + $0x20] sm:$0xff]
    %v1835 = vld [vmem:[%s1829 + $0x28] sm:$0xff]
    %v1836 = vld [vmem:[%s1829 + $0x30] sm:$0xff]
    %v1837 = vld [vmem:[%s1829 + $0x38] sm:$0xff]
    %v1838 = vld [vmem:[%s1829 + $0x40] sm:$0xff]
    %v1840 = vsel %vm1665, %v1824, 0
    %v1843 = vsel %vm1665, %v1827, 0
    %1845 = vmatpush.msra.mxu0 0.0
    %1846 = vmatpush.msra.mxu0 0.0
    %1847 = vmatpush.msra.mxu0 0.0
    %1848 = vmatpush.msra.mxu0 0.0
    %1849 = vmatpush.msra.mxu0 0.0
    %1850 = vmatpush.msra.mxu0 0.0
    %1851 = vmatpush.msra.mxu0 0.0
    %1852 = vmatpush.msra.mxu0 %v1838
    %1853 = vmatpush.msra.mxu0 %v1837
    %1854 = vmatpush.msra.mxu0 %v1836
    %1855 = vmatpush.msra.mxu0 %v1835
    %1856 = vmatpush.msra.mxu0 %v1834
    %1857 = vmatpush.msra.mxu0 %v1833
    %1858 = vmatpush.msra.mxu0 %v1832
    %1859 = vmatpush.msra.mxu0 %v1831
    %1860 = vmatpush.msra.mxu0 %v1830
    %1861 = vmatmul.f32.gmra.mxu0 %v1840
    %v1862 = vpop.f32.mrf.mxu0
    %v1863 = vadd.f32 0.0, %v1862
    %1864 = vmatmul.f32.gmra.mxu0 %v1843
    %v1865 = vpop.f32.mrf.mxu0
    %v1866 = vadd.f32 0.0, %v1865
    %1867 = vdwg.mxu0
    %v1868 = vadd.f32 %v1795, %v1863
    %v1869 = vadd.f32 %v1796, %v1866
    %s1870 = scalar_lea.vmem %s7, 64
    %v1871 = vld [vmem:[%s1870] sm:$0xff]
    %v1872 = vld [vmem:[%s1870 + $0x8] sm:$0xff]
    %v1874 = vsel %vm1584, %v1871, 0
    %v1877 = vsel %vm1584, %v1872, 0
    %1879 = vmatpush.msra.mxu0 0.0
    %1880 = vmatpush.msra.mxu0 0.0
    %1881 = vmatpush.msra.mxu0 0.0
    %1882 = vmatpush.msra.mxu0 0.0
    %1883 = vmatpush.msra.mxu0 0.0
    %1884 = vmatpush.msra.mxu0 0.0
    %1885 = vmatpush.msra.mxu0 0.0
    %1886 = vmatpush.msra.mxu0 0.0
    %1887 = vmatpush.msra.mxu0 0.0
    %1888 = vmatpush.msra.mxu0 0.0
    %1889 = vmatpush.msra.mxu0 0.0
    %1890 = vmatpush.msra.mxu0 0.0
    %1891 = vmatpush.msra.mxu0 0.0
    %1892 = vmatpush.msra.mxu0 %v1580
    %1893 = vmatpush.msra.mxu0 %v1577
    %1894 = vmatpush.msra.mxu0 %v1574
    %1895 = vmatmul.f32.gmra.mxu0 %v1874
    %v1896 = vpop.f32.mrf.mxu0
    %v1897 = vadd.f32 0.0, %v1896
    %1898 = vmatmul.f32.gmra.mxu0 %v1877
    %v1899 = vpop.f32.mrf.mxu0
    %v1900 = vadd.f32 0.0, %v1899
    %1901 = vdwg.mxu0
    %s1902 = scalar_lea.vmem [#allocation7], 288
    %v1903 = vld [vmem:[%s1902] sm:$0xff]
    %v1904 = vld [vmem:[%s1902 + $0x8] sm:$0xff]
    %v1905 = vld [vmem:[%s1902 + $0x10] sm:$0xff]
    %v1906 = vld [vmem:[%s1902 + $0x18] sm:$0xff]
    %v1907 = vld [vmem:[%s1902 + $0x20] sm:$0xff]
    %v1908 = vld [vmem:[%s1902 + $0x28] sm:$0xff]
    %v1909 = vld [vmem:[%s1902 + $0x30] sm:$0xff]
    %v1910 = vld [vmem:[%s1902 + $0x38] sm:$0xff]
    %v1911 = vld [vmem:[%s1902 + $0x40] sm:$0xff]
    %v1913 = vsel %vm1665, %v1897, 0
    %v1916 = vsel %vm1665, %v1900, 0
    %1918 = vmatpush.msra.mxu0 0.0
    %1919 = vmatpush.msra.mxu0 0.0
    %1920 = vmatpush.msra.mxu0 0.0
    %1921 = vmatpush.msra.mxu0 0.0
    %1922 = vmatpush.msra.mxu0 0.0
    %1923 = vmatpush.msra.mxu0 0.0
    %1924 = vmatpush.msra.mxu0 0.0
    %1925 = vmatpush.msra.mxu0 %v1911
    %1926 = vmatpush.msra.mxu0 %v1910
    %1927 = vmatpush.msra.mxu0 %v1909
    %1928 = vmatpush.msra.mxu0 %v1908
    %1929 = vmatpush.msra.mxu0 %v1907
    %1930 = vmatpush.msra.mxu0 %v1906
    %1931 = vmatpush.msra.mxu0 %v1905
    %1932 = vmatpush.msra.mxu0 %v1904
    %1933 = vmatpush.msra.mxu0 %v1903
    %1934 = vmatmul.f32.gmra.mxu0 %v1913
    %v1935 = vpop.f32.mrf.mxu0
    %v1936 = vadd.f32 0.0, %v1935
    %1937 = vmatmul.f32.gmra.mxu0 %v1916
    %v1938 = vpop.f32.mrf.mxu0
    %v1939 = vadd.f32 0.0, %v1938
    %1940 = vdwg.mxu0
    %v1941 = vadd.f32 %v1868, %v1936
    %v1942 = vadd.f32 %v1869, %v1939
    %v1943 = vld [vmem:[%s8] sm:$0x1]
    %v1944 = vperm.slane %v1943, 0
    %v1945 = vadd.f32 %v1941, %v1944
    %v1946 = vadd.f32 %v1942, %v1944
    %v1947 = vld [vmem:[%s8 + $0x1] sm:$0x1]
    %v1948 = vld [vmem:[%s8 + $0x2] sm:$0x1]
    %v1949 = vadd.f32 %v1945, %v1946
    %v1950 = vmul.f32 %v1949, 0.5
    %v1951 = vsub.f32 %v1945, %v1950
    %v1952 = vmul.f32 %v1951, %v1951
    %v1953 = vsub.f32 %v1946, %v1950
    %v1954 = vmul.f32 %v1953, %v1953
    %v1955 = vadd.f32 %v1952, %v1954
    %v1956 = vmul.f32 %v1955, 0.5
    %v1957 = vadd.f32 %v1956, 1e-05
    %v1958 = vrsqrt.pop %v1957
    %v1959 = vmul.f32 %v1958, %v1957
    %v1960 = vmul.f32 %v1959, %v1958
    %v1961 = vmul.f32 0.5, %v1960
    %v1962 = vsub.f32 1.5, %v1961
    %v1963 = vmul.f32 %v1958, %v1962
    %vm1964 = vweird.f32 %v1957
    %vm1965 = vweird.f32 %v1958
    %vm1966 = vmor %vm1964, %vm1965
    %v1967 = vsel %vm1966, %v1958, %v1963
    %v1968 = vmul.f32 %v1951, %v1967
    %v1969 = vperm.slane %v1947, 0
    %v1970 = vmul.f32 %v1969, %v1968
    %v1971 = vperm.slane %v1948, 0
    %v1972 = vadd.f32 %v1970, %v1971
    %v1973 = vsub.f32 0.0, %v1972
    %v1974 = vmul.f32 %v1973, 1.442695
    %v1975 = vpow.pop %v1974
    %v1976 = vadd.f32 %v1975, 1.0
    %v1977 = vrcp.pop %v1976
    %v1978 = vmul.f32 %v1976, %v1977
    %v1979 = vsub.f32 1.0, %v1978
    %v1980 = vmul.f32 %v1977, %v1979
    %v1981 = vadd.f32 %v1977, %v1980
    %vm1982 = vweird.f32 %v1976
    %vm1983 = vweird.f32 %v1977
    %vm1984 = vmor %vm1982, %vm1983
    %v1985 = vsel %vm1984, %v1977, %v1981
    %v1986 = vand.u32 2147483647, %v1976
    %vm1987 = vcmp.eq.f32.partialorder %v1986, 8.507059e+37
    %v1988 = vand.u32 %v1976, 2147483648
    %v1989 = vor.u32 1.1754944e-38, %v1988
    %v1990 = vsel %vm1987, %v1989, %v1985
    %v1991 = vmul.f32 1.0, %v1990
    %v1992 = vmul.f32 %v1953, %v1967
    %v1993 = vmul.f32 %v1969, %v1992
    %v1994 = vadd.f32 %v1993, %v1971
    %v1995 = vsub.f32 0.0, %v1994
    %v1996 = vmul.f32 %v1995, 1.442695
    %v1997 = vpow.pop %v1996
    %v1998 = vadd.f32 %v1997, 1.0
    %v1999 = vrcp.pop %v1998
    %v2000 = vmul.f32 %v1998, %v1999
    %v2001 = vsub.f32 1.0, %v2000
    %v2002 = vmul.f32 %v1999, %v2001
    %v2003 = vadd.f32 %v1999, %v2002
    %vm2004 = vweird.f32 %v1998
    %vm2005 = vweird.f32 %v1999
    %vm2006 = vmor %vm2004, %vm2005
    %v2007 = vsel %vm2006, %v1999, %v2003
    %v2008 = vand.u32 2147483647, %v1998
    %vm2009 = vcmp.eq.f32.partialorder %v2008, 8.507059e+37
    %v2010 = vand.u32 %v1998, 2147483648
    %v2011 = vor.u32 1.1754944e-38, %v2010
    %v2012 = vsel %vm2009, %v2011, %v2007
    %v2013 = vmul.f32 1.0, %v2012
    %v2014 = vld [vmem:[%s9] sm:$0xff]
    %v2016 = vsel %vm1520, %v2014, 0
    %2018 = vmatpush.msra.mxu0 0.0
    %2019 = vmatpush.msra.mxu0 0.0
    %2020 = vmatpush.msra.mxu0 0.0
    %2021 = vmatpush.msra.mxu0 0.0
    %2022 = vmatpush.msra.mxu0 0.0
    %2023 = vmatpush.msra.mxu0 0.0
    %2024 = vmatpush.msra.mxu0 0.0
    %2025 = vmatpush.msra.mxu0 0.0
    %2026 = vmatpush.msra.mxu0 0.0
    %2027 = vmatpush.msra.mxu0 0.0
    %2028 = vmatpush.msra.mxu0 0.0
    %2029 = vmatpush.msra.mxu0 0.0
    %2030 = vmatpush.msra.mxu0 0.0
    %2031 = vmatpush.msra.mxu0 0.0
    %2032 = vmatpush.msra.mxu0 %v2013
    %2033 = vmatpush.msra.mxu0 %v1991
    %2034 = vmatmul.f32.gmra.mxu0 %v2016
    %v2035 = vpop.f32.mrf.mxu0
    %v2036 = vadd.f32 0.0, %v2035
    %2037 = vdwg.mxu0
    %v2038 = vld [vmem:[%s10] sm:$0xff]
    %v2039 = vld [vmem:[%s10 + $0x8] sm:$0xff]
    %v2040 = vld [vmem:[%s10 + $0x10] sm:$0xff]
    %v2041 = vld [vmem:[%s10 + $0x18] sm:$0xff]
    %v2042 = vld [vmem:[%s10 + $0x20] sm:$0xff]
    %v2043 = vld [vmem:[%s10 + $0x28] sm:$0xff]
    %v2044 = vld [vmem:[%s10 + $0x30] sm:$0xff]
    %v2045 = vld [vmem:[%s10 + $0x38] sm:$0xff]
    %v2046 = vld [vmem:[%s10 + $0x40] sm:$0xff]
    %v2047 = vld [vmem:[%s10 + $0x48] sm:$0xff]
    %v2048 = vld [vmem:[%s10 + $0x50] sm:$0xff]
    %v2049 = vld [vmem:[%s10 + $0x58] sm:$0xff]
    %v2050 = vld [vmem:[%s10 + $0x60] sm:$0xff]
    %v2051 = vld [vmem:[%s10 + $0x68] sm:$0xff]
    %v2052 = vld [vmem:[%s10 + $0x70] sm:$0xff]
    %v2053 = vld [vmem:[%s10 + $0x78] sm:$0xff]
    %2054 = vmatpush.msra.mxu0 %v2053
    %2055 = vmatpush.msra.mxu0 %v2052
    %2056 = vmatpush.msra.mxu0 %v2051
    %2057 = vmatpush.msra.mxu0 %v2050
    %2058 = vmatpush.msra.mxu0 %v2049
    %2059 = vmatpush.msra.mxu0 %v2048
    %2060 = vmatpush.msra.mxu0 %v2047
    %2061 = vmatpush.msra.mxu0 %v2046
    %2062 = vmatpush.msra.mxu0 %v2045
    %2063 = vmatpush.msra.mxu0 %v2044
    %2064 = vmatpush.msra.mxu0 %v2043
    %2065 = vmatpush.msra.mxu0 %v2042
    %2066 = vmatpush.msra.mxu0 %v2041
    %2067 = vmatpush.msra.mxu0 %v2040
    %2068 = vmatpush.msra.mxu0 %v2039
    %2069 = vmatpush.msra.mxu0 %v2038
    %2070 = vmatmul.f32.gmra.mxu0 %v2036
    %v2071 = vpop.f32.mrf.mxu0
    %v2072 = vadd.f32 0.0, %v2071
    %2073 = vdwg.mxu0
    %v2074 = vld [vmem:[#allocation8] sm:$0xff]
    %v2075 = vld [vmem:[#allocation8 + $0x8] sm:$0xff]
    %v2076 = vld [vmem:[#allocation8 + $0x10] sm:$0xff]
    %v2077 = vld [vmem:[#allocation8 + $0x18] sm:$0xff]
    %v2078 = vld [vmem:[#allocation8 + $0x20] sm:$0xff]
    %v2079 = vld [vmem:[#allocation8 + $0x28] sm:$0xff]
    %v2080 = vld [vmem:[#allocation8 + $0x30] sm:$0xff]
    %v2081 = vld [vmem:[#allocation8 + $0x38] sm:$0xff]
    %vm2082 = vcmask 523264
    %v2084 = vsel %vm2082, %v2072, 0
    %2086 = vmatpush.msra.mxu0 0.0
    %2087 = vmatpush.msra.mxu0 0.0
    %2088 = vmatpush.msra.mxu0 0.0
    %2089 = vmatpush.msra.mxu0 0.0
    %2090 = vmatpush.msra.mxu0 0.0
    %2091 = vmatpush.msra.mxu0 0.0
    %2092 = vmatpush.msra.mxu0 0.0
    %2093 = vmatpush.msra.mxu0 0.0
    %2094 = vmatpush.msra.mxu0 %v2081
    %2095 = vmatpush.msra.mxu0 %v2080
    %2096 = vmatpush.msra.mxu0 %v2079
    %2097 = vmatpush.msra.mxu0 %v2078
    %2098 = vmatpush.msra.mxu0 %v2077
    %2099 = vmatpush.msra.mxu0 %v2076
    %2100 = vmatpush.msra.mxu0 %v2075
    %2101 = vmatpush.msra.mxu0 %v2074
    %2102 = vmatmul.f32.gmra.mxu0 %v2084
    %v2103 = vpop.f32.mrf.mxu0
    %v2104 = vadd.f32 0.0, %v2103
    %2105 = vdwg.mxu0
    %v2106 = vld [vmem:[%s12] sm:$0x3]
    %s2107 = scalar_lea.vmem [#allocation8], 64
    %v2108 = vld [vmem:[%s2107] sm:$0xff]
    %v2109 = vld [vmem:[%s2107 + $0x8] sm:$0xff]
    %v2110 = vld [vmem:[%s2107 + $0x10] sm:$0xff]
    %v2111 = vld [vmem:[%s2107 + $0x18] sm:$0xff]
    %v2112 = vld [vmem:[%s2107 + $0x20] sm:$0xff]
    %v2113 = vld [vmem:[%s2107 + $0x28] sm:$0xff]
    %v2114 = vld [vmem:[%s2107 + $0x30] sm:$0xff]
    %v2115 = vld [vmem:[%s2107 + $0x38] sm:$0xff]
    %2116 = vmatpush.msra.mxu0 0.0
    %2117 = vmatpush.msra.mxu0 0.0
    %2118 = vmatpush.msra.mxu0 0.0
    %2119 = vmatpush.msra.mxu0 0.0
    %2120 = vmatpush.msra.mxu0 0.0
    %2121 = vmatpush.msra.mxu0 0.0
    %2122 = vmatpush.msra.mxu0 0.0
    %2123 = vmatpush.msra.mxu0 0.0
    %2124 = vmatpush.msra.mxu0 %v2115
    %2125 = vmatpush.msra.mxu0 %v2114
    %2126 = vmatpush.msra.mxu0 %v2113
    %2127 = vmatpush.msra.mxu0 %v2112
    %2128 = vmatpush.msra.mxu0 %v2111
    %2129 = vmatpush.msra.mxu0 %v2110
    %2130 = vmatpush.msra.mxu0 %v2109
    %2131 = vmatpush.msra.mxu0 %v2108
    %2132 = vmatmul.f32.gmra.mxu0 %v2084
    %v2133 = vpop.f32.mrf.mxu0
    %v2134 = vadd.f32 0.0, %v2133
    %2135 = vdwg.mxu0
    %s2136 = scalar_lea.vmem %s12, 2
    %v2137 = vld [vmem:[%s2136] sm:$0x3]
    %vm2138 = vcmask 64512
    %v2140 = vsel %vm2138, %v2137, 0
    %2142 = vmatpush.msra.mxu0 0.0
    %2143 = vmatpush.msra.mxu0 0.0
    %2144 = vmatpush.msra.mxu0 0.0
    %2145 = vmatpush.msra.mxu0 0.0
    %2146 = vmatpush.msra.mxu0 0.0
    %2147 = vmatpush.msra.mxu0 0.0
    %2148 = vmatpush.msra.mxu0 0.0
    %2149 = vmatpush.msra.mxu0 0.0
    %2150 = vmatpush.msra.mxu0 0.0
    %2151 = vmatpush.msra.mxu0 0.0
    %2152 = vmatpush.msra.mxu0 0.0
    %2153 = vmatpush.msra.mxu0 0.0
    %2154 = vmatpush.msra.mxu0 0.0
    %2155 = vmatpush.msra.mxu0 0.0
    %2156 = vmatpush.msra.mxu0 0.0
    %2157 = vmatpush.msra.mxu0 %v2134
    %2158 = vmatmul.f32.gmra.mxu0 %v2140
    %v2159 = vpop.f32.mrf.mxu0
    %v2160 = vadd.f32 0.0, %v2159
    %2161 = vdwg.mxu0
    %v2163 = vsel %vm2138, %v2106, 0
    %2165 = vmatpush.msra.mxu0 0.0
    %2166 = vmatpush.msra.mxu0 0.0
    %2167 = vmatpush.msra.mxu0 0.0
    %2168 = vmatpush.msra.mxu0 0.0
    %2169 = vmatpush.msra.mxu0 0.0
    %2170 = vmatpush.msra.mxu0 0.0
    %2171 = vmatpush.msra.mxu0 0.0
    %2172 = vmatpush.msra.mxu0 0.0
    %2173 = vmatpush.msra.mxu0 0.0
    %2174 = vmatpush.msra.mxu0 0.0
    %2175 = vmatpush.msra.mxu0 0.0
    %2176 = vmatpush.msra.mxu0 0.0
    %2177 = vmatpush.msra.mxu0 0.0
    %2178 = vmatpush.msra.mxu0 0.0
    %2179 = vmatpush.msra.mxu0 0.0
    %2180 = vmatpush.msra.mxu0 %v2104
    %2181 = vmatmul.f32.gmra.mxu0 %v2163
    %v2182 = vpop.f32.mrf.mxu0
    %v2183 = vadd.f32 %v2160, %v2182
    %2184 = vdwg.mxu0
    %s2185 = scalar_lea.vmem [#allocation8], 128
    %v2186 = vld [vmem:[%s2185] sm:$0xff]
    %v2187 = vld [vmem:[%s2185 + $0x8] sm:$0xff]
    %v2188 = vld [vmem:[%s2185 + $0x10] sm:$0xff]
    %v2189 = vld [vmem:[%s2185 + $0x18] sm:$0xff]
    %v2190 = vld [vmem:[%s2185 + $0x20] sm:$0xff]
    %v2191 = vld [vmem:[%s2185 + $0x28] sm:$0xff]
    %v2192 = vld [vmem:[%s2185 + $0x30] sm:$0xff]
    %v2193 = vld [vmem:[%s2185 + $0x38] sm:$0xff]
    %2194 = vmatpush.msra.mxu0 0.0
    %2195 = vmatpush.msra.mxu0 0.0
    %2196 = vmatpush.msra.mxu0 0.0
    %2197 = vmatpush.msra.mxu0 0.0
    %2198 = vmatpush.msra.mxu0 0.0
    %2199 = vmatpush.msra.mxu0 0.0
    %2200 = vmatpush.msra.mxu0 0.0
    %2201 = vmatpush.msra.mxu0 0.0
    %2202 = vmatpush.msra.mxu0 %v2193
    %2203 = vmatpush.msra.mxu0 %v2192
    %2204 = vmatpush.msra.mxu0 %v2191
    %2205 = vmatpush.msra.mxu0 %v2190
    %2206 = vmatpush.msra.mxu0 %v2189
    %2207 = vmatpush.msra.mxu0 %v2188
    %2208 = vmatpush.msra.mxu0 %v2187
    %2209 = vmatpush.msra.mxu0 %v2186
    %2210 = vmatmul.f32.gmra.mxu0 %v2084
    %v2211 = vpop.f32.mrf.mxu0
    %v2212 = vadd.f32 0.0, %v2211
    %2213 = vdwg.mxu0
    %s2214 = scalar_lea.vmem %s12, 4
    %v2215 = vld [vmem:[%s2214] sm:$0x3]
    %v2217 = vsel %vm2138, %v2215, 0
    %2219 = vmatpush.msra.mxu0 0.0
    %2220 = vmatpush.msra.mxu0 0.0
    %2221 = vmatpush.msra.mxu0 0.0
    %2222 = vmatpush.msra.mxu0 0.0
    %2223 = vmatpush.msra.mxu0 0.0
    %2224 = vmatpush.msra.mxu0 0.0
    %2225 = vmatpush.msra.mxu0 0.0
    %2226 = vmatpush.msra.mxu0 0.0
    %2227 = vmatpush.msra.mxu0 0.0
    %2228 = vmatpush.msra.mxu0 0.0
    %2229 = vmatpush.msra.mxu0 0.0
    %2230 = vmatpush.msra.mxu0 0.0
    %2231 = vmatpush.msra.mxu0 0.0
    %2232 = vmatpush.msra.mxu0 0.0
    %2233 = vmatpush.msra.mxu0 0.0
    %2234 = vmatpush.msra.mxu0 %v2212
    %2235 = vmatmul.f32.gmra.mxu0 %v2217
    %v2236 = vpop.f32.mrf.mxu0
    %v2237 = vadd.f32 0.0, %v2236
    %2238 = vdwg.mxu0
    %v2239 = vadd.f32 %v2183, %v2237
    %s2240 = scalar_lea.vmem [#allocation8], 192
    %v2241 = vld [vmem:[%s2240] sm:$0xff]
    %v2242 = vld [vmem:[%s2240 + $0x8] sm:$0xff]
    %v2243 = vld [vmem:[%s2240 + $0x10] sm:$0xff]
    %v2244 = vld [vmem:[%s2240 + $0x18] sm:$0xff]
    %v2245 = vld [vmem:[%s2240 + $0x20] sm:$0xff]
    %v2246 = vld [vmem:[%s2240 + $0x28] sm:$0xff]
    %v2247 = vld [vmem:[%s2240 + $0x30] sm:$0xff]
    %v2248 = vld [vmem:[%s2240 + $0x38] sm:$0xff]
    %2249 = vmatpush.msra.mxu0 0.0
    %2250 = vmatpush.msra.mxu0 0.0
    %2251 = vmatpush.msra.mxu0 0.0
    %2252 = vmatpush.msra.mxu0 0.0
    %2253 = vmatpush.msra.mxu0 0.0
    %2254 = vmatpush.msra.mxu0 0.0
    %2255 = vmatpush.msra.mxu0 0.0
    %2256 = vmatpush.msra.mxu0 0.0
    %2257 = vmatpush.msra.mxu0 %v2248
    %2258 = vmatpush.msra.mxu0 %v2247
    %2259 = vmatpush.msra.mxu0 %v2246
    %2260 = vmatpush.msra.mxu0 %v2245
    %2261 = vmatpush.msra.mxu0 %v2244
    %2262 = vmatpush.msra.mxu0 %v2243
    %2263 = vmatpush.msra.mxu0 %v2242
    %2264 = vmatpush.msra.mxu0 %v2241
    %2265 = vmatmul.f32.gmra.mxu0 %v2084
    %v2266 = vpop.f32.mrf.mxu0
    %v2267 = vadd.f32 0.0, %v2266
    %2268 = vdwg.mxu0
    %s2269 = scalar_lea.vmem %s12, 6
    %v2270 = vld [vmem:[%s2269] sm:$0x3]
    %v2272 = vsel %vm2138, %v2270, 0
    %2274 = vmatpush.msra.mxu0 0.0
    %2275 = vmatpush.msra.mxu0 0.0
    %2276 = vmatpush.msra.mxu0 0.0
    %2277 = vmatpush.msra.mxu0 0.0
    %2278 = vmatpush.msra.mxu0 0.0
    %2279 = vmatpush.msra.mxu0 0.0
    %2280 = vmatpush.msra.mxu0 0.0
    %2281 = vmatpush.msra.mxu0 0.0
    %2282 = vmatpush.msra.mxu0 0.0
    %2283 = vmatpush.msra.mxu0 0.0
    %2284 = vmatpush.msra.mxu0 0.0
    %2285 = vmatpush.msra.mxu0 0.0
    %2286 = vmatpush.msra.mxu0 0.0
    %2287 = vmatpush.msra.mxu0 0.0
    %2288 = vmatpush.msra.mxu0 0.0
    %2289 = vmatpush.msra.mxu0 %v2267
    %2290 = vmatmul.f32.gmra.mxu0 %v2272
    %v2291 = vpop.f32.mrf.mxu0
    %v2292 = vadd.f32 0.0, %v2291
    %2293 = vdwg.mxu0
    %v2294 = vadd.f32 %v2239, %v2292
    %v2295 = vld [vmem:[%s13] sm:$0x1]
    %v2296 = vperm.slane %v2295, 0
    %v2297 = vadd.f32 %v2294, %v2296
    %v2298 = vld [vmem:[%s13 + $0x1] sm:$0x1]
    %v2299 = vld [vmem:[%s13 + $0x2] sm:$0x1]
    %vm2300 = vcmask 975872
    %v2301 = vsel %vm2300, %v2297, 0.0
    %v2302 = vrot.slane %v2301, 4
    %v2303 = vadd.f32 %v2301, %v2302
    %v2304 = vrot.slane %v2303, 2
    %v2305 = vadd.f32 %v2303, %v2304
    %v2306 = vrot.slane %v2305, 1
    %v2307 = vadd.f32 %v2305, %v2306
    %v2308 = vrcp.pop 2.0
    %v2309 = vmul.f32 2.0, %v2308
    %v2310 = vsub.f32 1.0, %v2309
    %v2311 = vmul.f32 %v2308, %v2310
    %v2312 = vadd.f32 %v2308, %v2311
    %vm2313 = vweird.f32 %v2308
    %v2314 = vsel %vm2313, %v2308, %v2312
    %v2315 = vmul.f32 %v2307, %v2314
    %v2316 = vsub.f32 %v2297, %v2315
    %v2317 = vmul.f32 %v2316, %v2316
    %v2318 = vsel %vm2300, %v2317, 0.0
    %v2319 = vrot.slane %v2318, 4
    %v2320 = vadd.f32 %v2318, %v2319
    %v2321 = vrot.slane %v2320, 2
    %v2322 = vadd.f32 %v2320, %v2321
    %v2323 = vrot.slane %v2322, 1
    %v2324 = vadd.f32 %v2322, %v2323
    %v2325 = vmul.f32 %v2324, %v2314
    %v2326 = vadd.f32 %v2325, 1e-05
    %v2327 = vrsqrt.pop %v2326
    %v2328 = vmul.f32 %v2327, %v2326
    %v2329 = vmul.f32 %v2328, %v2327
    %v2330 = vmul.f32 0.5, %v2329
    %v2331 = vsub.f32 1.5, %v2330
    %v2332 = vmul.f32 %v2327, %v2331
    %vm2333 = vweird.f32 %v2326
    %vm2334 = vweird.f32 %v2327
    %vm2335 = vmor %vm2333, %vm2334
    %v2336 = vsel %vm2335, %v2327, %v2332
    %v2337 = vmul.f32 %v2316, %v2336
    %v2338 = vperm.slane %v2298, 0
    %v2339 = vmul.f32 %v2338, %v2337
    %v2340 = vperm.slane %v2299, 0
    %v2341 = vadd.f32 %v2339, %v2340
    %v2342 = vsub.f32 0.0, %v2341
    %v2343 = vmul.f32 %v2342, 1.442695
    %v2344 = vpow.pop %v2343
    %v2345 = vadd.f32 %v2344, 1.0
    %v2346 = vrcp.pop %v2345
    %v2347 = vmul.f32 %v2345, %v2346
    %v2348 = vsub.f32 1.0, %v2347
    %v2349 = vmul.f32 %v2346, %v2348
    %v2350 = vadd.f32 %v2346, %v2349
    %vm2351 = vweird.f32 %v2345
    %vm2352 = vweird.f32 %v2346
    %vm2353 = vmor %vm2351, %vm2352
    %v2354 = vsel %vm2353, %v2346, %v2350
    %v2355 = vand.u32 2147483647, %v2345
    %vm2356 = vcmp.eq.f32.partialorder %v2355, 8.507059e+37
    %v2357 = vand.u32 %v2345, 2147483648
    %v2358 = vor.u32 1.1754944e-38, %v2357
    %v2359 = vsel %vm2356, %v2358, %v2354
    %v2360 = vmul.f32 1.0, %v2359
    %v2361 = vld [vmem:[%s14] sm:$0xff]
    %v2362 = vld [vmem:[%s14 + $0x8] sm:$0xff]
    %v2363 = vld [vmem:[%s14 + $0x10] sm:$0xff]
    %v2364 = vld [vmem:[%s14 + $0x18] sm:$0xff]
    %v2365 = vld [vmem:[%s14 + $0x20] sm:$0xff]
    %v2366 = vld [vmem:[%s14 + $0x28] sm:$0xff]
    %v2367 = vld [vmem:[%s14 + $0x30] sm:$0xff]
    %v2368 = vld [vmem:[%s14 + $0x38] sm:$0xff]
    %v2369 = vld [vmem:[%s14 + $0x40] sm:$0xff]
    %v2370 = vld [vmem:[%s14 + $0x48] sm:$0xff]
    %v2371 = vld [vmem:[%s14 + $0x50] sm:$0xff]
    %v2372 = vld [vmem:[%s14 + $0x58] sm:$0xff]
    %v2373 = vld [vmem:[%s14 + $0x60] sm:$0xff]
    %v2374 = vld [vmem:[%s14 + $0x68] sm:$0xff]
    %v2375 = vld [vmem:[%s14 + $0x70] sm:$0xff]
    %v2376 = vld [vmem:[#allocation10] sm:$0x1]
    %v2377 = vperm.slane %v2376, 0
    %vm2378 = vcmask 982016
    %v2380 = vsel %vm2378, %v2360, 0
    %2382 = vmatpush.msra.mxu0 0.0
    %2383 = vmatpush.msra.mxu0 %v2375
    %2384 = vmatpush.msra.mxu0 %v2374
    %2385 = vmatpush.msra.mxu0 %v2373
    %2386 = vmatpush.msra.mxu0 %v2372
    %2387 = vmatpush.msra.mxu0 %v2371
    %2388 = vmatpush.msra.mxu0 %v2370
    %2389 = vmatpush.msra.mxu0 %v2369
    %2390 = vmatpush.msra.mxu0 %v2368
    %2391 = vmatpush.msra.mxu0 %v2367
    %2392 = vmatpush.msra.mxu0 %v2366
    %2393 = vmatpush.msra.mxu0 %v2365
    %2394 = vmatpush.msra.mxu0 %v2364
    %2395 = vmatpush.msra.mxu0 %v2363
    %2396 = vmatpush.msra.mxu0 %v2362
    %2397 = vmatpush.msra.mxu0 %v2361
    %2398 = vmatmul.f32.gmra.mxu0 %v2380
    %v2399 = vpop.f32.mrf.mxu0
    %v2400 = vadd.f32 %v2377, %v2399
    %2401 = vdwg.mxu0
    %v2402 = vld [vmem:[#allocation10 + $0x1] sm:$0x1]
    %v2403 = vld [vmem:[#allocation10 + $0x2] sm:$0x1]
    %vm2404 = vcmask 680960
    %v2405 = vsel %vm2404, %v2400, 0.0
    %v2406 = vrot.slane %v2405, 4
    %v2407 = vadd.f32 %v2405, %v2406
    %v2408 = vrot.slane %v2407, 2
    %v2409 = vadd.f32 %v2407, %v2408
    %v2410 = vrot.slane %v2409, 1
    %v2411 = vadd.f32 %v2409, %v2410
    %v2412 = vmul.f32 %v2411, %v2314
    %v2413 = vsub.f32 %v2400, %v2412
    %v2414 = vmul.f32 %v2413, %v2413
    %v2415 = vsel %vm2404, %v2414, 0.0
    %v2416 = vrot.slane %v2415, 4
    %v2417 = vadd.f32 %v2415, %v2416
    %v2418 = vrot.slane %v2417, 2
    %v2419 = vadd.f32 %v2417, %v2418
    %v2420 = vrot.slane %v2419, 1
    %v2421 = vadd.f32 %v2419, %v2420
    %v2422 = vmul.f32 %v2421, %v2314
    %v2423 = vadd.f32 %v2422, 1e-05
    %v2424 = vrsqrt.pop %v2423
    %v2425 = vmul.f32 %v2424, %v2423
    %v2426 = vmul.f32 %v2425, %v2424
    %v2427 = vmul.f32 0.5, %v2426
    %v2428 = vsub.f32 1.5, %v2427
    %v2429 = vmul.f32 %v2424, %v2428
    %vm2430 = vweird.f32 %v2423
    %vm2431 = vweird.f32 %v2424
    %vm2432 = vmor %vm2430, %vm2431
    %v2433 = vsel %vm2432, %v2424, %v2429
    %v2434 = vmul.f32 %v2413, %v2433
    %v2435 = vperm.slane %v2402, 0
    %v2436 = vmul.f32 %v2435, %v2434
    %v2437 = vperm.slane %v2403, 0
    %v2438 = vadd.f32 %v2436, %v2437
    %v2439 = vsub.f32 0.0, %v2438
    %v2440 = vmul.f32 %v2439, 1.442695
    %v2441 = vpow.pop %v2440
    %v2442 = vadd.f32 %v2441, 1.0
    %v2443 = vrcp.pop %v2442
    %v2444 = vmul.f32 %v2442, %v2443
    %v2445 = vsub.f32 1.0, %v2444
    %v2446 = vmul.f32 %v2443, %v2445
    %v2447 = vadd.f32 %v2443, %v2446
    %vm2448 = vweird.f32 %v2442
    %vm2449 = vweird.f32 %v2443
    %vm2450 = vmor %vm2448, %vm2449
    %v2451 = vsel %vm2450, %v2443, %v2447
    %v2452 = vand.u32 2147483647, %v2442
    %vm2453 = vcmp.eq.f32.partialorder %v2452, 8.507059e+37
    %v2454 = vand.u32 %v2442, 2147483648
    %v2455 = vor.u32 1.1754944e-38, %v2454
    %v2456 = vsel %vm2453, %v2455, %v2451
    %v2457 = vmul.f32 1.0, %v2456
    %v2458 = vld [vmem:[%s16] sm:$0xff]
    %v2459 = vld [vmem:[%s16 + $0x8] sm:$0xff]
    %v2460 = vld [vmem:[%s16 + $0x10] sm:$0xff]
    %v2461 = vld [vmem:[%s16 + $0x18] sm:$0xff]
    %v2462 = vld [vmem:[%s16 + $0x20] sm:$0xff]
    %v2463 = vld [vmem:[%s16 + $0x28] sm:$0xff]
    %v2464 = vld [vmem:[%s16 + $0x30] sm:$0xff]
    %v2465 = vld [vmem:[%s16 + $0x38] sm:$0xff]
    %v2466 = vld [vmem:[%s16 + $0x40] sm:$0xff]
    %v2467 = vld [vmem:[%s16 + $0x48] sm:$0xff]
    %v2468 = vld [vmem:[%s16 + $0x50] sm:$0xf]
    %v2469 = vld [vmem:[#allocation11] sm:$0x1]
    %v2471 = vperm.slane %v2469, 0
    %vm2473 = vcmask 687104
    %v2475 = vsel %vm2473, %v2457, 0
    %v2478 = vsel %vm163, %v2468, 0
    %2480 = vmatpush.msra.mxu0 0.0
    %2481 = vmatpush.msra.mxu0 0.0
    %2482 = vmatpush.msra.mxu0 0.0
    %2483 = vmatpush.msra.mxu0 0.0
    %2484 = vmatpush.msra.mxu0 0.0
    %2485 = vmatpush.msra.mxu0 %v2478
    %2486 = vmatpush.msra.mxu0 %v2467
    %2487 = vmatpush.msra.mxu0 %v2466
    %2488 = vmatpush.msra.mxu0 %v2465
    %2489 = vmatpush.msra.mxu0 %v2464
    %2490 = vmatpush.msra.mxu0 %v2463
    %2491 = vmatpush.msra.mxu0 %v2462
    %2492 = vmatpush.msra.mxu0 %v2461
    %2493 = vmatpush.msra.mxu0 %v2460
    %2494 = vmatpush.msra.mxu0 %v2459
    %2495 = vmatpush.msra.mxu0 %v2458
    %2496 = vmatmul.f32.gmra.mxu0 %v2475
    %v2497 = vpop.f32.mrf.mxu0
    %v2498 = vadd.f32 %v2471, %v2497
    %2499 = vdwg.mxu0
    %vm2500 = vcmask 74752
    %2501 = vst.msk [vmem:[#allocation13] sm:$0x3] %vm2500, %v2498
    // Predicated region
    $region98: #{lenet_forward.1} parent=1 // pred_check
      _
    $region99: #{lenet_forward.1} parent=1 // pred_check_branch
      %2503 = sbr.rel (0) target = $region101
    $region100: #{lenet_forward.1} parent=1 // pred_region
      %2505 = vsyncadd [#allocation4], 0
      %s2507 = sshll.u32 [#allocation13], 4
      %s2508 = int_to_ptr.vmem [resolvable:$true] %s2507
      %s2509 = sshll.u32 %s18, 4
      %s2510 = int_to_ptr.hbm [resolvable:$true] %s2509
      %2512 = dma.vmem_to_hbm [thread:$0]  %s2508, 32, %s2510, [#allocation4]
    $region101: #{lenet_forward.1} parent=1 // pred_fallthru
      _
    // Predicated region
    $region102: #{lenet_forward.1} parent=1 // pred_check
      _
    $region103: #{lenet_forward.1} parent=1 // pred_check_branch
      %2514 = sbr.rel (0) target = $region105
    $region104: #{lenet_forward.1} parent=1 // pred_region
      %2516 = dma.done [#allocation4], 32
    $region105: #{lenet_forward.1} parent=1 // pred_fallthru
      _
    %2517 = vsyncpa [#allocation3], 1
    %2518 = vsyncpa [#allocation6], 1
    %2519 = vsyncpa [#allocation9], 1
    %2520 = vsyncpa [#allocation12], 1
    %2521 = vsyncpa [#allocation4], 1

</llo_original>
